<compile_context>
chip_gen: v7x
topology: tpu7x:2x2x1
jax: 0.10.0
libtpu: 0.0.40
codegen_flags: <defaults>
</compile_context>

<pallas_src>
import functools

import jax
import jax.numpy as jnp
import numpy as np
from jax.experimental import pallas as pl
from jax.experimental.pallas import tpu as pltpu

_LANE = 128


def _round_up(n, m):
    return (n + m - 1) // m * m


def _pick_tile_rows(H, target=16):
    """Largest divisor of H that is <= target (rows of output per grid step)."""
    for t in range(min(H, target), 0, -1):
        if H % t == 0:
            return t
    return H


def bottleneck_kernel(xt_ref, x_ref, xb_ref, w1_ref, b1_ref, w2k_ref, b2_ref,
                      w3_ref, b3_ref, o_ref, s_ref, *, W, TH):
    """One (image, row-tile) per grid step.

    xt_ref / xb_ref : (W, Cin_p) bf16   -- clamped halo row above / below
    x_ref           : (TH*W, Cin_p) bf16 -- the tile's rows (also the residual)
    o_ref           : (TH*W, Cout_p) bf16
    s_ref           : ((TH+2)*W, 3*Wp) bf16 scratch holding [left|center|right] taps
    """
    rows = TH * W                      # output rows this step
    rows_ext = rows + 2 * W            # + 1 halo image-row above and below
    Wp = w1_ref.shape[1]               # padded bottleneck width
    j = pl.program_id(1)
    nj = pl.num_programs(1)

    # ---- conv1 (1x1) + bn1 (scale folded into w1) + relu --------------------
    # Computed over the extended rows (the 2 halo rows are recomputed per tile;
    # the extended slab is a contiguous window of the flattened image).
    xe = jnp.concatenate([xt_ref[...], x_ref[...], xb_ref[...]], axis=0)
    h = jnp.dot(xe, w1_ref[...], preferred_element_type=jnp.float32)
    h = jnp.maximum(h + b1_ref[...], 0.0)                  # (rows_ext, Wp) f32

    # ---- build the x-shifted taps for the 3x3 conv ---------------------------
    # Rows are flattened y*W + x, so the +-1 x-shift is a one-row shift plus an
    # edge mask on (row % W).  Column mask from a (rows, 1) iota (broadcast).
    # Selects stay in f32 (v5e has no bf16 VPU); cast only at the band store.
    col = jax.lax.broadcasted_iota(jnp.int32, (rows_ext, 1), 0) % W
    zrow = jnp.zeros((1, Wp), jnp.float32)
    left = jnp.where(col == 0, 0.0,
                     jnp.concatenate([zrow, h[:rows_ext - 1]], axis=0))
    right = jnp.where(col == W - 1, 0.0,
                      jnp.concatenate([h[1:], zrow], axis=0))

    # Three 128-aligned lane-band bf16 stores (no (rows, 3*Wp) f32 temporary).
    s_ref[:, 0:Wp] = left.astype(jnp.bfloat16)
    s_ref[:, Wp:2 * Wp] = h.astype(jnp.bfloat16)
    s_ref[:, 2 * Wp:3 * Wp] = right.astype(jnp.bfloat16)

    # Zero the y-halo taps only at the image top / bottom tiles (pad=1 conv).
    # Re-evaluated every step, so it stays correct under megacore splitting.
    @pl.when(j == 0)
    def _():
        s_ref[0:W, :] = jnp.zeros((W, 3 * Wp), jnp.bfloat16)

    @pl.when(j == nj - 1)
    def _():
        s_ref[rows + W:rows_ext, :] = jnp.zeros((W, 3 * Wp), jnp.bfloat16)

    # ---- conv2 (3x3, pad=1) + bn2 (folded) + relu ----------------------------
    # Three MXU passes with K = 3*Wp (x-offset folded into K); the y-offset is a
    # pure aligned row offset into the scratch.  Accumulation stays in registers
    # / the MXU result buffer -- no f32 VMEM accumulator round-trips.
    h2 = jnp.dot(s_ref[0:rows], w2k_ref[0],
                 preferred_element_type=jnp.float32)
    h2 = h2 + jnp.dot(s_ref[W:W + rows], w2k_ref[1],
                      preferred_element_type=jnp.float32)
    h2 = h2 + jnp.dot(s_ref[2 * W:2 * W + rows], w2k_ref[2],
                      preferred_element_type=jnp.float32)
    h2 = jnp.maximum(h2 + b2_ref[...], 0.0)                 # (rows, Wp) f32

    # ---- conv3 (1x1) + bn3 (folded) + residual add + relu --------------------
    y = jnp.dot(h2.astype(jnp.bfloat16), w3_ref[...],
                preferred_element_type=jnp.float32)
    y = y + b3_ref[...] + x_ref[...].astype(jnp.float32)
    o_ref[...] = jnp.maximum(y, 0.0).astype(o_ref.dtype)


def _fold_and_pad(params, cin):
    """Fold BN scales into conv weights, zero-pad channel dims to 128 lanes."""
    w1, s1, b1, w2, s2, b2, w3, s3, b3 = params
    width = w1.shape[1]
    cout = w3.shape[1]
    cin_p = _round_up(cin, _LANE)
    wid_p = _round_up(width, _LANE)
    cout_p = _round_up(cout, _LANE)

    w1f = w1 * s1.reshape(1, width)                    # (Cin, width)
    w2f = w2 * s2.reshape(1, 1, 1, width)              # (3, 3, width, width)
    w3f = w3 * s3.reshape(1, cout)                     # (width, cout)

    w1p = jnp.zeros((cin_p, wid_p), jnp.float32).at[:cin, :width].set(w1f)
    w2p = jnp.zeros((3, 3, wid_p, wid_p),
                    jnp.float32).at[:, :, :width, :width].set(w2f)
    w3p = jnp.zeros((wid_p, cout_p), jnp.float32).at[:width, :cout].set(w3f)
    b1p = jnp.zeros((1, wid_p), jnp.float32).at[:, :width].set(b1.reshape(1, width))
    b2p = jnp.zeros((1, wid_p), jnp.float32).at[:, :width].set(b2.reshape(1, width))
    b3p = jnp.zeros((1, cout_p), jnp.float32).at[:, :cout].set(b3.reshape(1, cout))

    # K-fuse the 3x3 taps over the x-offset: per ky, K-rows ordered [dx=0|dx=1|dx=2].
    w2k = w2p.reshape(3, 3 * wid_p, wid_p)

    return (w1p.astype(jnp.bfloat16), b1p, w2k.astype(jnp.bfloat16), b2p,
            w3p.astype(jnp.bfloat16), b3p, cin_p, wid_p, cout_p)


def bottleneck_forward(x, params, *, tile_rows=None):
    """x: (B, H, W, Cin) NHWC.  Returns bf16 (inference-grade activations)."""
    B, H, W, Cin = x.shape
    cout = params[6].shape[1]            # w3: (width, planes * expansion)
    assert Cin == cout, "downsample=None requires inplanes == planes * expansion"

    (w1p, b1p, w2k, b2p, w3p, b3p,
     cin_p, wid_p, cout_p) = _fold_and_pad(params, Cin)

    HW = H * W
    TH = tile_rows if tile_rows is not None else _pick_tile_rows(H)
    assert H % TH == 0
    NH = H // TH

    # bf16 activation I/O: the kernel is HBM-bound at f32.  In a real pipeline
    # the producer already emits bf16 and this astype disappears.
    xp = x.astype(jnp.bfloat16)
    if cin_p != Cin:
        xp = jnp.pad(xp, ((0, 0), (0, 0), (0, 0), (0, cin_p - Cin)))
    xp = xp.reshape(B, HW, cin_p)

    flops = 2 * B * NH * ((TH + 2) * W * cin_p * wid_p
                          + TH * W * (9 * wid_p * wid_p + wid_p * cout_p))
    bytes_accessed = (B * HW * (cin_p + cout_p) * 2           # bf16 activations
                      + B * NH * 2 * W * cin_p * 2            # halo re-reads
                      + 2 * (w1p.size + w2k.size + w3p.size)
                      + 4 * (b1p.size + b2p.size + b3p.size))

    kernel = functools.partial(bottleneck_kernel, W=W, TH=TH)

    out = pl.pallas_call(
        kernel,
        out_shape=jax.ShapeDtypeStruct((B, HW, cout_p), jnp.bfloat16),
        grid_spec=pltpu.PrefetchScalarGridSpec(
            num_scalar_prefetch=0,
            grid=(B, NH),
            in_specs=[
                # halo row above (clamped at the image top; zeroed in-kernel)
                pl.BlockSpec((pl.Squeezed(), W, cin_p),
                             lambda b, j: (b, jnp.maximum(j * TH - 1, 0), 0)),
                # the tile's own TH rows (also used for the residual add)
                pl.BlockSpec((pl.Squeezed(), TH * W, cin_p),
                             lambda b, j: (b, j, 0)),
                # halo row below (clamped at the image bottom; zeroed in-kernel)
                pl.BlockSpec((pl.Squeezed(), W, cin_p),
                             lambda b, j: (b, jnp.minimum((j + 1) * TH, H - 1), 0)),
                pl.BlockSpec(w1p.shape, lambda b, j: (0, 0)),
                pl.BlockSpec(b1p.shape, lambda b, j: (0, 0)),
                pl.BlockSpec(w2k.shape, lambda b, j: (0, 0, 0)),
                pl.BlockSpec(b2p.shape, lambda b, j: (0, 0)),
                pl.BlockSpec(w3p.shape, lambda b, j: (0, 0)),
                pl.BlockSpec(b3p.shape, lambda b, j: (0, 0)),
            ],
            out_specs=pl.BlockSpec((pl.Squeezed(), TH * W, cout_p),
                                   lambda b, j: (b, j, 0)),
            scratch_shapes=[
                # bf16 [left|center|right] taps incl. 1-row y-halo above/below
                pltpu.VMEM(((TH + 2) * W, 3 * wid_p), jnp.bfloat16),
            ],
        ),
        compiler_params=pltpu.CompilerParams(
            dimension_semantics=("parallel", "parallel"),
            # Per-step footprint is bounded by the row tiling; 48 MiB is safely
            # above the default scoped cap on v5e/v6e and within v7x's 64 MiB.
            vmem_limit_bytes=48 * 1024 * 1024,
        ),
        cost_estimate=pl.CostEstimate(flops=flops, transcendentals=0,
                                      bytes_accessed=bytes_accessed),
    )(xp, xp, xp, w1p, b1p, w2k, b2p, w3p, b3p)

    out = out.reshape(B, H, W, cout_p)
    if cout_p != cout:
        out = out[..., :cout]
    return out


def make_params(key, inplanes, planes, base_width=64, groups=1):
    width = int(planes * (base_width / 64.0)) * groups
    cout = planes * 4  # expansion = 4
    eps = 1e-5
    ks = jax.random.split(key, 16)

    def bn_fold(kg, kb, km, kv, c):
        gamma = jax.random.uniform(kg, (c,), jnp.float32, 0.5, 1.5)
        beta = 0.1 * jax.random.normal(kb, (c,), jnp.float32)
        mean = 0.1 * jax.random.normal(km, (c,), jnp.float32)
        var = jax.random.uniform(kv, (c,), jnp.float32, 0.5, 1.5)
        scale = gamma / jnp.sqrt(var + eps)
        bias = beta - mean * scale
        return scale.reshape(1, c), bias.reshape(1, c)

    w1 = 0.1 * jax.random.normal(ks[0], (inplanes, width), jnp.float32)
    w2 = 0.1 * jax.random.normal(ks[1], (3, 3, width, width), jnp.float32)
    w3 = 0.1 * jax.random.normal(ks[2], (width, cout), jnp.float32)
    s1, b1 = bn_fold(ks[3], ks[4], ks[5], ks[6], width)
    s2, b2 = bn_fold(ks[7], ks[8], ks[9], ks[10], width)
    s3, b3 = bn_fold(ks[11], ks[12], ks[13], ks[14], cout)
    return (w1, s1, b1, w2, s2, b2, w3, s3, b3)


def ref_forward(x, params):
    """Pure-JAX NHWC reference (same math in f32, XLA conv ops)."""
    w1, s1, b1, w2, s2, b2, w3, s3, b3 = params
    dn = ('NHWC', 'HWIO', 'NHWC')

    def conv1x1(h, w):
        return jax.lax.conv_general_dilated(
            h, w[None, None], (1, 1), 'VALID', dimension_numbers=dn)

    h = jnp.maximum(conv1x1(x, w1) * s1 + b1, 0.0)
    h = jax.lax.conv_general_dilated(
        h, w2, (1, 1), ((1, 1), (1, 1)), dimension_numbers=dn)
    h = jnp.maximum(h * s2 + b2, 0.0)
    h = conv1x1(h, w3) * s3 + b3
    return jnp.maximum(h + x, 0.0)


if __name__ == "__main__":
    key = jax.random.PRNGKey(0)
    kx, kp = jax.random.split(key)

    # inplanes must equal planes * expansion (downsample=None case).
    B, inplanes, planes, H, W = 2, 16, 4, 16, 16
    x = jax.random.normal(kx, (B, H, W, inplanes), jnp.float32)
    params = make_params(kp, inplanes, planes)
    ref = ref_forward(x, params)

    # Multi-tile path (2 row tiles per image -> exercises the halo logic).
    out_tiled = jax.block_until_ready(bottleneck_forward(x, params, tile_rows=8))
    assert out_tiled.shape == (B, H, W, planes * 4)
    np.testing.assert_allclose(np.asarray(out_tiled, dtype=np.float32),
                               np.asarray(ref), rtol=3e-2, atol=3e-2)

    # Default (auto) tiling path.
    out_auto = jax.block_until_ready(bottleneck_forward(x, params))
    np.testing.assert_allclose(np.asarray(out_auto, dtype=np.float32),
                               np.asarray(ref), rtol=3e-2, atol=3e-2)

    print("KERNEL_OK")
</pallas_src>

<mosaic_0001>
module attributes {stable_mosaic.version = 11 : i64} {
  func.func @bottleneck_kernel(%arg0: i32, %arg1: i32, %arg2: memref<1x16x128xbf16, #tpu.memory_space<vmem>>, %arg3: memref<1x128x128xbf16, #tpu.memory_space<vmem>>, %arg4: memref<1x16x128xbf16, #tpu.memory_space<vmem>>, %arg5: memref<128x128xbf16, #tpu.memory_space<vmem>>, %arg6: memref<1x128xf32, #tpu.memory_space<vmem>>, %arg7: memref<3x384x128xbf16, #tpu.memory_space<vmem>>, %arg8: memref<1x128xf32, #tpu.memory_space<vmem>>, %arg9: memref<128x128xbf16, #tpu.memory_space<vmem>>, %arg10: memref<1x128xf32, #tpu.memory_space<vmem>>, %arg11: memref<1x128x128xbf16, #tpu.memory_space<vmem>>, %arg12: memref<160x384xbf16, #tpu.memory_space<vmem>>) attributes {dimension_semantics = [#tpu.dimension_semantics<parallel>, #tpu.dimension_semantics<parallel>], iteration_bounds = array<i64: 2, 2>, scalar_prefetch = 0 : i64, scratch_operands = 1 : i64, tpu.core_type = #tpu.core_type<tc>, window_params = [{transform_indices = @transform_0, window_bounds = array<i64: 1, 16, 128>}, {transform_indices = @transform_1, window_bounds = array<i64: 1, 128, 128>}, {transform_indices = @transform_2, window_bounds = array<i64: 1, 16, 128>}, {pipeline_mode = #tpu.pipeline_mode<synchronous>, transform_indices = @transform_3, window_bounds = array<i64: 128, 128>}, {pipeline_mode = #tpu.pipeline_mode<synchronous>, transform_indices = @transform_4, window_bounds = array<i64: 1, 128>}, {pipeline_mode = #tpu.pipeline_mode<synchronous>, transform_indices = @transform_5, window_bounds = array<i64: 3, 384, 128>}, {pipeline_mode = #tpu.pipeline_mode<synchronous>, transform_indices = @transform_6, window_bounds = array<i64: 1, 128>}, {pipeline_mode = #tpu.pipeline_mode<synchronous>, transform_indices = @transform_7, window_bounds = array<i64: 128, 128>}, {pipeline_mode = #tpu.pipeline_mode<synchronous>, transform_indices = @transform_8, window_bounds = array<i64: 1, 128>}, {transform_indices = @transform_9, window_bounds = array<i64: 1, 128, 128>}]} {
    %c0 = arith.constant 0 : index
    %c0_0 = arith.constant 0 : index
    %c0_1 = arith.constant 0 : index
    %0 = vector.load %arg2[%c0, %c0_0, %c0_1] : memref<1x16x128xbf16, #tpu.memory_space<vmem>>, vector<1x16x128xbf16>
    %1 = vector.shape_cast %0 : vector<1x16x128xbf16> to vector<16x128xbf16>
    %c0_2 = arith.constant 0 : index
    %c0_3 = arith.constant 0 : index
    %c0_4 = arith.constant 0 : index
    %2 = vector.load %arg3[%c0_2, %c0_3, %c0_4] : memref<1x128x128xbf16, #tpu.memory_space<vmem>>, vector<1x128x128xbf16>
    %3 = vector.shape_cast %2 : vector<1x128x128xbf16> to vector<128x128xbf16>
    %c0_5 = arith.constant 0 : index
    %c0_6 = arith.constant 0 : index
    %c0_7 = arith.constant 0 : index
    %4 = vector.load %arg4[%c0_5, %c0_6, %c0_7] : memref<1x16x128xbf16, #tpu.memory_space<vmem>>, vector<1x16x128xbf16>
    %5 = vector.shape_cast %4 : vector<1x16x128xbf16> to vector<16x128xbf16>
    %6 = tpu.concatenate %1, %3, %5 in 0 : vector<16x128xbf16>, vector<128x128xbf16>, vector<16x128xbf16> -> vector<160x128xbf16>
    %c0_8 = arith.constant 0 : index
    %c0_9 = arith.constant 0 : index
    %7 = vector.load %arg5[%c0_8, %c0_9] : memref<128x128xbf16, #tpu.memory_space<vmem>>, vector<128x128xbf16>
    %cst = arith.constant dense<0.000000e+00> : vector<160x128xf32>
    %8 = tpu.matmul %6, %7, %cst {dimension_numbers = #tpu.dot_dimension_numbers<[1], [0], [0], [1], [0, 0, 1, 1], [], []>} : vector<160x128xbf16>, vector<128x128xbf16>, vector<160x128xf32> -> vector<160x128xf32>
    %c0_10 = arith.constant 0 : index
    %c0_11 = arith.constant 0 : index
    %9 = vector.load %arg6[%c0_10, %c0_11] : memref<1x128xf32, #tpu.memory_space<vmem>>, vector<1x128xf32>
    %10 = vector.broadcast %9 : vector<1x128xf32> to vector<160x128xf32>
    %11 = arith.addf %8, %10 : vector<160x128xf32>
    %cst_12 = arith.constant 0.000000e+00 : f32
    %12 = vector.broadcast %cst_12 : f32 to vector<160x128xf32>
    %13 = arith.maximumf %11, %12 : vector<160x128xf32>
    %14 = tpu.iota {dimensions = array<i32: 0>} : vector<160x1xi32>
    %c16_i32 = arith.constant 16 : i32
    %c0_i32 = arith.constant 0 : i32
    %15 = arith.cmpi eq, %c16_i32, %c0_i32 : i32
    %c1_i32 = arith.constant 1 : i32
    %16 = arith.select %15, %c1_i32, %c16_i32 : i32
    %17 = vector.broadcast %16 : i32 to vector<160x1xi32>
    %18 = arith.remsi %14, %17 : vector<160x1xi32>
    %c0_i32_13 = arith.constant 0 : i32
    %19 = vector.broadcast %c0_i32_13 : i32 to vector<160x1xi32>
    %20 = arith.cmpi ne, %18, %19 : vector<160x1xi32>
    %c0_i32_14 = arith.constant 0 : i32
    %21 = vector.broadcast %c0_i32_14 : i32 to vector<160x1xi32>
    %22 = arith.cmpi slt, %18, %21 : vector<160x1xi32>
    %c0_i32_15 = arith.constant 0 : i32
    %23 = arith.cmpi slt, %16, %c0_i32_15 : i32
    %24 = vector.broadcast %23 : i1 to vector<160x1xi1>
    %25 = vector.broadcast %24 : vector<160x1xi1> to vector<160x1xi1>
    %26 = arith.xori %22, %25 : vector<160x1xi1>
    %27 = arith.andi %26, %20 : vector<160x1xi1>
    %28 = vector.broadcast %16 : i32 to vector<160x1xi32>
    %29 = arith.addi %18, %28 : vector<160x1xi32>
    %30 = arith.select %27, %29, %18 : vector<160x1xi1>, vector<160x1xi32>
    %cst_16 = arith.constant 0.000000e+00 : f32
    %31 = vector.broadcast %cst_16 : f32 to vector<1x128xf32>
    %c0_i32_17 = arith.constant 0 : i32
    %32 = vector.broadcast %c0_i32_17 : i32 to vector<160x1xi32>
    %33 = arith.cmpi eq, %30, %32 : vector<160x1xi32>
    %34 = vector.extract_strided_slice %13 {offsets = [0, 0], sizes = [159, 128], strides = [1, 1]} : vector<160x128xf32> to vector<159x128xf32>
    %35 = tpu.concatenate %31, %34 in 0 : vector<1x128xf32>, vector<159x128xf32> -> vector<160x128xf32>
    %cst_18 = arith.constant 0.000000e+00 : f32
    %36 = vector.shape_cast %33 : vector<160x1xi1> to vector<160x1xi1>
    %37 = vector.broadcast %36 : vector<160x1xi1> to vector<160x128xi1>
    %38 = vector.broadcast %cst_18 : f32 to vector<160x128xf32>
    %39 = arith.select %37, %38, %35 : vector<160x128xi1>, vector<160x128xf32>
    %c15_i32 = arith.constant 15 : i32
    %40 = vector.broadcast %c15_i32 : i32 to vector<160x1xi32>
    %41 = arith.cmpi eq, %30, %40 : vector<160x1xi32>
    %42 = vector.extract_strided_slice %13 {offsets = [1, 0], sizes = [159, 128], strides = [1, 1]} : vector<160x128xf32> to vector<159x128xf32>
    %43 = tpu.concatenate %42, %31 in 0 : vector<159x128xf32>, vector<1x128xf32> -> vector<160x128xf32>
    %cst_19 = arith.constant 0.000000e+00 : f32
    %44 = vector.shape_cast %41 : vector<160x1xi1> to vector<160x1xi1>
    %45 = vector.broadcast %44 : vector<160x1xi1> to vector<160x128xi1>
    %46 = vector.broadcast %cst_19 : f32 to vector<160x128xf32>
    %47 = arith.select %45, %46, %43 : vector<160x128xi1>, vector<160x128xf32>
    %48 = arith.truncf %39 : vector<160x128xf32> to vector<160x128xbf16>
    %c0_20 = arith.constant 0 : index
    %c0_21 = arith.constant 0 : index
    %49 = vector.load %arg12[%c0_20, %c0_21] : memref<160x384xbf16, #tpu.memory_space<vmem>>, vector<160x128xbf16>
    tpu.vector_store %arg12[%c0_20, %c0_21], %48 {strides = array<i32>} : memref<160x384xbf16, #tpu.memory_space<vmem>>, vector<160x128xbf16>,
    %50 = arith.truncf %13 : vector<160x128xf32> to vector<160x128xbf16>
    %c0_22 = arith.constant 0 : index
    %c128 = arith.constant 128 : index
    %51 = vector.load %arg12[%c0_22, %c128] : memref<160x384xbf16, #tpu.memory_space<vmem>>, vector<160x128xbf16>
    tpu.vector_store %arg12[%c0_22, %c128], %50 {strides = array<i32>} : memref<160x384xbf16, #tpu.memory_space<vmem>>, vector<160x128xbf16>,
    %52 = arith.truncf %47 : vector<160x128xf32> to vector<160x128xbf16>
    %c0_23 = arith.constant 0 : index
    %c256 = arith.constant 256 : index
    %53 = vector.load %arg12[%c0_23, %c256] : memref<160x384xbf16, #tpu.memory_space<vmem>>, vector<160x128xbf16>
    tpu.vector_store %arg12[%c0_23, %c256], %52 {strides = array<i32>} : memref<160x384xbf16, #tpu.memory_space<vmem>>, vector<160x128xbf16>,
    %c0_i32_24 = arith.constant 0 : i32
    %54 = arith.cmpi eq, %arg1, %c0_i32_24 : i32
    %55 = arith.extui %54 : i1 to i32
    %c0_i32_25 = arith.constant 0 : i32
    %56 = arith.cmpi ne, %55, %c0_i32_25 : i32
    scf.if %56 {
      %cst_57 = arith.constant 0.000000e+00 : bf16
      %95 = vector.broadcast %cst_57 : bf16 to vector<16x384xbf16>
      %c0_58 = arith.constant 0 : index
      %c0_59 = arith.constant 0 : index
      %96 = vector.load %arg12[%c0_58, %c0_59] : memref<160x384xbf16, #tpu.memory_space<vmem>>, vector<16x384xbf16>
      tpu.vector_store %arg12[%c0_58, %c0_59], %95 {strides = array<i32>} : memref<160x384xbf16, #tpu.memory_space<vmem>>, vector<16x384xbf16>,
    } else {
    }
    %c1_i32_26 = arith.constant 1 : i32
    %57 = arith.cmpi eq, %arg1, %c1_i32_26 : i32
    %58 = arith.extui %57 : i1 to i32
    %c0_i32_27 = arith.constant 0 : i32
    %59 = arith.cmpi ne, %58, %c0_i32_27 : i32
    scf.if %59 {
      %cst_57 = arith.constant 0.000000e+00 : bf16
      %95 = vector.broadcast %cst_57 : bf16 to vector<16x384xbf16>
      %c144 = arith.constant 144 : index
      %c0_58 = arith.constant 0 : index
      %96 = vector.load %arg12[%c144, %c0_58] : memref<160x384xbf16, #tpu.memory_space<vmem>>, vector<16x384xbf16>
      tpu.vector_store %arg12[%c144, %c0_58], %95 {strides = array<i32>} : memref<160x384xbf16, #tpu.memory_space<vmem>>, vector<16x384xbf16>,
    } else {
    }
    %c0_28 = arith.constant 0 : index
    %c0_29 = arith.constant 0 : index
    %60 = vector.load %arg12[%c0_28, %c0_29] : memref<160x384xbf16, #tpu.memory_space<vmem>>, vector<128x384xbf16>
    %c0_30 = arith.constant 0 : index
    %c0_31 = arith.constant 0 : index
    %c0_32 = arith.constant 0 : index
    %61 = vector.load %arg7[%c0_30, %c0_31, %c0_32] : memref<3x384x128xbf16, #tpu.memory_space<vmem>>, vector<1x384x128xbf16>
    %62 = vector.shape_cast %61 : vector<1x384x128xbf16> to vector<384x128xbf16>
    %cst_33 = arith.constant dense<0.000000e+00> : vector<128x128xf32>
    %63 = tpu.matmul %60, %62, %cst_33 {dimension_numbers = #tpu.dot_dimension_numbers<[1], [0], [0], [1], [0, 0, 1, 1], [], []>} : vector<128x384xbf16>, vector<384x128xbf16>, vector<128x128xf32> -> vector<128x128xf32>
    %c16 = arith.constant 16 : index
    %c0_34 = arith.constant 0 : index
    %64 = vector.load %arg12[%c16, %c0_34] : memref<160x384xbf16, #tpu.memory_space<vmem>>, vector<128x384xbf16>
    %c1 = arith.constant 1 : index
    %c0_35 = arith.constant 0 : index
    %c0_36 = arith.constant 0 : index
    %65 = vector.load %arg7[%c1, %c0_35, %c0_36] : memref<3x384x128xbf16, #tpu.memory_space<vmem>>, vector<1x384x128xbf16>
    %66 = vector.shape_cast %65 : vector<1x384x128xbf16> to vector<384x128xbf16>
    %cst_37 = arith.constant dense<0.000000e+00> : vector<128x128xf32>
    %67 = tpu.matmul %64, %66, %cst_37 {dimension_numbers = #tpu.dot_dimension_numbers<[1], [0], [0], [1], [0, 0, 1, 1], [], []>} : vector<128x384xbf16>, vector<384x128xbf16>, vector<128x128xf32> -> vector<128x128xf32>
    %68 = arith.addf %63, %67 : vector<128x128xf32>
    %c32 = arith.constant 32 : index
    %c0_38 = arith.constant 0 : index
    %69 = vector.load %arg12[%c32, %c0_38] : memref<160x384xbf16, #tpu.memory_space<vmem>>, vector<128x384xbf16>
    %c2 = arith.constant 2 : index
    %c0_39 = arith.constant 0 : index
    %c0_40 = arith.constant 0 : index
    %70 = vector.load %arg7[%c2, %c0_39, %c0_40] : memref<3x384x128xbf16, #tpu.memory_space<vmem>>, vector<1x384x128xbf16>
    %71 = vector.shape_cast %70 : vector<1x384x128xbf16> to vector<384x128xbf16>
    %cst_41 = arith.constant dense<0.000000e+00> : vector<128x128xf32>
    %72 = tpu.matmul %69, %71, %cst_41 {dimension_numbers = #tpu.dot_dimension_numbers<[1], [0], [0], [1], [0, 0, 1, 1], [], []>} : vector<128x384xbf16>, vector<384x128xbf16>, vector<128x128xf32> -> vector<128x128xf32>
    %73 = arith.addf %68, %72 : vector<128x128xf32>
    %c0_42 = arith.constant 0 : index
    %c0_43 = arith.constant 0 : index
    %74 = vector.load %arg8[%c0_42, %c0_43] : memref<1x128xf32, #tpu.memory_space<vmem>>, vector<1x128xf32>
    %75 = vector.broadcast %74 : vector<1x128xf32> to vector<128x128xf32>
    %76 = arith.addf %73, %75 : vector<128x128xf32>
    %cst_44 = arith.constant 0.000000e+00 : f32
    %77 = vector.broadcast %cst_44 : f32 to vector<128x128xf32>
    %78 = arith.maximumf %76, %77 : vector<128x128xf32>
    %79 = arith.truncf %78 : vector<128x128xf32> to vector<128x128xbf16>
    %c0_45 = arith.constant 0 : index
    %c0_46 = arith.constant 0 : index
    %80 = vector.load %arg9[%c0_45, %c0_46] : memref<128x128xbf16, #tpu.memory_space<vmem>>, vector<128x128xbf16>
    %cst_47 = arith.constant dense<0.000000e+00> : vector<128x128xf32>
    %81 = tpu.matmul %79, %80, %cst_47 {dimension_numbers = #tpu.dot_dimension_numbers<[1], [0], [0], [1], [0, 0, 1, 1], [], []>} : vector<128x128xbf16>, vector<128x128xbf16>, vector<128x128xf32> -> vector<128x128xf32>
    %c0_48 = arith.constant 0 : index
    %c0_49 = arith.constant 0 : index
    %82 = vector.load %arg10[%c0_48, %c0_49] : memref<1x128xf32, #tpu.memory_space<vmem>>, vector<1x128xf32>
    %83 = vector.broadcast %82 : vector<1x128xf32> to vector<128x128xf32>
    %84 = arith.addf %81, %83 : vector<128x128xf32>
    %c0_50 = arith.constant 0 : index
    %c0_51 = arith.constant 0 : index
    %c0_52 = arith.constant 0 : index
    %85 = vector.load %arg3[%c0_50, %c0_51, %c0_52] : memref<1x128x128xbf16, #tpu.memory_space<vmem>>, vector<1x128x128xbf16>
    %86 = vector.shape_cast %85 : vector<1x128x128xbf16> to vector<128x128xbf16>
    %87 = arith.extf %86 : vector<128x128xbf16> to vector<128x128xf32>
    %88 = arith.addf %84, %87 : vector<128x128xf32>
    %cst_53 = arith.constant 0.000000e+00 : f32
    %89 = vector.broadcast %cst_53 : f32 to vector<128x128xf32>
    %90 = arith.maximumf %88, %89 : vector<128x128xf32>
    %91 = arith.truncf %90 : vector<128x128xf32> to vector<128x128xbf16>
    %c0_54 = arith.constant 0 : index
    %c0_55 = arith.constant 0 : index
    %c0_56 = arith.constant 0 : index
    %92 = vector.load %arg11[%c0_54, %c0_55, %c0_56] : memref<1x128x128xbf16, #tpu.memory_space<vmem>>, vector<1x128x128xbf16>
    %93 = vector.shape_cast %92 : vector<1x128x128xbf16> to vector<128x128xbf16>
    %94 = vector.shape_cast %91 : vector<128x128xbf16> to vector<1x128x128xbf16>
    tpu.vector_store %arg11[%c0_54, %c0_55, %c0_56], %94 {strides = array<i32>} : memref<1x128x128xbf16, #tpu.memory_space<vmem>>, vector<1x128x128xbf16>,
    return
  }
  func.func @transform_0(%arg0: i32, %arg1: i32) -> (i32, i32, i32) {
    %c8_i32 = arith.constant 8 : i32
    %0 = arith.muli %arg1, %c8_i32 : i32
    %c1_i32 = arith.constant 1 : i32
    %1 = arith.subi %0, %c1_i32 : i32
    %c0_i32 = arith.constant 0 : i32
    %2 = arith.maxsi %1, %c0_i32 : i32
    %c0_i32_0 = arith.constant 0 : i32
    %c0_i32_1 = arith.constant 0 : i32
    return %arg0, %2, %c0_i32_0 : i32, i32, i32
  }
  func.func @transform_1(%arg0: i32, %arg1: i32) -> (i32, i32, i32) {
    %c0_i32 = arith.constant 0 : i32
    %c0_i32_0 = arith.constant 0 : i32
    return %arg0, %arg1, %c0_i32 : i32, i32, i32
  }
  func.func @transform_2(%arg0: i32, %arg1: i32) -> (i32, i32, i32) {
    %c1_i32 = arith.constant 1 : i32
    %0 = arith.addi %arg1, %c1_i32 : i32
    %c8_i32 = arith.constant 8 : i32
    %1 = arith.muli %0, %c8_i32 : i32
    %c15_i32 = arith.constant 15 : i32
    %2 = arith.minsi %1, %c15_i32 : i32
    %c0_i32 = arith.constant 0 : i32
    %c0_i32_0 = arith.constant 0 : i32
    return %arg0, %2, %c0_i32 : i32, i32, i32
  }
  func.func @transform_3(%arg0: i32, %arg1: i32) -> (i32, i32) {
    %c0_i32 = arith.constant 0 : i32
    %c0_i32_0 = arith.constant 0 : i32
    %c0_i32_1 = arith.constant 0 : i32
    return %c0_i32, %c0_i32_0 : i32, i32
  }
  func.func @transform_4(%arg0: i32, %arg1: i32) -> (i32, i32) {
    %c0_i32 = arith.constant 0 : i32
    %c0_i32_0 = arith.constant 0 : i32
    %c0_i32_1 = arith.constant 0 : i32
    return %c0_i32, %c0_i32_0 : i32, i32
  }
  func.func @transform_5(%arg0: i32, %arg1: i32) -> (i32, i32, i32) {
    %c0_i32 = arith.constant 0 : i32
    %c0_i32_0 = arith.constant 0 : i32
    %c0_i32_1 = arith.constant 0 : i32
    %c0_i32_2 = arith.constant 0 : i32
    return %c0_i32, %c0_i32_0, %c0_i32_1 : i32, i32, i32
  }
  func.func @transform_6(%arg0: i32, %arg1: i32) -> (i32, i32) {
    %c0_i32 = arith.constant 0 : i32
    %c0_i32_0 = arith.constant 0 : i32
    %c0_i32_1 = arith.constant 0 : i32
    return %c0_i32, %c0_i32_0 : i32, i32
  }
  func.func @transform_7(%arg0: i32, %arg1: i32) -> (i32, i32) {
    %c0_i32 = arith.constant 0 : i32
    %c0_i32_0 = arith.constant 0 : i32
    %c0_i32_1 = arith.constant 0 : i32
    return %c0_i32, %c0_i32_0 : i32, i32
  }
  func.func @transform_8(%arg0: i32, %arg1: i32) -> (i32, i32) {
    %c0_i32 = arith.constant 0 : i32
    %c0_i32_0 = arith.constant 0 : i32
    %c0_i32_1 = arith.constant 0 : i32
    return %c0_i32, %c0_i32_0 : i32, i32
  }
  func.func @transform_9(%arg0: i32, %arg1: i32) -> (i32, i32, i32) {
    %c0_i32 = arith.constant 0 : i32
    %c0_i32_0 = arith.constant 0 : i32
    return %arg0, %arg1, %c0_i32 : i32, i32, i32
  }
}

</mosaic_0001>

<llo_original>
// kernel: tpu_custom_call.1
$region0: #{tpu_custom_call.1}
  #allocation0 [shape = 'u32[]', space=smem, size = 0x4, offset = 0x4, fixed_abs, tag = 'smem constant byte address 0x4 - core index']
  #allocation1 [shape = 'u32[144,128]{1,0:T(1,128)}', space=vmem, size = 0x12000, scoped, tag = 'internal scratch']
  #allocation2 [shape = 'bf16[160,384]{1,0:T(16,128)(2,1)}', space=vmem, size = 0x1e000, scoped, tag = 'scratch operand']
  %s0 = inlined_call_operand.hbm [shape: bf16[2,256,128], index: 0, kind: input, shape index: {}]
  %s1 = inlined_call_operand.hbm [shape: bf16[2,256,128], index: 1, kind: input, shape index: {}]
  %s2 = inlined_call_operand.hbm [shape: bf16[2,256,128], index: 2, kind: input, shape index: {}]
  %s3 = inlined_call_operand.hbm [shape: bf16[128,128], index: 3, kind: input, shape index: {}]
  %s4 = inlined_call_operand.vmem [shape: f32[1,128], index: 4, kind: input, shape index: {}]
  %s5 = inlined_call_operand.hbm [shape: bf16[3,384,128], index: 5, kind: input, shape index: {}]
  %s6 = inlined_call_operand.vmem [shape: f32[1,128], index: 6, kind: input, shape index: {}]
  %s7 = inlined_call_operand.hbm [shape: bf16[128,128], index: 7, kind: input, shape index: {}]
  %s8 = inlined_call_operand.vmem [shape: f32[1,128], index: 8, kind: input, shape index: {}]
  %s9 = inlined_call_operand.hbm [shape: bf16[2,256,128], index: 9, kind: output, shape index: {}]
  %s10 = sld [smem:[#allocation0]]
  $region101: #{tpu_custom_call.1} parent=0
    _
  %s12 = ssub.s32 1, %s10
  %s13 = scalar_select 0, %s12, %s10
  $region1: #{tpu_custom_call.1} parent=0
    #allocation3 [shape = 'u8[8192]{0}', space=vmem, size = 0x2000, scoped, tag = 'input window, operand 0']
    #allocation4 [shape = 's32[2]{0}', space=sflag, size = 0x8, scoped, tag = 'scoped memory for tpu_custom_call.1']
    #allocation5 [shape = 's32[2]{0}', space=sflag, size = 0x8, scoped, tag = 'scoped memory for tpu_custom_call.1']
    #allocation6 [shape = 'u8[65536]{0}', space=vmem, size = 0x10000, scoped, tag = 'input window, operand 1']
    #allocation7 [shape = 's32[2]{0}', space=sflag, size = 0x8, scoped, tag = 'scoped memory for tpu_custom_call.1']
    #allocation8 [shape = 'u8[8192]{0}', space=vmem, size = 0x2000, scoped, tag = 'input window, operand 2']
    #allocation9 [shape = 'u8[32768]{0}', space=vmem, size = 0x8000, scoped, tag = 'input window, operand 3, single buffered']
    #allocation10 [shape = 's32[1]{0}', space=sflag, size = 0x4, scoped, tag = 'scoped memory for tpu_custom_call.1']
    #allocation11 [shape = 'u8[294912]{0}', space=vmem, size = 0x48000, scoped, tag = 'input window, operand 5, single buffered']
    #allocation12 [shape = 'u8[32768]{0}', space=vmem, size = 0x8000, scoped, tag = 'input window, operand 7, single buffered']
    #allocation13 [shape = 's32[1]{0}', space=sflag, size = 0x4, scoped, tag = 'scoped memory for tpu_custom_call.1']
    #allocation14 [shape = 'u8[65536]{0}', space=vmem, size = 0x10000, scoped, tag = 'output window, operand 0']
    %14 = vsyncpa [#allocation4], 0
    %s15 = scalar_lea.sflag [#allocation4], 1
    %16 = vsyncpa %s15, 0
    %17 = vsyncpa [#allocation7], 0
    %s18 = scalar_lea.sflag [#allocation7], 1
    %19 = vsyncpa %s18, 0
    %20 = vsyncpa [#allocation10], 0
    %21 = vsyncpa [#allocation13], 0
    %22 = vsyncpa [#allocation5], 0
    %s23 = scalar_lea.sflag [#allocation5], 1
    %24 = vsyncpa %s23, 0
    loop: start=0, step=1, limit=6
    $region2: #{tpu_custom_call.1} parent=1 // loop_pre_header
      _
    $region3: #{tpu_custom_call.1} parent=1 // loop_header
      %s26 = sphi 0, %s30
      %p27 = scmp.ge.s32.totalorder %s26, 6
      %s33 = sphi 0, %s45
      %s34 = sphi 0, %s41
      %s35 = sphi 0, %s33
      %s36 = sphi 0, %s34
      %s37 = sphi 0, %s35
      %s38 = sphi 0, %s36
      %s58 = sphi 0, %s60
      %s61 = sphi 0, %s58
      %s62 = sphi 0, %s61
      %s78 = sphi 0, %s62
      %s86 = sphi 0, %s88
      %s89 = sphi 0, %s86
      %s90 = sphi 0, %s89
      %s106 = sphi 0, %s90
      %s122 = sphi 0, %s124
      %s125 = sphi 0, %s122
      %s126 = sphi 0, %s125
      %s142 = sphi 0, %s126
      %s146 = sphi 0, %s146
      %s148 = sphi 0, %s146
      %s149 = sphi 0, %s148
      %s163 = sphi 0, %s149
      %s167 = sphi 0, %s167
      %s169 = sphi 0, %s167
      %s170 = sphi 0, %s169
      %s184 = sphi 0, %s170
      %s188 = sphi 0, %s188
      %s190 = sphi 0, %s188
      %s191 = sphi 0, %s190
      %s205 = sphi 0, %s191
      %s209 = sphi 0, %s209
      %s211 = sphi 0, %s209
      %s212 = sphi 0, %s211
      %s226 = sphi 0, %s212
      %s230 = sphi 0, %s230
      %s232 = sphi 0, %s230
      %s233 = sphi 0, %s232
      %s247 = sphi 0, %s233
      %s251 = sphi 0, %s251
      %s253 = sphi 0, %s251
      %s254 = sphi 0, %s253
      %s268 = sphi 0, %s254
      %s276 = sphi 0, %s278
      %s279 = sphi 0, %s276
      %s280 = sphi 0, %s279
      %s296 = sphi 0, %s280
    $region4: #{tpu_custom_call.1} parent=1 // loop_header_branch
      %29 = sbr.rel (%p27) target = $region8
    $region5: #{tpu_custom_call.1} parent=1 // loop_body
      %s31 = ssub.s32 %s26, 1
      %s32 = ssub.s32 %s26, 2
      %s39 = sadd.s32 1, %s34
      %p40 = scmp.ge.s32.totalorder %s39, 2
      %s41 = scalar_select %p40, 0, %s39
      %s42 = sadd.s32 1, %s33
      %s43 = scalar_select %p40, %s42, %s33
      %p44 = scmp.ge.s32.totalorder %s43, 2
      %s45 = scalar_select %p44, 0, %s43
      %s46 = smul.u32 %s34, 8
      %s47 = ssub.s32 %s46, 1
      %p48 = scmp.gt.s32.totalorder %s47, 0
      %s49 = scalar_select %p48, %s47, 0
      %s50 = smul.u32 %s41, 8
      %s51 = ssub.s32 %s50, 1
      %p52 = scmp.gt.s32.totalorder %s51, 0
      %s53 = scalar_select %p52, %s51, 0
      %s54 = ssub.s32 %s33, %s45
      %s55 = ssub.s32 %s49, %s53
      %s56 = sor.u32 %s54, %s55
      %p57 = scmp.eq.s32.totalorder %s56, 0
      %s59 = sadd.s32 %s58, 1
      %s60 = scalar_select %p57, %s58, %s59
      %p63 = pneg %p57
      %p64 = scmp.eq.s32.totalorder %s26, 3
      %p65 = por %p63, %p64
      %p66 = scmp.ne.s32.totalorder %s58, %s61
      %p67 = scmp.eq.s32.totalorder %s26, 0
      %p68 = por %p66, %p67
      %p69 = scmp.ne.s32.totalorder %s58, %s61
      %p70 = scmp.eq.s32.totalorder %s31, 3
      %p71 = por %p69, %p70
      %p72 = scmp.ne.s32.totalorder %s61, %s62
      %p73 = scmp.eq.s32.totalorder %s31, 0
      %p74 = por %p72, %p73
      %p75 = scmp.ne.s32.totalorder %s61, %s62
      %p76 = scmp.eq.s32.totalorder %s32, 3
      %p77 = por %p75, %p76
      %p79 = scmp.ne.s32.totalorder %s62, %s78
      %p80 = scmp.eq.s32.totalorder %s32, 0
      %p81 = por %p79, %p80
      %s82 = ssub.s32 %s33, %s45
      %s83 = ssub.s32 %s34, %s41
      %s84 = sor.u32 %s82, %s83
      %p85 = scmp.eq.s32.totalorder %s84, 0
      %s87 = sadd.s32 %s86, 1
      %s88 = scalar_select %p85, %s86, %s87
      %p91 = pneg %p85
      %p92 = scmp.eq.s32.totalorder %s26, 3
      %p93 = por %p91, %p92
      %p94 = scmp.ne.s32.totalorder %s86, %s89
      %p95 = scmp.eq.s32.totalorder %s26, 0
      %p96 = por %p94, %p95
      %p97 = scmp.ne.s32.totalorder %s86, %s89
      %p98 = scmp.eq.s32.totalorder %s31, 3
      %p99 = por %p97, %p98
      %p100 = scmp.ne.s32.totalorder %s89, %s90
      %p101 = scmp.eq.s32.totalorder %s31, 0
      %p102 = por %p100, %p101
      %p103 = scmp.ne.s32.totalorder %s89, %s90
      %p104 = scmp.eq.s32.totalorder %s32, 3
      %p105 = por %p103, %p104
      %p107 = scmp.ne.s32.totalorder %s90, %s106
      %p108 = scmp.eq.s32.totalorder %s32, 0
      %p109 = por %p107, %p108
      %s110 = sadd.s32 %s34, 1
      %s111 = smul.u32 %s110, 8
      %p112 = scmp.lt.s32.totalorder %s111, 15
      %s113 = scalar_select %p112, %s111, 15
      %s114 = sadd.s32 %s41, 1
      %s115 = smul.u32 %s114, 8
      %p116 = scmp.lt.s32.totalorder %s115, 15
      %s117 = scalar_select %p116, %s115, 15
      %s118 = ssub.s32 %s33, %s45
      %s119 = ssub.s32 %s113, %s117
      %s120 = sor.u32 %s118, %s119
      %p121 = scmp.eq.s32.totalorder %s120, 0
      %s123 = sadd.s32 %s122, 1
      %s124 = scalar_select %p121, %s122, %s123
      %p127 = pneg %p121
      %p128 = scmp.eq.s32.totalorder %s26, 3
      %p129 = por %p127, %p128
      %p130 = scmp.ne.s32.totalorder %s122, %s125
      %p131 = scmp.eq.s32.totalorder %s26, 0
      %p132 = por %p130, %p131
      %p133 = scmp.ne.s32.totalorder %s122, %s125
      %p134 = scmp.eq.s32.totalorder %s31, 3
      %p135 = por %p133, %p134
      %p136 = scmp.ne.s32.totalorder %s125, %s126
      %p137 = scmp.eq.s32.totalorder %s31, 0
      %p138 = por %p136, %p137
      %p139 = scmp.ne.s32.totalorder %s125, %s126
      %p140 = scmp.eq.s32.totalorder %s32, 3
      %p141 = por %p139, %p140
      %p143 = scmp.ne.s32.totalorder %s126, %s142
      %p144 = scmp.eq.s32.totalorder %s32, 0
      %p145 = por %p143, %p144
      %s147 = sadd.s32 %s146, 1
      %p150 = scmp.eq.s32.totalorder %s26, 3
      %p151 = scmp.ne.s32.totalorder %s146, %s148
      %p152 = scmp.eq.s32.totalorder %s26, 0
      %p153 = por %p151, %p152
      %p154 = scmp.ne.s32.totalorder %s146, %s148
      %p155 = scmp.eq.s32.totalorder %s31, 3
      %p156 = por %p154, %p155
      %p157 = scmp.ne.s32.totalorder %s148, %s149
      %p158 = scmp.eq.s32.totalorder %s31, 0
      %p159 = por %p157, %p158
      %p160 = scmp.ne.s32.totalorder %s148, %s149
      %p161 = scmp.eq.s32.totalorder %s32, 3
      %p162 = por %p160, %p161
      %p164 = scmp.ne.s32.totalorder %s149, %s163
      %p165 = scmp.eq.s32.totalorder %s32, 0
      %p166 = por %p164, %p165
      %s168 = sadd.s32 %s167, 1
      %p171 = scmp.eq.s32.totalorder %s26, 3
      %p172 = scmp.ne.s32.totalorder %s167, %s169
      %p173 = scmp.eq.s32.totalorder %s26, 0
      %p174 = por %p172, %p173
      %p175 = scmp.ne.s32.totalorder %s167, %s169
      %p176 = scmp.eq.s32.totalorder %s31, 3
      %p177 = por %p175, %p176
      %p178 = scmp.ne.s32.totalorder %s169, %s170
      %p179 = scmp.eq.s32.totalorder %s31, 0
      %p180 = por %p178, %p179
      %p181 = scmp.ne.s32.totalorder %s169, %s170
      %p182 = scmp.eq.s32.totalorder %s32, 3
      %p183 = por %p181, %p182
      %p185 = scmp.ne.s32.totalorder %s170, %s184
      %p186 = scmp.eq.s32.totalorder %s32, 0
      %p187 = por %p185, %p186
      %s189 = sadd.s32 %s188, 1
      %p192 = scmp.eq.s32.totalorder %s26, 3
      %p193 = scmp.ne.s32.totalorder %s188, %s190
      %p194 = scmp.eq.s32.totalorder %s26, 0
      %p195 = por %p193, %p194
      %p196 = scmp.ne.s32.totalorder %s188, %s190
      %p197 = scmp.eq.s32.totalorder %s31, 3
      %p198 = por %p196, %p197
      %p199 = scmp.ne.s32.totalorder %s190, %s191
      %p200 = scmp.eq.s32.totalorder %s31, 0
      %p201 = por %p199, %p200
      %p202 = scmp.ne.s32.totalorder %s190, %s191
      %p203 = scmp.eq.s32.totalorder %s32, 3
      %p204 = por %p202, %p203
      %p206 = scmp.ne.s32.totalorder %s191, %s205
      %p207 = scmp.eq.s32.totalorder %s32, 0
      %p208 = por %p206, %p207
      %s210 = sadd.s32 %s209, 1
      %p213 = scmp.eq.s32.totalorder %s26, 3
      %p214 = scmp.ne.s32.totalorder %s209, %s211
      %p215 = scmp.eq.s32.totalorder %s26, 0
      %p216 = por %p214, %p215
      %p217 = scmp.ne.s32.totalorder %s209, %s211
      %p218 = scmp.eq.s32.totalorder %s31, 3
      %p219 = por %p217, %p218
      %p220 = scmp.ne.s32.totalorder %s211, %s212
      %p221 = scmp.eq.s32.totalorder %s31, 0
      %p222 = por %p220, %p221
      %p223 = scmp.ne.s32.totalorder %s211, %s212
      %p224 = scmp.eq.s32.totalorder %s32, 3
      %p225 = por %p223, %p224
      %p227 = scmp.ne.s32.totalorder %s212, %s226
      %p228 = scmp.eq.s32.totalorder %s32, 0
      %p229 = por %p227, %p228
      %s231 = sadd.s32 %s230, 1
      %p234 = scmp.eq.s32.totalorder %s26, 3
      %p235 = scmp.ne.s32.totalorder %s230, %s232
      %p236 = scmp.eq.s32.totalorder %s26, 0
      %p237 = por %p235, %p236
      %p238 = scmp.ne.s32.totalorder %s230, %s232
      %p239 = scmp.eq.s32.totalorder %s31, 3
      %p240 = por %p238, %p239
      %p241 = scmp.ne.s32.totalorder %s232, %s233
      %p242 = scmp.eq.s32.totalorder %s31, 0
      %p243 = por %p241, %p242
      %p244 = scmp.ne.s32.totalorder %s232, %s233
      %p245 = scmp.eq.s32.totalorder %s32, 3
      %p246 = por %p244, %p245
      %p248 = scmp.ne.s32.totalorder %s233, %s247
      %p249 = scmp.eq.s32.totalorder %s32, 0
      %p250 = por %p248, %p249
      %s252 = sadd.s32 %s251, 1
      %p255 = scmp.eq.s32.totalorder %s26, 3
      %p256 = scmp.ne.s32.totalorder %s251, %s253
      %p257 = scmp.eq.s32.totalorder %s26, 0
      %p258 = por %p256, %p257
      %p259 = scmp.ne.s32.totalorder %s251, %s253
      %p260 = scmp.eq.s32.totalorder %s31, 3
      %p261 = por %p259, %p260
      %p262 = scmp.ne.s32.totalorder %s253, %s254
      %p263 = scmp.eq.s32.totalorder %s31, 0
      %p264 = por %p262, %p263
      %p265 = scmp.ne.s32.totalorder %s253, %s254
      %p266 = scmp.eq.s32.totalorder %s32, 3
      %p267 = por %p265, %p266
      %p269 = scmp.ne.s32.totalorder %s254, %s268
      %p270 = scmp.eq.s32.totalorder %s32, 0
      %p271 = por %p269, %p270
      %s272 = ssub.s32 %s33, %s45
      %s273 = ssub.s32 %s34, %s41
      %s274 = sor.u32 %s272, %s273
      %p275 = scmp.eq.s32.totalorder %s274, 0
      %s277 = sadd.s32 %s276, 1
      %s278 = scalar_select %p275, %s276, %s277
      %p281 = pneg %p275
      %p282 = scmp.eq.s32.totalorder %s26, 3
      %p283 = por %p281, %p282
      %p284 = scmp.ne.s32.totalorder %s276, %s279
      %p285 = scmp.eq.s32.totalorder %s26, 0
      %p286 = por %p284, %p285
      %p287 = scmp.ne.s32.totalorder %s276, %s279
      %p288 = scmp.eq.s32.totalorder %s31, 3
      %p289 = por %p287, %p288
      %p290 = scmp.ne.s32.totalorder %s279, %s280
      %p291 = scmp.eq.s32.totalorder %s31, 0
      %p292 = por %p290, %p291
      %p293 = scmp.ne.s32.totalorder %s279, %s280
      %p294 = scmp.eq.s32.totalorder %s32, 3
      %p295 = por %p293, %p294
      %p297 = scmp.ne.s32.totalorder %s280, %s296
      %p298 = scmp.eq.s32.totalorder %s32, 0
      %p299 = por %p297, %p298
      %p300 = scmp.le.s32.totalorder 1, %s26
      %p301 = scmp.lt.s32.totalorder %s26, 5
      %p302 = pnand %p300, %p301
      %p303 = pneg %p302
      // Predicated region
      $region9: #{tpu_custom_call.1} parent=5 // pred_check
        _
      $region10: #{tpu_custom_call.1} parent=5 // pred_check_branch
        %305 = sbr.rel (%p302) target = $region12
      $region11: #{tpu_custom_call.1} parent=5 // pred_region
        %s306 = ssub.s32 %s26, 1
        // Predicated region
        $region13: #{tpu_custom_call.1} parent=11 // pred_check
          %p307 = pneg %p159
        $region14: #{tpu_custom_call.1} parent=11 // pred_check_branch
          %309 = sbr.rel (%p307) target = $region16
        $region15: #{tpu_custom_call.1} parent=11 // pred_region
          %s311 = ssub.s32 1024, 1024
          %312 = vsyncadd [#allocation10], %s311
          %s313 = sshll.u32 [#allocation9], 4
          %s314 = int_to_ptr.vmem [resolvable:$true] %s313
          %319 = dma.hbm_to_vmem [thread:$0]  %s3, 1024, %s314, [#allocation10], 64, 64, 4
        $region16: #{tpu_custom_call.1} parent=11 // pred_fallthru
          _
        // Predicated region
        $region17: #{tpu_custom_call.1} parent=11 // pred_check
          %p320 = pneg %p180
        $region18: #{tpu_custom_call.1} parent=11 // pred_check_branch
          %322 = sbr.rel (%p320) target = $region20
        $region19: #{tpu_custom_call.1} parent=11 // pred_region
          _
        $region20: #{tpu_custom_call.1} parent=11 // pred_fallthru
          _
        // Predicated region
        $region21: #{tpu_custom_call.1} parent=11 // pred_check
          %p323 = pneg %p201
        $region22: #{tpu_custom_call.1} parent=11 // pred_check_branch
          %325 = sbr.rel (%p323) target = $region24
        $region23: #{tpu_custom_call.1} parent=11 // pred_region
          %s327 = ssub.s32 9216, 9216
          %328 = vsyncadd [#allocation10], %s327
          %s329 = sshll.u32 [#allocation11], 4
          %s330 = int_to_ptr.vmem [resolvable:$true] %s329
          %335 = dma.hbm_to_vmem [thread:$0]  %s5, 9216, %s330, [#allocation10], 64, 64, 4
        $region24: #{tpu_custom_call.1} parent=11 // pred_fallthru
          _
        // Predicated region
        $region25: #{tpu_custom_call.1} parent=11 // pred_check
          %p336 = pneg %p222
        $region26: #{tpu_custom_call.1} parent=11 // pred_check_branch
          %338 = sbr.rel (%p336) target = $region28
        $region27: #{tpu_custom_call.1} parent=11 // pred_region
          _
        $region28: #{tpu_custom_call.1} parent=11 // pred_fallthru
          _
        // Predicated region
        $region29: #{tpu_custom_call.1} parent=11 // pred_check
          %p339 = pneg %p243
        $region30: #{tpu_custom_call.1} parent=11 // pred_check_branch
          %341 = sbr.rel (%p339) target = $region32
        $region31: #{tpu_custom_call.1} parent=11 // pred_region
          %s343 = ssub.s32 1024, 1024
          %344 = vsyncadd [#allocation13], %s343
          %s345 = sshll.u32 [#allocation12], 4
          %s346 = int_to_ptr.vmem [resolvable:$true] %s345
          %351 = dma.hbm_to_vmem [thread:$0]  %s7, 1024, %s346, [#allocation13], 64, 64, 4
        $region32: #{tpu_custom_call.1} parent=11 // pred_fallthru
          _
        // Predicated region
        $region33: #{tpu_custom_call.1} parent=11 // pred_check
          %p352 = pneg %p264
        $region34: #{tpu_custom_call.1} parent=11 // pred_check_branch
          %354 = sbr.rel (%p352) target = $region36
        $region35: #{tpu_custom_call.1} parent=11 // pred_region
          _
        $region36: #{tpu_custom_call.1} parent=11 // pred_fallthru
          _
      $region12: #{tpu_custom_call.1} parent=5 // pred_fallthru
        _
      %p355 = scmp.lt.s32.totalorder %s26, 4
      // Predicated region
      $region37: #{tpu_custom_call.1} parent=5 // pred_check
        %p356 = pneg %p355
      $region38: #{tpu_custom_call.1} parent=5 // pred_check_branch
        %358 = sbr.rel (%p356) target = $region40
      $region39: #{tpu_custom_call.1} parent=5 // pred_region
        // Predicated region
        $region41: #{tpu_custom_call.1} parent=39 // pred_check
          %p359 = pneg %p68
        $region42: #{tpu_custom_call.1} parent=39 // pred_check_branch
          %361 = sbr.rel (%p359) target = $region44
        $region43: #{tpu_custom_call.1} parent=39 // pred_region
          %s362 = sand.u32 %s58, 1
          %s363 = scalar_lea.sflag [#allocation4], %s362
          %s364 = sand.u32 %s58, 1
          %s365 = smul.addr %s364, 8
          %s366 = scalar_lea.vmem [#allocation3], %s365
          %s367 = smul.u32 %s34, 8
          %s368 = ssub.s32 %s367, 1
          %p369 = scmp.gt.s32.totalorder %s368, 0
          %s370 = scalar_select %p369, %s368, 0
          %s371 = smul.u32 2, %s370
          %s373 = ssub.s32 128, 128
          %374 = vsyncadd %s363, %s373
          %s375 = smul.addr %s33, 32
          %s376 = sadd.s32 %s371, %s375
          %s377 = smul.addr %s376, 64
          %s378 = scalar_lea.hbm %s0, %s377
          %s379 = sshll.u32 %s366, 4
          %s380 = int_to_ptr.vmem [resolvable:$true] %s379
          %385 = dma.hbm_to_vmem [thread:$0]  %s378, 128, %s380, %s363, 64, 64, 4
        $region44: #{tpu_custom_call.1} parent=39 // pred_fallthru
          _
        // Predicated region
        $region45: #{tpu_custom_call.1} parent=39 // pred_check
          %p386 = pneg %p96
        $region46: #{tpu_custom_call.1} parent=39 // pred_check_branch
          %388 = sbr.rel (%p386) target = $region48
        $region47: #{tpu_custom_call.1} parent=39 // pred_region
          %s389 = sand.u32 %s26, 1
          %s390 = scalar_lea.sflag [#allocation7], %s389
          %s391 = sand.u32 %s86, 1
          %s392 = smul.addr %s391, 64
          %s393 = scalar_lea.vmem [#allocation6], %s392
          %s394 = smul.u32 16, %s34
          %s396 = ssub.s32 1024, 1024
          %397 = vsyncadd %s390, %s396
          %s398 = smul.addr %s33, 32
          %s399 = sadd.s32 %s394, %s398
          %s400 = smul.addr %s399, 64
          %s401 = scalar_lea.hbm %s1, %s400
          %s402 = sshll.u32 %s393, 4
          %s403 = int_to_ptr.vmem [resolvable:$true] %s402
          %408 = dma.hbm_to_vmem [thread:$0]  %s401, 1024, %s403, %s390, 64, 64, 4
        $region48: #{tpu_custom_call.1} parent=39 // pred_fallthru
          _
        // Predicated region
        $region49: #{tpu_custom_call.1} parent=39 // pred_check
          %p409 = pneg %p132
        $region50: #{tpu_custom_call.1} parent=39 // pred_check_branch
          %411 = sbr.rel (%p409) target = $region52
        $region51: #{tpu_custom_call.1} parent=39 // pred_region
          %s412 = sand.u32 %s26, 1
          %s413 = scalar_lea.sflag [#allocation7], %s412
          %s414 = sand.u32 %s122, 1
          %s415 = smul.addr %s414, 8
          %s416 = scalar_lea.vmem [#allocation8], %s415
          %s417 = sadd.s32 %s34, 1
          %s418 = smul.u32 %s417, 8
          %p419 = scmp.lt.s32.totalorder %s418, 15
          %s420 = scalar_select %p419, %s418, 15
          %s421 = smul.u32 2, %s420
          %s423 = ssub.s32 128, 128
          %424 = vsyncadd %s413, %s423
          %s425 = smul.addr %s33, 32
          %s426 = sadd.s32 %s421, %s425
          %s427 = smul.addr %s426, 64
          %s428 = scalar_lea.hbm %s2, %s427
          %s429 = sshll.u32 %s416, 4
          %s430 = int_to_ptr.vmem [resolvable:$true] %s429
          %435 = dma.hbm_to_vmem [thread:$0]  %s428, 128, %s430, %s413, 64, 64, 4
        $region52: #{tpu_custom_call.1} parent=39 // pred_fallthru
          _
      $region40: #{tpu_custom_call.1} parent=5 // pred_fallthru
        _
      %p436 = scmp.le.s32.totalorder 1, %s26
      %p437 = scmp.lt.s32.totalorder %s26, 5
      %p438 = pnand %p436, %p437
      %p439 = pneg %p438
      // Predicated region
      $region53: #{tpu_custom_call.1} parent=5 // pred_check
        _
      $region54: #{tpu_custom_call.1} parent=5 // pred_check_branch
        %441 = sbr.rel (%p438) target = $region56
      $region55: #{tpu_custom_call.1} parent=5 // pred_region
        %s442 = ssub.s32 %s26, 1
        %s443 = sand.u32 %s61, 1
        %s444 = scalar_lea.sflag [#allocation4], %s443
        %s445 = sand.u32 %s61, 1
        %s446 = smul.addr %s445, 8
        %s447 = scalar_lea.vmem [#allocation3], %s446
        // Predicated region
        $region57: #{tpu_custom_call.1} parent=55 // pred_check
          %p448 = pneg %p74
        $region58: #{tpu_custom_call.1} parent=55 // pred_check_branch
          %450 = sbr.rel (%p448) target = $region60
        $region59: #{tpu_custom_call.1} parent=55 // pred_region
          %451 = dma.done %s444, 128
        $region60: #{tpu_custom_call.1} parent=55 // pred_fallthru
          _
        %s452 = sand.u32 %s31, 1
        %s453 = scalar_lea.sflag [#allocation7], %s452
        %s454 = sand.u32 %s89, 1
        %s455 = smul.addr %s454, 64
        %s456 = scalar_lea.vmem [#allocation6], %s455
        // Predicated region
        $region61: #{tpu_custom_call.1} parent=55 // pred_check
          %p457 = pneg %p102
        $region62: #{tpu_custom_call.1} parent=55 // pred_check_branch
          %459 = sbr.rel (%p457) target = $region64
        $region63: #{tpu_custom_call.1} parent=55 // pred_region
          %460 = dma.done %s453, 1024
        $region64: #{tpu_custom_call.1} parent=55 // pred_fallthru
          _
        %s461 = sand.u32 %s31, 1
        %s462 = scalar_lea.sflag [#allocation7], %s461
        %s463 = sand.u32 %s125, 1
        %s464 = smul.addr %s463, 8
        %s465 = scalar_lea.vmem [#allocation8], %s464
        // Predicated region
        $region65: #{tpu_custom_call.1} parent=55 // pred_check
          %p466 = pneg %p138
        $region66: #{tpu_custom_call.1} parent=55 // pred_check_branch
          %468 = sbr.rel (%p466) target = $region68
        $region67: #{tpu_custom_call.1} parent=55 // pred_region
          %469 = dma.done %s462, 128
        $region68: #{tpu_custom_call.1} parent=55 // pred_fallthru
          _
        // Predicated region
        $region69: #{tpu_custom_call.1} parent=55 // pred_check
          %p470 = pneg %p159
        $region70: #{tpu_custom_call.1} parent=55 // pred_check_branch
          %472 = sbr.rel (%p470) target = $region72
        $region71: #{tpu_custom_call.1} parent=55 // pred_region
          %473 = dma.done [#allocation10], 1024
        $region72: #{tpu_custom_call.1} parent=55 // pred_fallthru
          _
        // Predicated region
        $region73: #{tpu_custom_call.1} parent=55 // pred_check
          %p474 = pneg %p201
        $region74: #{tpu_custom_call.1} parent=55 // pred_check_branch
          %476 = sbr.rel (%p474) target = $region76
        $region75: #{tpu_custom_call.1} parent=55 // pred_region
          %477 = dma.done [#allocation10], 9216
        $region76: #{tpu_custom_call.1} parent=55 // pred_fallthru
          _
        // Predicated region
        $region77: #{tpu_custom_call.1} parent=55 // pred_check
          %p478 = pneg %p243
        $region78: #{tpu_custom_call.1} parent=55 // pred_check_branch
          %480 = sbr.rel (%p478) target = $region80
        $region79: #{tpu_custom_call.1} parent=55 // pred_region
          %481 = dma.done [#allocation13], 1024
        $region80: #{tpu_custom_call.1} parent=55 // pred_fallthru
          _
        %s482 = sand.u32 %s61, 1
        %s483 = scalar_lea.sflag [#allocation4], %s482
        %s484 = sand.u32 %s61, 1
        %s485 = smul.addr %s484, 8
        %s486 = scalar_lea.vmem [#allocation3], %s485
        %p487 = pneg %p74
        %p488 = pneg %p71
        %s489 = sand.u32 %s31, 1
        %s490 = scalar_lea.sflag [#allocation7], %s489
        %s491 = sand.u32 %s89, 1
        %s492 = smul.addr %s491, 64
        %s493 = scalar_lea.vmem [#allocation6], %s492
        %p494 = pneg %p102
        %p495 = pneg %p99
        %s496 = sand.u32 %s31, 1
        %s497 = scalar_lea.sflag [#allocation7], %s496
        %s498 = sand.u32 %s125, 1
        %s499 = smul.addr %s498, 8
        %s500 = scalar_lea.vmem [#allocation8], %s499
        %p501 = pneg %p138
        %p502 = pneg %p135
        %p503 = pneg %p159
        %p504 = pneg %p156
        %p505 = pneg %p180
        %p506 = pneg %p177
        %p507 = pneg %p201
        %p508 = pneg %p198
        %p509 = pneg %p222
        %p510 = pneg %p219
        %p511 = pneg %p243
        %p512 = pneg %p240
        %p513 = pneg %p264
        %p514 = pneg %p261
        %p515 = pneg %p292
        %p516 = pneg %p289
        %s517 = sand.u32 %s279, 1
        %s518 = scalar_lea.sflag [#allocation5], %s517
        %s519 = sand.u32 %s279, 1
        %s520 = smul.addr %s519, 64
        %s521 = scalar_lea.vmem [#allocation14], %s520
        %s522 = smul.u32 %s36, 8
        %s523 = ssub.s32 %s522, 1
        %p524 = scmp.gt.s32.totalorder %s523, 0
        %s525 = scalar_select %p524, %s523, 0
        %s526 = smul.u32 2, %s525
        %s527 = smul.u32 16, %s36
        %s528 = sadd.s32 %s36, 1
        %s529 = smul.u32 %s528, 8
        %p530 = scmp.lt.s32.totalorder %s529, 15
        %s531 = scalar_select %p530, %s529, 15
        %s532 = smul.u32 2, %s531
        %s533 = smul.u32 16, %s36
        %v535 = vld [vmem:[%s447] sm:$0xf]
        %v536 = vld [vmem:[%s447 + $0x4] sm:$0xf]
        %v537 = vld [vmem:[%s456] sm:$0xf]
        %v538 = vld [vmem:[%s456 + $0x4] sm:$0xf]
        %v539 = vld [vmem:[%s456 + $0x8] sm:$0xf]
        %v540 = vld [vmem:[%s456 + $0xc] sm:$0xf]
        %v541 = vld [vmem:[%s456 + $0x10] sm:$0xf]
        %v542 = vld [vmem:[%s456 + $0x14] sm:$0xf]
        %v543 = vld [vmem:[%s456 + $0x18] sm:$0xf]
        %v544 = vld [vmem:[%s456 + $0x1c] sm:$0xf]
        %v545 = vld [vmem:[%s456 + $0x20] sm:$0xf]
        %v546 = vld [vmem:[%s456 + $0x24] sm:$0xf]
        %v547 = vld [vmem:[%s456 + $0x28] sm:$0xf]
        %v548 = vld [vmem:[%s456 + $0x2c] sm:$0xf]
        %v549 = vld [vmem:[%s456 + $0x30] sm:$0xf]
        %v550 = vld [vmem:[%s456 + $0x34] sm:$0xf]
        %v551 = vld [vmem:[%s456 + $0x38] sm:$0xf]
        %v552 = vld [vmem:[%s456 + $0x3c] sm:$0xf]
        %v553 = vld [vmem:[%s465] sm:$0xf]
        %v554 = vld [vmem:[%s465 + $0x4] sm:$0xf]
        %v557 = vunpack.c.l.b16 %v535
        %v558 = vunpack.c.l.b16 %v536
        %v559 = vpack.c.b16 %v558, %v557
        %v577 = vunpack.c.l.b16 %v537
        %v578 = vunpack.c.l.b16 %v538
        %v579 = vunpack.c.l.b16 %v539
        %v580 = vunpack.c.l.b16 %v540
        %v581 = vunpack.c.l.b16 %v541
        %v582 = vunpack.c.l.b16 %v542
        %v583 = vunpack.c.l.b16 %v543
        %v584 = vunpack.c.l.b16 %v544
        %v585 = vunpack.c.l.b16 %v545
        %v586 = vunpack.c.l.b16 %v546
        %v587 = vunpack.c.l.b16 %v547
        %v588 = vunpack.c.l.b16 %v548
        %v589 = vunpack.c.l.b16 %v549
        %v590 = vunpack.c.l.b16 %v550
        %v591 = vunpack.c.l.b16 %v551
        %v592 = vunpack.c.l.b16 %v552
        %v593 = vpack.c.b16 %v578, %v577
        %v594 = vpack.c.b16 %v580, %v579
        %v595 = vpack.c.b16 %v582, %v581
        %v596 = vpack.c.b16 %v584, %v583
        %v597 = vpack.c.b16 %v586, %v585
        %v598 = vpack.c.b16 %v588, %v587
        %v599 = vpack.c.b16 %v590, %v589
        %v600 = vpack.c.b16 %v592, %v591
        %v611 = vunpack.c.l.b16 %v553
        %v612 = vunpack.c.l.b16 %v554
        %v613 = vpack.c.b16 %v612, %v611
        %v615 = vld [vmem:[#allocation9] sm:$0xf]
        %v616 = vld [vmem:[#allocation9 + $0x4] sm:$0xf]
        %v617 = vld [vmem:[#allocation9 + $0x8] sm:$0xf]
        %v618 = vld [vmem:[#allocation9 + $0xc] sm:$0xf]
        %v619 = vld [vmem:[#allocation9 + $0x10] sm:$0xf]
        %v620 = vld [vmem:[#allocation9 + $0x14] sm:$0xf]
        %v621 = vld [vmem:[#allocation9 + $0x18] sm:$0xf]
        %v622 = vld [vmem:[#allocation9 + $0x1c] sm:$0xf]
        %v623 = vld [vmem:[#allocation9 + $0x20] sm:$0xf]
        %v624 = vld [vmem:[#allocation9 + $0x24] sm:$0xf]
        %v625 = vld [vmem:[#allocation9 + $0x28] sm:$0xf]
        %v626 = vld [vmem:[#allocation9 + $0x2c] sm:$0xf]
        %v627 = vld [vmem:[#allocation9 + $0x30] sm:$0xf]
        %v628 = vld [vmem:[#allocation9 + $0x34] sm:$0xf]
        %v629 = vld [vmem:[#allocation9 + $0x38] sm:$0xf]
        %v630 = vld [vmem:[#allocation9 + $0x3c] sm:$0xf]
        %v631 = vld [vmem:[%s4] sm:$0x1]
        %v633 = vlaneseq
        %v634 = vshrl.u32 %v633, 7
        %v635 = vsub.s32 0, %v634
        %v636 = vrot.slane %v631, %v635
        %v654 = vunpack.c.l.b16 %v615
        %v655 = vunpack.c.l.b16 %v616
        %v656 = vunpack.c.l.b16 %v617
        %v657 = vunpack.c.l.b16 %v618
        %v658 = vunpack.c.l.b16 %v619
        %v659 = vunpack.c.l.b16 %v620
        %v660 = vunpack.c.l.b16 %v621
        %v661 = vunpack.c.l.b16 %v622
        %v662 = vunpack.c.l.b16 %v623
        %v663 = vunpack.c.l.b16 %v624
        %v664 = vunpack.c.l.b16 %v625
        %v665 = vunpack.c.l.b16 %v626
        %v666 = vunpack.c.l.b16 %v627
        %v667 = vunpack.c.l.b16 %v628
        %v668 = vunpack.c.l.b16 %v629
        %v669 = vunpack.c.l.b16 %v630
        %v670 = vpack.c.b16 %v655, %v654
        %v671 = vpack.c.b16 %v657, %v656
        %v672 = vpack.c.b16 %v659, %v658
        %v673 = vpack.c.b16 %v661, %v660
        %v674 = vpack.c.b16 %v663, %v662
        %v675 = vpack.c.b16 %v665, %v664
        %v676 = vpack.c.b16 %v667, %v666
        %v677 = vpack.c.b16 %v669, %v668
        %686 = vmatprep.subr.bf16.mxu0 0
        %687 = vmatpush1.bf16.msra.mxu0 %v670
        %688 = vmatprep.subr.bf16.mxu0 0
        %689 = vmatpush1.bf16.msra.mxu0 %v671
        %690 = vmatprep.subr.bf16.mxu0 0
        %691 = vmatpush1.bf16.msra.mxu0 %v672
        %692 = vmatprep.subr.bf16.mxu0 0
        %693 = vmatpush1.bf16.msra.mxu0 %v673
        %694 = vmatprep.subr.bf16.mxu0 0
        %695 = vmatpush1.bf16.msra.mxu0 %v674
        %696 = vmatprep.subr.bf16.mxu0 0
        %697 = vmatpush1.bf16.msra.mxu0 %v675
        %698 = vmatprep.subr.bf16.mxu0 0
        %699 = vmatpush1.bf16.msra.mxu0 %v676
        %700 = vmatprep.subr.bf16.mxu0 0
        %701 = vmatpush1.bf16.msra.mxu0 %v677
        %702 = vmatprep.subr.bf16.mxu0 0
        %703 = vmatpush1.bf16.msra.mxu0 0
        %704 = vmatprep.subr.bf16.mxu0 0
        %705 = vmatpush1.bf16.msra.mxu0 0
        %706 = vmatprep.subr.bf16.mxu0 0
        %707 = vmatpush1.bf16.msra.mxu0 0
        %708 = vmatprep.subr.bf16.mxu0 0
        %709 = vmatpush1.bf16.msra.mxu0 0
        %710 = vmatprep.subr.bf16.mxu0 0
        %711 = vmatpush1.bf16.msra.mxu0 0
        %712 = vmatprep.subr.bf16.mxu0 0
        %713 = vmatpush1.bf16.msra.mxu0 0
        %714 = vmatprep.subr.bf16.mxu0 0
        %715 = vmatpush1.bf16.msra.mxu0 0
        %716 = vmatprep.subr.bf16.mxu0 0
        %717 = vmatpush1.bf16.msra.mxu0 0
        %718 = vmatprep.mubr.bf16.mxu0 0
        %719 = vmatmul.mubr.bf16.gmra.mrb[0].mxu0 %v559
        %v720 = vpop.f32.mrb[0].mxu0
        %v721 = vadd.f32 %v636, %v720
        %v722 = vpop.f32.mrb[0].mxu0
        %v723 = vpop.f32.mrb[0].mxu0
        %v724 = vadd.f32 %v636, %v723
        %v725 = vpop.f32.mrb[0].mxu0
        %726 = vmatprep.mubr.bf16.mxu0 0
        %727 = vmatmul.mubr.bf16.gmra.mrb[0].mxu0 %v593
        %v728 = vpop.f32.mrb[0].mxu0
        %v729 = vadd.f32 %v636, %v728
        %v730 = vpop.f32.mrb[0].mxu0
        %v731 = vpop.f32.mrb[0].mxu0
        %v732 = vadd.f32 %v636, %v731
        %v733 = vpop.f32.mrb[0].mxu0
        %734 = vmatprep.mubr.bf16.mxu0 0
        %735 = vmatmul.mubr.bf16.gmra.mrb[0].mxu0 %v594
        %v736 = vpop.f32.mrb[0].mxu0
        %v737 = vadd.f32 %v636, %v736
        %v738 = vpop.f32.mrb[0].mxu0
        %v739 = vpop.f32.mrb[0].mxu0
        %v740 = vadd.f32 %v636, %v739
        %v741 = vpop.f32.mrb[0].mxu0
        %742 = vmatprep.mubr.bf16.mxu0 0
        %743 = vmatmul.mubr.bf16.gmra.mrb[0].mxu0 %v595
        %v744 = vpop.f32.mrb[0].mxu0
        %v745 = vadd.f32 %v636, %v744
        %v746 = vpop.f32.mrb[0].mxu0
        %v747 = vpop.f32.mrb[0].mxu0
        %v748 = vadd.f32 %v636, %v747
        %v749 = vpop.f32.mrb[0].mxu0
        %750 = vmatprep.mubr.bf16.mxu0 0
        %751 = vmatmul.mubr.bf16.gmra.mrb[0].mxu0 %v596
        %v752 = vpop.f32.mrb[0].mxu0
        %v753 = vadd.f32 %v636, %v752
        %v754 = vpop.f32.mrb[0].mxu0
        %v755 = vpop.f32.mrb[0].mxu0
        %v756 = vadd.f32 %v636, %v755
        %v757 = vpop.f32.mrb[0].mxu0
        %758 = vmatprep.mubr.bf16.mxu0 0
        %759 = vmatmul.mubr.bf16.gmra.mrb[0].mxu0 %v597
        %v760 = vpop.f32.mrb[0].mxu0
        %v761 = vadd.f32 %v636, %v760
        %v762 = vpop.f32.mrb[0].mxu0
        %v763 = vpop.f32.mrb[0].mxu0
        %v764 = vadd.f32 %v636, %v763
        %v765 = vpop.f32.mrb[0].mxu0
        %766 = vmatprep.mubr.bf16.mxu0 0
        %767 = vmatmul.mubr.bf16.gmra.mrb[0].mxu0 %v598
        %v768 = vpop.f32.mrb[0].mxu0
        %v769 = vadd.f32 %v636, %v768
        %v770 = vpop.f32.mrb[0].mxu0
        %v771 = vpop.f32.mrb[0].mxu0
        %v772 = vadd.f32 %v636, %v771
        %v773 = vpop.f32.mrb[0].mxu0
        %774 = vmatprep.mubr.bf16.mxu0 0
        %775 = vmatmul.mubr.bf16.gmra.mrb[0].mxu0 %v599
        %v776 = vpop.f32.mrb[0].mxu0
        %v777 = vadd.f32 %v636, %v776
        %v778 = vpop.f32.mrb[0].mxu0
        %v779 = vpop.f32.mrb[0].mxu0
        %v780 = vadd.f32 %v636, %v779
        %v781 = vpop.f32.mrb[0].mxu0
        %782 = vmatprep.mubr.bf16.mxu0 0
        %783 = vmatmul.mubr.bf16.gmra.mrb[0].mxu0 %v600
        %v784 = vpop.f32.mrb[0].mxu0
        %v785 = vadd.f32 %v636, %v784
        %v786 = vpop.f32.mrb[0].mxu0
        %v787 = vpop.f32.mrb[0].mxu0
        %v788 = vadd.f32 %v636, %v787
        %v789 = vpop.f32.mrb[0].mxu0
        %790 = vmatprep.mubr.bf16.mxu0 0
        %791 = vmatmul.mubr.bf16.gmra.mrb[0].mxu0 %v613
        %v792 = vpop.f32.mrb[0].mxu0
        %v793 = vadd.f32 %v636, %v792
        %v794 = vpop.f32.mrb[0].mxu0
        %v795 = vpop.f32.mrb[0].mxu0
        %v796 = vadd.f32 %v636, %v795
        %v797 = vpop.f32.mrb[0].mxu0
        %798 = vdwg.mxu0
        %v799 = vmax.f32 %v721, 0.0
        %v800 = vmax.f32 %v724, 0.0
        %v801 = vmax.f32 %v729, 0.0
        %v802 = vmax.f32 %v732, 0.0
        %v803 = vmax.f32 %v737, 0.0
        %v804 = vmax.f32 %v740, 0.0
        %v805 = vmax.f32 %v745, 0.0
        %v806 = vmax.f32 %v748, 0.0
        %v807 = vmax.f32 %v753, 0.0
        %v808 = vmax.f32 %v756, 0.0
        %v809 = vmax.f32 %v761, 0.0
        %v810 = vmax.f32 %v764, 0.0
        %v811 = vmax.f32 %v769, 0.0
        %v812 = vmax.f32 %v772, 0.0
        %v813 = vmax.f32 %v777, 0.0
        %v814 = vmax.f32 %v780, 0.0
        %v815 = vmax.f32 %v785, 0.0
        %v816 = vmax.f32 %v788, 0.0
        %v817 = vmax.f32 %v793, 0.0
        %v818 = vmax.f32 %v796, 0.0
        %v819 = vlaneseq
        %v820 = vshrl.u32 %v819, 7
        %v821 = vadd.s32 %v820, 8
        %v822 = vadd.s32 %v820, 16
        %v823 = vadd.s32 %v820, 24
        %v824 = vadd.s32 %v820, 32
        %v825 = vadd.s32 %v820, 40
        %v826 = vadd.s32 %v820, 48
        %v827 = vadd.s32 %v820, 56
        %v828 = vadd.s32 %v820, 64
        %v829 = vadd.s32 %v820, 72
        %v830 = vadd.s32 %v820, 80
        %v831 = vadd.s32 %v820, 88
        %v832 = vadd.s32 %v820, 96
        %v833 = vadd.s32 %v820, 104
        %v834 = vadd.s32 %v820, 112
        %v835 = vadd.s32 %v820, 120
        %v836 = vadd.s32 %v820, 128
        %v837 = vadd.s32 %v820, 136
        %v838 = vadd.s32 %v820, 144
        %v839 = vadd.s32 %v820, 152
        %vm840 = vcmp.lt.s32.totalorder %v820, 0
        %v841 = vsub.s32 0, %v820
        %v842 = vsel %vm840, %v841, %v820
        %v843 = vshrl.u32 %v842, 4
        %v844 = vand.u32 %v842, 15
        %v845 = vsub.s32 0, %v844
        %v846 = vsel %vm840, %v845, %v844
        %vm847 = vcmp.lt.s32.totalorder %v821, 0
        %v848 = vsub.s32 0, %v821
        %v849 = vsel %vm847, %v848, %v821
        %v850 = vshrl.u32 %v849, 4
        %v851 = vand.u32 %v849, 15
        %v852 = vsub.s32 0, %v851
        %v853 = vsel %vm847, %v852, %v851
        %vm854 = vcmp.lt.s32.totalorder %v822, 0
        %v855 = vsub.s32 0, %v822
        %v856 = vsel %vm854, %v855, %v822
        %v857 = vshrl.u32 %v856, 4
        %v858 = vand.u32 %v856, 15
        %v859 = vsub.s32 0, %v858
        %v860 = vsel %vm854, %v859, %v858
        %vm861 = vcmp.lt.s32.totalorder %v823, 0
        %v862 = vsub.s32 0, %v823
        %v863 = vsel %vm861, %v862, %v823
        %v864 = vshrl.u32 %v863, 4
        %v865 = vand.u32 %v863, 15
        %v866 = vsub.s32 0, %v865
        %v867 = vsel %vm861, %v866, %v865
        %vm868 = vcmp.lt.s32.totalorder %v824, 0
        %v869 = vsub.s32 0, %v824
        %v870 = vsel %vm868, %v869, %v824
        %v871 = vshrl.u32 %v870, 4
        %v872 = vand.u32 %v870, 15
        %v873 = vsub.s32 0, %v872
        %v874 = vsel %vm868, %v873, %v872
        %vm875 = vcmp.lt.s32.totalorder %v825, 0
        %v876 = vsub.s32 0, %v825
        %v877 = vsel %vm875, %v876, %v825
        %v878 = vshrl.u32 %v877, 4
        %v879 = vand.u32 %v877, 15
        %v880 = vsub.s32 0, %v879
        %v881 = vsel %vm875, %v880, %v879
        %vm882 = vcmp.lt.s32.totalorder %v826, 0
        %v883 = vsub.s32 0, %v826
        %v884 = vsel %vm882, %v883, %v826
        %v885 = vshrl.u32 %v884, 4
        %v886 = vand.u32 %v884, 15
        %v887 = vsub.s32 0, %v886
        %v888 = vsel %vm882, %v887, %v886
        %vm889 = vcmp.lt.s32.totalorder %v827, 0
        %v890 = vsub.s32 0, %v827
        %v891 = vsel %vm889, %v890, %v827
        %v892 = vshrl.u32 %v891, 4
        %v893 = vand.u32 %v891, 15
        %v894 = vsub.s32 0, %v893
        %v895 = vsel %vm889, %v894, %v893
        %vm896 = vcmp.lt.s32.totalorder %v828, 0
        %v897 = vsub.s32 0, %v828
        %v898 = vsel %vm896, %v897, %v828
        %v899 = vshrl.u32 %v898, 4
        %v900 = vand.u32 %v898, 15
        %v901 = vsub.s32 0, %v900
        %v902 = vsel %vm896, %v901, %v900
        %vm903 = vcmp.lt.s32.totalorder %v829, 0
        %v904 = vsub.s32 0, %v829
        %v905 = vsel %vm903, %v904, %v829
        %v906 = vshrl.u32 %v905, 4
        %v907 = vand.u32 %v905, 15
        %v908 = vsub.s32 0, %v907
        %v909 = vsel %vm903, %v908, %v907
        %vm910 = vcmp.lt.s32.totalorder %v830, 0
        %v911 = vsub.s32 0, %v830
        %v912 = vsel %vm910, %v911, %v830
        %v913 = vshrl.u32 %v912, 4
        %v914 = vand.u32 %v912, 15
        %v915 = vsub.s32 0, %v914
        %v916 = vsel %vm910, %v915, %v914
        %vm917 = vcmp.lt.s32.totalorder %v831, 0
        %v918 = vsub.s32 0, %v831
        %v919 = vsel %vm917, %v918, %v831
        %v920 = vshrl.u32 %v919, 4
        %v921 = vand.u32 %v919, 15
        %v922 = vsub.s32 0, %v921
        %v923 = vsel %vm917, %v922, %v921
        %vm924 = vcmp.lt.s32.totalorder %v832, 0
        %v925 = vsub.s32 0, %v832
        %v926 = vsel %vm924, %v925, %v832
        %v927 = vshrl.u32 %v926, 4
        %v928 = vand.u32 %v926, 15
        %v929 = vsub.s32 0, %v928
        %v930 = vsel %vm924, %v929, %v928
        %vm931 = vcmp.lt.s32.totalorder %v833, 0
        %v932 = vsub.s32 0, %v833
        %v933 = vsel %vm931, %v932, %v833
        %v934 = vshrl.u32 %v933, 4
        %v935 = vand.u32 %v933, 15
        %v936 = vsub.s32 0, %v935
        %v937 = vsel %vm931, %v936, %v935
        %vm938 = vcmp.lt.s32.totalorder %v834, 0
        %v939 = vsub.s32 0, %v834
        %v940 = vsel %vm938, %v939, %v834
        %v941 = vshrl.u32 %v940, 4
        %v942 = vand.u32 %v940, 15
        %v943 = vsub.s32 0, %v942
        %v944 = vsel %vm938, %v943, %v942
        %vm945 = vcmp.lt.s32.totalorder %v835, 0
        %v946 = vsub.s32 0, %v835
        %v947 = vsel %vm945, %v946, %v835
        %v948 = vshrl.u32 %v947, 4
        %v949 = vand.u32 %v947, 15
        %v950 = vsub.s32 0, %v949
        %v951 = vsel %vm945, %v950, %v949
        %vm952 = vcmp.lt.s32.totalorder %v836, 0
        %v953 = vsub.s32 0, %v836
        %v954 = vsel %vm952, %v953, %v836
        %v955 = vshrl.u32 %v954, 4
        %v956 = vand.u32 %v954, 15
        %v957 = vsub.s32 0, %v956
        %v958 = vsel %vm952, %v957, %v956
        %vm959 = vcmp.lt.s32.totalorder %v837, 0
        %v960 = vsub.s32 0, %v837
        %v961 = vsel %vm959, %v960, %v837
        %v962 = vshrl.u32 %v961, 4
        %v963 = vand.u32 %v961, 15
        %v964 = vsub.s32 0, %v963
        %v965 = vsel %vm959, %v964, %v963
        %vm966 = vcmp.lt.s32.totalorder %v838, 0
        %v967 = vsub.s32 0, %v838
        %v968 = vsel %vm966, %v967, %v838
        %v969 = vshrl.u32 %v968, 4
        %v970 = vand.u32 %v968, 15
        %v971 = vsub.s32 0, %v970
        %v972 = vsel %vm966, %v971, %v970
        %vm973 = vcmp.lt.s32.totalorder %v839, 0
        %v974 = vsub.s32 0, %v839
        %v975 = vsel %vm973, %v974, %v839
        %v976 = vshrl.u32 %v975, 4
        %v977 = vand.u32 %v975, 15
        %v978 = vsub.s32 0, %v977
        %v979 = vsel %vm973, %v978, %v977
        %vm980 = vcmp.ne.s32.totalorder %v846, 0
        %vm981 = vcmp.ne.s32.totalorder %v853, 0
        %vm982 = vcmp.ne.s32.totalorder %v860, 0
        %vm983 = vcmp.ne.s32.totalorder %v867, 0
        %vm984 = vcmp.ne.s32.totalorder %v874, 0
        %vm985 = vcmp.ne.s32.totalorder %v881, 0
        %vm986 = vcmp.ne.s32.totalorder %v888, 0
        %vm987 = vcmp.ne.s32.totalorder %v895, 0
        %vm988 = vcmp.ne.s32.totalorder %v902, 0
        %vm989 = vcmp.ne.s32.totalorder %v909, 0
        %vm990 = vcmp.ne.s32.totalorder %v916, 0
        %vm991 = vcmp.ne.s32.totalorder %v923, 0
        %vm992 = vcmp.ne.s32.totalorder %v930, 0
        %vm993 = vcmp.ne.s32.totalorder %v937, 0
        %vm994 = vcmp.ne.s32.totalorder %v944, 0
        %vm995 = vcmp.ne.s32.totalorder %v951, 0
        %vm996 = vcmp.ne.s32.totalorder %v958, 0
        %vm997 = vcmp.ne.s32.totalorder %v965, 0
        %vm998 = vcmp.ne.s32.totalorder %v972, 0
        %vm999 = vcmp.ne.s32.totalorder %v979, 0
        %vm1000 = vcmp.lt.s32.totalorder %v846, 0
        %vm1001 = vcmp.lt.s32.totalorder %v853, 0
        %vm1002 = vcmp.lt.s32.totalorder %v860, 0
        %vm1003 = vcmp.lt.s32.totalorder %v867, 0
        %vm1004 = vcmp.lt.s32.totalorder %v874, 0
        %vm1005 = vcmp.lt.s32.totalorder %v881, 0
        %vm1006 = vcmp.lt.s32.totalorder %v888, 0
        %vm1007 = vcmp.lt.s32.totalorder %v895, 0
        %vm1008 = vcmp.lt.s32.totalorder %v902, 0
        %vm1009 = vcmp.lt.s32.totalorder %v909, 0
        %vm1010 = vcmp.lt.s32.totalorder %v916, 0
        %vm1011 = vcmp.lt.s32.totalorder %v923, 0
        %vm1012 = vcmp.lt.s32.totalorder %v930, 0
        %vm1013 = vcmp.lt.s32.totalorder %v937, 0
        %vm1014 = vcmp.lt.s32.totalorder %v944, 0
        %vm1015 = vcmp.lt.s32.totalorder %v951, 0
        %vm1016 = vcmp.lt.s32.totalorder %v958, 0
        %vm1017 = vcmp.lt.s32.totalorder %v965, 0
        %vm1018 = vcmp.lt.s32.totalorder %v972, 0
        %vm1019 = vcmp.lt.s32.totalorder %v979, 0
        %vm1020 = vmand %vm1000, %vm980
        %vm1021 = vmand %vm1001, %vm981
        %vm1022 = vmand %vm1002, %vm982
        %vm1023 = vmand %vm1003, %vm983
        %vm1024 = vmand %vm1004, %vm984
        %vm1025 = vmand %vm1005, %vm985
        %vm1026 = vmand %vm1006, %vm986
        %vm1027 = vmand %vm1007, %vm987
        %vm1028 = vmand %vm1008, %vm988
        %vm1029 = vmand %vm1009, %vm989
        %vm1030 = vmand %vm1010, %vm990
        %vm1031 = vmand %vm1011, %vm991
        %vm1032 = vmand %vm1012, %vm992
        %vm1033 = vmand %vm1013, %vm993
        %vm1034 = vmand %vm1014, %vm994
        %vm1035 = vmand %vm1015, %vm995
        %vm1036 = vmand %vm1016, %vm996
        %vm1037 = vmand %vm1017, %vm997
        %vm1038 = vmand %vm1018, %vm998
        %vm1039 = vmand %vm1019, %vm999
        %v1040 = vadd.s32 %v846, 16
        %v1041 = vadd.s32 %v853, 16
        %v1042 = vadd.s32 %v860, 16
        %v1043 = vadd.s32 %v867, 16
        %v1044 = vadd.s32 %v874, 16
        %v1045 = vadd.s32 %v881, 16
        %v1046 = vadd.s32 %v888, 16
        %v1047 = vadd.s32 %v895, 16
        %v1048 = vadd.s32 %v902, 16
        %v1049 = vadd.s32 %v909, 16
        %v1050 = vadd.s32 %v916, 16
        %v1051 = vadd.s32 %v923, 16
        %v1052 = vadd.s32 %v930, 16
        %v1053 = vadd.s32 %v937, 16
        %v1054 = vadd.s32 %v944, 16
        %v1055 = vadd.s32 %v951, 16
        %v1056 = vadd.s32 %v958, 16
        %v1057 = vadd.s32 %v965, 16
        %v1058 = vadd.s32 %v972, 16
        %v1059 = vadd.s32 %v979, 16
        %v1060 = vsel %vm1020, %v1040, %v846
        %v1061 = vsel %vm1021, %v1041, %v853
        %v1062 = vsel %vm1022, %v1042, %v860
        %v1063 = vsel %vm1023, %v1043, %v867
        %v1064 = vsel %vm1024, %v1044, %v874
        %v1065 = vsel %vm1025, %v1045, %v881
        %v1066 = vsel %vm1026, %v1046, %v888
        %v1067 = vsel %vm1027, %v1047, %v895
        %v1068 = vsel %vm1028, %v1048, %v902
        %v1069 = vsel %vm1029, %v1049, %v909
        %v1070 = vsel %vm1030, %v1050, %v916
        %v1071 = vsel %vm1031, %v1051, %v923
        %v1072 = vsel %vm1032, %v1052, %v930
        %v1073 = vsel %vm1033, %v1053, %v937
        %v1074 = vsel %vm1034, %v1054, %v944
        %v1075 = vsel %vm1035, %v1055, %v951
        %v1076 = vsel %vm1036, %v1056, %v958
        %v1077 = vsel %vm1037, %v1057, %v965
        %v1078 = vsel %vm1038, %v1058, %v972
        %v1079 = vsel %vm1039, %v1059, %v979
        %vm1080 = vcmp.eq.s32.totalorder %v1060, 0
        %vm1081 = vcmp.eq.s32.totalorder %v1061, 0
        %vm1082 = vcmp.eq.s32.totalorder %v1062, 0
        %vm1083 = vcmp.eq.s32.totalorder %v1063, 0
        %vm1084 = vcmp.eq.s32.totalorder %v1064, 0
        %vm1085 = vcmp.eq.s32.totalorder %v1065, 0
        %vm1086 = vcmp.eq.s32.totalorder %v1066, 0
        %vm1087 = vcmp.eq.s32.totalorder %v1067, 0
        %vm1088 = vcmp.eq.s32.totalorder %v1068, 0
        %vm1089 = vcmp.eq.s32.totalorder %v1069, 0
        %vm1090 = vcmp.eq.s32.totalorder %v1070, 0
        %vm1091 = vcmp.eq.s32.totalorder %v1071, 0
        %vm1092 = vcmp.eq.s32.totalorder %v1072, 0
        %vm1093 = vcmp.eq.s32.totalorder %v1073, 0
        %vm1094 = vcmp.eq.s32.totalorder %v1074, 0
        %vm1095 = vcmp.eq.s32.totalorder %v1075, 0
        %vm1096 = vcmp.eq.s32.totalorder %v1076, 0
        %vm1097 = vcmp.eq.s32.totalorder %v1077, 0
        %vm1098 = vcmp.eq.s32.totalorder %v1078, 0
        %vm1099 = vcmp.eq.s32.totalorder %v1079, 0
        %vm1120 = vcmask 1040384
        %v1121 = vrot.slane %v799, 7
        %v1122 = vrot.slane %v800, 7
        %v1123 = vsel %vm1120, %v1121, %v1122
        %v1124 = vrot.slane %v801, 7
        %v1125 = vsel %vm1120, %v1122, %v1124
        %v1126 = vrot.slane %v802, 7
        %v1127 = vsel %vm1120, %v1124, %v1126
        %v1128 = vrot.slane %v803, 7
        %v1129 = vsel %vm1120, %v1126, %v1128
        %v1130 = vrot.slane %v804, 7
        %v1131 = vsel %vm1120, %v1128, %v1130
        %v1132 = vrot.slane %v805, 7
        %v1133 = vsel %vm1120, %v1130, %v1132
        %v1134 = vrot.slane %v806, 7
        %v1135 = vsel %vm1120, %v1132, %v1134
        %v1136 = vrot.slane %v807, 7
        %v1137 = vsel %vm1120, %v1134, %v1136
        %v1138 = vrot.slane %v808, 7
        %v1139 = vsel %vm1120, %v1136, %v1138
        %v1140 = vrot.slane %v809, 7
        %v1141 = vsel %vm1120, %v1138, %v1140
        %v1142 = vrot.slane %v810, 7
        %v1143 = vsel %vm1120, %v1140, %v1142
        %v1144 = vrot.slane %v811, 7
        %v1145 = vsel %vm1120, %v1142, %v1144
        %v1146 = vrot.slane %v812, 7
        %v1147 = vsel %vm1120, %v1144, %v1146
        %v1148 = vrot.slane %v813, 7
        %v1149 = vsel %vm1120, %v1146, %v1148
        %v1150 = vrot.slane %v814, 7
        %v1151 = vsel %vm1120, %v1148, %v1150
        %v1152 = vrot.slane %v815, 7
        %v1153 = vsel %vm1120, %v1150, %v1152
        %v1154 = vrot.slane %v816, 7
        %v1155 = vsel %vm1120, %v1152, %v1154
        %v1156 = vrot.slane %v817, 7
        %v1157 = vsel %vm1120, %v1154, %v1156
        %v1158 = vrot.slane %v818, 7
        %v1159 = vsel %vm1120, %v1156, %v1158
        %v1180 = vsel %vm1120, 0.0, %v1121
        %v1181 = vsel %vm1080, 1, 0
        %v1182 = vsel %vm1081, 1, 0
        %v1183 = vsel %vm1082, 1, 0
        %v1184 = vsel %vm1083, 1, 0
        %v1185 = vsel %vm1084, 1, 0
        %v1186 = vsel %vm1085, 1, 0
        %v1187 = vsel %vm1086, 1, 0
        %v1188 = vsel %vm1087, 1, 0
        %v1189 = vsel %vm1088, 1, 0
        %v1190 = vsel %vm1089, 1, 0
        %v1191 = vsel %vm1090, 1, 0
        %v1192 = vsel %vm1091, 1, 0
        %v1193 = vsel %vm1092, 1, 0
        %v1194 = vsel %vm1093, 1, 0
        %v1195 = vsel %vm1094, 1, 0
        %v1196 = vsel %vm1095, 1, 0
        %v1197 = vsel %vm1096, 1, 0
        %v1198 = vsel %vm1097, 1, 0
        %v1199 = vsel %vm1098, 1, 0
        %v1200 = vsel %vm1099, 1, 0
        %vm1201 = vcmp.eq.s32.totalorder %v1181, 1
        %vm1202 = vcmp.eq.s32.totalorder %v1182, 1
        %vm1203 = vcmp.eq.s32.totalorder %v1183, 1
        %vm1204 = vcmp.eq.s32.totalorder %v1184, 1
        %vm1205 = vcmp.eq.s32.totalorder %v1185, 1
        %vm1206 = vcmp.eq.s32.totalorder %v1186, 1
        %vm1207 = vcmp.eq.s32.totalorder %v1187, 1
        %vm1208 = vcmp.eq.s32.totalorder %v1188, 1
        %vm1209 = vcmp.eq.s32.totalorder %v1189, 1
        %vm1210 = vcmp.eq.s32.totalorder %v1190, 1
        %vm1211 = vcmp.eq.s32.totalorder %v1191, 1
        %vm1212 = vcmp.eq.s32.totalorder %v1192, 1
        %vm1213 = vcmp.eq.s32.totalorder %v1193, 1
        %vm1214 = vcmp.eq.s32.totalorder %v1194, 1
        %vm1215 = vcmp.eq.s32.totalorder %v1195, 1
        %vm1216 = vcmp.eq.s32.totalorder %v1196, 1
        %vm1217 = vcmp.eq.s32.totalorder %v1197, 1
        %vm1218 = vcmp.eq.s32.totalorder %v1198, 1
        %vm1219 = vcmp.eq.s32.totalorder %v1199, 1
        %vm1220 = vcmp.eq.s32.totalorder %v1200, 1
        %v1221 = vsel %vm1201, 0.0, %v1180
        %v1222 = vsel %vm1202, 0.0, %v1123
        %v1223 = vsel %vm1203, 0.0, %v1125
        %v1224 = vsel %vm1204, 0.0, %v1127
        %v1225 = vsel %vm1205, 0.0, %v1129
        %v1226 = vsel %vm1206, 0.0, %v1131
        %v1227 = vsel %vm1207, 0.0, %v1133
        %v1228 = vsel %vm1208, 0.0, %v1135
        %v1229 = vsel %vm1209, 0.0, %v1137
        %v1230 = vsel %vm1210, 0.0, %v1139
        %v1231 = vsel %vm1211, 0.0, %v1141
        %v1232 = vsel %vm1212, 0.0, %v1143
        %v1233 = vsel %vm1213, 0.0, %v1145
        %v1234 = vsel %vm1214, 0.0, %v1147
        %v1235 = vsel %vm1215, 0.0, %v1149
        %v1236 = vsel %vm1216, 0.0, %v1151
        %v1237 = vsel %vm1217, 0.0, %v1153
        %v1238 = vsel %vm1218, 0.0, %v1155
        %v1239 = vsel %vm1219, 0.0, %v1157
        %v1240 = vsel %vm1220, 0.0, %v1159
        %vm1241 = vcmp.eq.s32.totalorder %v1060, 15
        %vm1242 = vcmp.eq.s32.totalorder %v1061, 15
        %vm1243 = vcmp.eq.s32.totalorder %v1062, 15
        %vm1244 = vcmp.eq.s32.totalorder %v1063, 15
        %vm1245 = vcmp.eq.s32.totalorder %v1064, 15
        %vm1246 = vcmp.eq.s32.totalorder %v1065, 15
        %vm1247 = vcmp.eq.s32.totalorder %v1066, 15
        %vm1248 = vcmp.eq.s32.totalorder %v1067, 15
        %vm1249 = vcmp.eq.s32.totalorder %v1068, 15
        %vm1250 = vcmp.eq.s32.totalorder %v1069, 15
        %vm1251 = vcmp.eq.s32.totalorder %v1070, 15
        %vm1252 = vcmp.eq.s32.totalorder %v1071, 15
        %vm1253 = vcmp.eq.s32.totalorder %v1072, 15
        %vm1254 = vcmp.eq.s32.totalorder %v1073, 15
        %vm1255 = vcmp.eq.s32.totalorder %v1074, 15
        %vm1256 = vcmp.eq.s32.totalorder %v1075, 15
        %vm1257 = vcmp.eq.s32.totalorder %v1076, 15
        %vm1258 = vcmp.eq.s32.totalorder %v1077, 15
        %vm1259 = vcmp.eq.s32.totalorder %v1078, 15
        %vm1260 = vcmp.eq.s32.totalorder %v1079, 15
        %vm1261 = vcmask 1046528
        %v1262 = vrot.slane %v799, 1
        %v1263 = vrot.slane %v800, 1
        %v1264 = vsel %vm1261, %v1262, %v1263
        %v1265 = vrot.slane %v801, 1
        %v1266 = vsel %vm1261, %v1263, %v1265
        %v1267 = vrot.slane %v802, 1
        %v1268 = vsel %vm1261, %v1265, %v1267
        %v1269 = vrot.slane %v803, 1
        %v1270 = vsel %vm1261, %v1267, %v1269
        %v1271 = vrot.slane %v804, 1
        %v1272 = vsel %vm1261, %v1269, %v1271
        %v1273 = vrot.slane %v805, 1
        %v1274 = vsel %vm1261, %v1271, %v1273
        %v1275 = vrot.slane %v806, 1
        %v1276 = vsel %vm1261, %v1273, %v1275
        %v1277 = vrot.slane %v807, 1
        %v1278 = vsel %vm1261, %v1275, %v1277
        %v1279 = vrot.slane %v808, 1
        %v1280 = vsel %vm1261, %v1277, %v1279
        %v1281 = vrot.slane %v809, 1
        %v1282 = vsel %vm1261, %v1279, %v1281
        %v1283 = vrot.slane %v810, 1
        %v1284 = vsel %vm1261, %v1281, %v1283
        %v1285 = vrot.slane %v811, 1
        %v1286 = vsel %vm1261, %v1283, %v1285
        %v1287 = vrot.slane %v812, 1
        %v1288 = vsel %vm1261, %v1285, %v1287
        %v1289 = vrot.slane %v813, 1
        %v1290 = vsel %vm1261, %v1287, %v1289
        %v1291 = vrot.slane %v814, 1
        %v1292 = vsel %vm1261, %v1289, %v1291
        %v1293 = vrot.slane %v815, 1
        %v1294 = vsel %vm1261, %v1291, %v1293
        %v1295 = vrot.slane %v816, 1
        %v1296 = vsel %vm1261, %v1293, %v1295
        %v1297 = vrot.slane %v817, 1
        %v1298 = vsel %vm1261, %v1295, %v1297
        %v1299 = vrot.slane %v818, 1
        %v1300 = vsel %vm1261, %v1297, %v1299
        %v1321 = vsel %vm1261, %v1299, 0.0
        %v1322 = vsel %vm1241, 1, 0
        %v1323 = vsel %vm1242, 1, 0
        %v1324 = vsel %vm1243, 1, 0
        %v1325 = vsel %vm1244, 1, 0
        %v1326 = vsel %vm1245, 1, 0
        %v1327 = vsel %vm1246, 1, 0
        %v1328 = vsel %vm1247, 1, 0
        %v1329 = vsel %vm1248, 1, 0
        %v1330 = vsel %vm1249, 1, 0
        %v1331 = vsel %vm1250, 1, 0
        %v1332 = vsel %vm1251, 1, 0
        %v1333 = vsel %vm1252, 1, 0
        %v1334 = vsel %vm1253, 1, 0
        %v1335 = vsel %vm1254, 1, 0
        %v1336 = vsel %vm1255, 1, 0
        %v1337 = vsel %vm1256, 1, 0
        %v1338 = vsel %vm1257, 1, 0
        %v1339 = vsel %vm1258, 1, 0
        %v1340 = vsel %vm1259, 1, 0
        %v1341 = vsel %vm1260, 1, 0
        %vm1342 = vcmp.eq.s32.totalorder %v1322, 1
        %vm1343 = vcmp.eq.s32.totalorder %v1323, 1
        %vm1344 = vcmp.eq.s32.totalorder %v1324, 1
        %vm1345 = vcmp.eq.s32.totalorder %v1325, 1
        %vm1346 = vcmp.eq.s32.totalorder %v1326, 1
        %vm1347 = vcmp.eq.s32.totalorder %v1327, 1
        %vm1348 = vcmp.eq.s32.totalorder %v1328, 1
        %vm1349 = vcmp.eq.s32.totalorder %v1329, 1
        %vm1350 = vcmp.eq.s32.totalorder %v1330, 1
        %vm1351 = vcmp.eq.s32.totalorder %v1331, 1
        %vm1352 = vcmp.eq.s32.totalorder %v1332, 1
        %vm1353 = vcmp.eq.s32.totalorder %v1333, 1
        %vm1354 = vcmp.eq.s32.totalorder %v1334, 1
        %vm1355 = vcmp.eq.s32.totalorder %v1335, 1
        %vm1356 = vcmp.eq.s32.totalorder %v1336, 1
        %vm1357 = vcmp.eq.s32.totalorder %v1337, 1
        %vm1358 = vcmp.eq.s32.totalorder %v1338, 1
        %vm1359 = vcmp.eq.s32.totalorder %v1339, 1
        %vm1360 = vcmp.eq.s32.totalorder %v1340, 1
        %vm1361 = vcmp.eq.s32.totalorder %v1341, 1
        %v1362 = vsel %vm1342, 0.0, %v1264
        %v1363 = vsel %vm1343, 0.0, %v1266
        %v1364 = vsel %vm1344, 0.0, %v1268
        %v1365 = vsel %vm1345, 0.0, %v1270
        %v1366 = vsel %vm1346, 0.0, %v1272
        %v1367 = vsel %vm1347, 0.0, %v1274
        %v1368 = vsel %vm1348, 0.0, %v1276
        %v1369 = vsel %vm1349, 0.0, %v1278
        %v1370 = vsel %vm1350, 0.0, %v1280
        %v1371 = vsel %vm1351, 0.0, %v1282
        %v1372 = vsel %vm1352, 0.0, %v1284
        %v1373 = vsel %vm1353, 0.0, %v1286
        %v1374 = vsel %vm1354, 0.0, %v1288
        %v1375 = vsel %vm1355, 0.0, %v1290
        %v1376 = vsel %vm1356, 0.0, %v1292
        %v1377 = vsel %vm1357, 0.0, %v1294
        %v1378 = vsel %vm1358, 0.0, %v1296
        %v1379 = vsel %vm1359, 0.0, %v1298
        %v1380 = vsel %vm1360, 0.0, %v1300
        %v1381 = vsel %vm1361, 0.0, %v1321
        %v1382 = vpack.c.bf16 %v1222, %v1221
        %v1383 = vpack.c.bf16 %v1224, %v1223
        %v1384 = vpack.c.bf16 %v1226, %v1225
        %v1385 = vpack.c.bf16 %v1228, %v1227
        %v1386 = vpack.c.bf16 %v1230, %v1229
        %v1387 = vpack.c.bf16 %v1232, %v1231
        %v1388 = vpack.c.bf16 %v1234, %v1233
        %v1389 = vpack.c.bf16 %v1236, %v1235
        %v1390 = vpack.c.bf16 %v1238, %v1237
        %v1391 = vpack.c.bf16 %v1240, %v1239
        %1392 = vst [vmem:[#allocation2] sm:$0xff] %v1382
        %1393 = vst [vmem:[#allocation2 + $0x18] sm:$0xff] %v1383
        %1394 = vst [vmem:[#allocation2 + $0x30] sm:$0xff] %v1384
        %1395 = vst [vmem:[#allocation2 + $0x48] sm:$0xff] %v1385
        %1396 = vst [vmem:[#allocation2 + $0x60] sm:$0xff] %v1386
        %1397 = vst [vmem:[#allocation2 + $0x78] sm:$0xff] %v1387
        %1398 = vst [vmem:[#allocation2 + $0x90] sm:$0xff] %v1388
        %1399 = vst [vmem:[#allocation2 + $0xa8] sm:$0xff] %v1389
        %1400 = vst [vmem:[#allocation2 + $0xc0] sm:$0xff] %v1390
        %1401 = vst [vmem:[#allocation2 + $0xd8] sm:$0xff] %v1391
        %v1402 = vpack.c.bf16 %v800, %v799
        %v1403 = vpack.c.bf16 %v802, %v801
        %v1404 = vpack.c.bf16 %v804, %v803
        %v1405 = vpack.c.bf16 %v806, %v805
        %v1406 = vpack.c.bf16 %v808, %v807
        %v1407 = vpack.c.bf16 %v810, %v809
        %v1408 = vpack.c.bf16 %v812, %v811
        %v1409 = vpack.c.bf16 %v814, %v813
        %v1410 = vpack.c.bf16 %v816, %v815
        %v1411 = vpack.c.bf16 %v818, %v817
        %1412 = vst [vmem:[#allocation2 + $0x8] sm:$0xff] %v1402
        %1413 = vst [vmem:[#allocation2 + $0x20] sm:$0xff] %v1403
        %1414 = vst [vmem:[#allocation2 + $0x38] sm:$0xff] %v1404
        %1415 = vst [vmem:[#allocation2 + $0x50] sm:$0xff] %v1405
        %1416 = vst [vmem:[#allocation2 + $0x68] sm:$0xff] %v1406
        %1417 = vst [vmem:[#allocation2 + $0x80] sm:$0xff] %v1407
        %1418 = vst [vmem:[#allocation2 + $0x98] sm:$0xff] %v1408
        %1419 = vst [vmem:[#allocation2 + $0xb0] sm:$0xff] %v1409
        %1420 = vst [vmem:[#allocation2 + $0xc8] sm:$0xff] %v1410
        %1421 = vst [vmem:[#allocation2 + $0xe0] sm:$0xff] %v1411
        %v1422 = vpack.c.bf16 %v1363, %v1362
        %v1423 = vpack.c.bf16 %v1365, %v1364
        %v1424 = vpack.c.bf16 %v1367, %v1366
        %v1425 = vpack.c.bf16 %v1369, %v1368
        %v1426 = vpack.c.bf16 %v1371, %v1370
        %v1427 = vpack.c.bf16 %v1373, %v1372
        %v1428 = vpack.c.bf16 %v1375, %v1374
        %v1429 = vpack.c.bf16 %v1377, %v1376
        %v1430 = vpack.c.bf16 %v1379, %v1378
        %v1431 = vpack.c.bf16 %v1381, %v1380
        %1432 = vst [vmem:[#allocation2 + $0x10] sm:$0xff] %v1422
        %1433 = vst [vmem:[#allocation2 + $0x28] sm:$0xff] %v1423
        %1434 = vst [vmem:[#allocation2 + $0x40] sm:$0xff] %v1424
        %1435 = vst [vmem:[#allocation2 + $0x58] sm:$0xff] %v1425
        %1436 = vst [vmem:[#allocation2 + $0x70] sm:$0xff] %v1426
        %1437 = vst [vmem:[#allocation2 + $0x88] sm:$0xff] %v1427
        %1438 = vst [vmem:[#allocation2 + $0xa0] sm:$0xff] %v1428
        %1439 = vst [vmem:[#allocation2 + $0xb8] sm:$0xff] %v1429
        %1440 = vst [vmem:[#allocation2 + $0xd0] sm:$0xff] %v1430
        %1441 = vst [vmem:[#allocation2 + $0xe8] sm:$0xff] %v1431
        %p1442 = scmp.eq.s32.totalorder %s36, 0
        // Predicated region
        $region81: #{tpu_custom_call.1} parent=55 // pred_check
          %p1443 = pneg %p1442
        $region82: #{tpu_custom_call.1} parent=55 // pred_check_branch
          %1445 = sbr.rel (%p1443) target = $region84
        $region83: #{tpu_custom_call.1} parent=55 // pred_region
          %1446 = vst [vmem:[#allocation2] sm:$0xff] 0
          %1447 = vst [vmem:[#allocation2 + $0x8] sm:$0xff] 0
          %1448 = vst [vmem:[#allocation2 + $0x10] sm:$0xff] 0
        $region84: #{tpu_custom_call.1} parent=55 // pred_fallthru
          _
        %p1449 = scmp.eq.s32.totalorder %s36, 1
        // Predicated region
        $region85: #{tpu_custom_call.1} parent=55 // pred_check
          %p1450 = pneg %p1449
        $region86: #{tpu_custom_call.1} parent=55 // pred_check_branch
          %1452 = sbr.rel (%p1450) target = $region88
        $region87: #{tpu_custom_call.1} parent=55 // pred_region
          %1453 = vst [vmem:[#allocation2 + $0xd8] sm:$0xff] 0
          %1454 = vst [vmem:[#allocation2 + $0xe0] sm:$0xff] 0
          %1455 = vst [vmem:[#allocation2 + $0xe8] sm:$0xff] 0
        $region88: #{tpu_custom_call.1} parent=55 // pred_fallthru
          _
        %v1456 = vld [vmem:[#allocation2] sm:$0xff]
        %v1457 = vld [vmem:[#allocation2 + $0x8] sm:$0xff]
        %v1458 = vld [vmem:[#allocation2 + $0x10] sm:$0xff]
        %v1459 = vld [vmem:[#allocation2 + $0x18] sm:$0xff]
        %v1460 = vld [vmem:[#allocation2 + $0x20] sm:$0xff]
        %v1461 = vld [vmem:[#allocation2 + $0x28] sm:$0xff]
        %v1462 = vld [vmem:[#allocation2 + $0x30] sm:$0xff]
        %v1463 = vld [vmem:[#allocation2 + $0x38] sm:$0xff]
        %v1464 = vld [vmem:[#allocation2 + $0x40] sm:$0xff]
        %v1465 = vld [vmem:[#allocation2 + $0x48] sm:$0xff]
        %v1466 = vld [vmem:[#allocation2 + $0x50] sm:$0xff]
        %v1467 = vld [vmem:[#allocation2 + $0x58] sm:$0xff]
        %v1468 = vld [vmem:[#allocation2 + $0x60] sm:$0xff]
        %v1469 = vld [vmem:[#allocation2 + $0x68] sm:$0xff]
        %v1470 = vld [vmem:[#allocation2 + $0x70] sm:$0xff]
        %v1471 = vld [vmem:[#allocation2 + $0x78] sm:$0xff]
        %v1472 = vld [vmem:[#allocation2 + $0x80] sm:$0xff]
        %v1473 = vld [vmem:[#allocation2 + $0x88] sm:$0xff]
        %v1474 = vld [vmem:[#allocation2 + $0x90] sm:$0xff]
        %v1475 = vld [vmem:[#allocation2 + $0x98] sm:$0xff]
        %v1476 = vld [vmem:[#allocation2 + $0xa0] sm:$0xff]
        %v1477 = vld [vmem:[#allocation2 + $0xa8] sm:$0xff]
        %v1478 = vld [vmem:[#allocation2 + $0xb0] sm:$0xff]
        %v1479 = vld [vmem:[#allocation2 + $0xb8] sm:$0xff]
        %v1480 = vld [vmem:[#allocation11] sm:$0xf]
        %v1481 = vld [vmem:[#allocation11 + $0x4] sm:$0xf]
        %v1482 = vld [vmem:[#allocation11 + $0x8] sm:$0xf]
        %v1483 = vld [vmem:[#allocation11 + $0xc] sm:$0xf]
        %v1484 = vld [vmem:[#allocation11 + $0x10] sm:$0xf]
        %v1485 = vld [vmem:[#allocation11 + $0x14] sm:$0xf]
        %v1486 = vld [vmem:[#allocation11 + $0x18] sm:$0xf]
        %v1487 = vld [vmem:[#allocation11 + $0x1c] sm:$0xf]
        %v1488 = vld [vmem:[#allocation11 + $0x20] sm:$0xf]
        %v1489 = vld [vmem:[#allocation11 + $0x24] sm:$0xf]
        %v1490 = vld [vmem:[#allocation11 + $0x28] sm:$0xf]
        %v1491 = vld [vmem:[#allocation11 + $0x2c] sm:$0xf]
        %v1492 = vld [vmem:[#allocation11 + $0x30] sm:$0xf]
        %v1493 = vld [vmem:[#allocation11 + $0x34] sm:$0xf]
        %v1494 = vld [vmem:[#allocation11 + $0x38] sm:$0xf]
        %v1495 = vld [vmem:[#allocation11 + $0x3c] sm:$0xf]
        %v1496 = vld [vmem:[#allocation11 + $0x40] sm:$0xf]
        %v1497 = vld [vmem:[#allocation11 + $0x44] sm:$0xf]
        %v1498 = vld [vmem:[#allocation11 + $0x48] sm:$0xf]
        %v1499 = vld [vmem:[#allocation11 + $0x4c] sm:$0xf]
        %v1500 = vld [vmem:[#allocation11 + $0x50] sm:$0xf]
        %v1501 = vld [vmem:[#allocation11 + $0x54] sm:$0xf]
        %v1502 = vld [vmem:[#allocation11 + $0x58] sm:$0xf]
        %v1503 = vld [vmem:[#allocation11 + $0x5c] sm:$0xf]
        %v1504 = vld [vmem:[#allocation11 + $0x60] sm:$0xf]
        %v1505 = vld [vmem:[#allocation11 + $0x64] sm:$0xf]
        %v1506 = vld [vmem:[#allocation11 + $0x68] sm:$0xf]
        %v1507 = vld [vmem:[#allocation11 + $0x6c] sm:$0xf]
        %v1508 = vld [vmem:[#allocation11 + $0x70] sm:$0xf]
        %v1509 = vld [vmem:[#allocation11 + $0x74] sm:$0xf]
        %v1510 = vld [vmem:[#allocation11 + $0x78] sm:$0xf]
        %v1511 = vld [vmem:[#allocation11 + $0x7c] sm:$0xf]
        %v1512 = vld [vmem:[#allocation11 + $0x80] sm:$0xf]
        %v1513 = vld [vmem:[#allocation11 + $0x84] sm:$0xf]
        %v1514 = vld [vmem:[#allocation11 + $0x88] sm:$0xf]
        %v1515 = vld [vmem:[#allocation11 + $0x8c] sm:$0xf]
        %v1516 = vld [vmem:[#allocation11 + $0x90] sm:$0xf]
        %v1517 = vld [vmem:[#allocation11 + $0x94] sm:$0xf]
        %v1518 = vld [vmem:[#allocation11 + $0x98] sm:$0xf]
        %v1519 = vld [vmem:[#allocation11 + $0x9c] sm:$0xf]
        %v1520 = vld [vmem:[#allocation11 + $0xa0] sm:$0xf]
        %v1521 = vld [vmem:[#allocation11 + $0xa4] sm:$0xf]
        %v1522 = vld [vmem:[#allocation11 + $0xa8] sm:$0xf]
        %v1523 = vld [vmem:[#allocation11 + $0xac] sm:$0xf]
        %v1524 = vld [vmem:[#allocation11 + $0xb0] sm:$0xf]
        %v1525 = vld [vmem:[#allocation11 + $0xb4] sm:$0xf]
        %v1526 = vld [vmem:[#allocation11 + $0xb8] sm:$0xf]
        %v1527 = vld [vmem:[#allocation11 + $0xbc] sm:$0xf]
        %v1528 = vld [vmem:[#allocation2 + $0xc0] sm:$0xff]
        %v1529 = vld [vmem:[#allocation2 + $0xc8] sm:$0xff]
        %v1530 = vld [vmem:[#allocation2 + $0xd0] sm:$0xff]
        %s1531 = scalar_lea.vmem [#allocation11], 192
        %v1532 = vld [vmem:[%s1531] sm:$0xf]
        %v1533 = vld [vmem:[%s1531 + $0x4] sm:$0xf]
        %v1534 = vld [vmem:[%s1531 + $0x8] sm:$0xf]
        %v1535 = vld [vmem:[%s1531 + $0xc] sm:$0xf]
        %v1536 = vld [vmem:[%s1531 + $0x10] sm:$0xf]
        %v1537 = vld [vmem:[%s1531 + $0x14] sm:$0xf]
        %v1538 = vld [vmem:[%s1531 + $0x18] sm:$0xf]
        %v1539 = vld [vmem:[%s1531 + $0x1c] sm:$0xf]
        %v1540 = vld [vmem:[%s1531 + $0x20] sm:$0xf]
        %v1541 = vld [vmem:[%s1531 + $0x24] sm:$0xf]
        %v1542 = vld [vmem:[%s1531 + $0x28] sm:$0xf]
        %v1543 = vld [vmem:[%s1531 + $0x2c] sm:$0xf]
        %v1544 = vld [vmem:[%s1531 + $0x30] sm:$0xf]
        %v1545 = vld [vmem:[%s1531 + $0x34] sm:$0xf]
        %v1546 = vld [vmem:[%s1531 + $0x38] sm:$0xf]
        %v1547 = vld [vmem:[%s1531 + $0x3c] sm:$0xf]
        %v1548 = vld [vmem:[%s1531 + $0x40] sm:$0xf]
        %v1549 = vld [vmem:[%s1531 + $0x44] sm:$0xf]
        %v1550 = vld [vmem:[%s1531 + $0x48] sm:$0xf]
        %v1551 = vld [vmem:[%s1531 + $0x4c] sm:$0xf]
        %v1552 = vld [vmem:[%s1531 + $0x50] sm:$0xf]
        %v1553 = vld [vmem:[%s1531 + $0x54] sm:$0xf]
        %v1554 = vld [vmem:[%s1531 + $0x58] sm:$0xf]
        %v1555 = vld [vmem:[%s1531 + $0x5c] sm:$0xf]
        %v1556 = vld [vmem:[%s1531 + $0x60] sm:$0xf]
        %v1557 = vld [vmem:[%s1531 + $0x64] sm:$0xf]
        %v1558 = vld [vmem:[%s1531 + $0x68] sm:$0xf]
        %v1559 = vld [vmem:[%s1531 + $0x6c] sm:$0xf]
        %v1560 = vld [vmem:[%s1531 + $0x70] sm:$0xf]
        %v1561 = vld [vmem:[%s1531 + $0x74] sm:$0xf]
        %v1562 = vld [vmem:[%s1531 + $0x78] sm:$0xf]
        %v1563 = vld [vmem:[%s1531 + $0x7c] sm:$0xf]
        %v1564 = vld [vmem:[%s1531 + $0x80] sm:$0xf]
        %v1565 = vld [vmem:[%s1531 + $0x84] sm:$0xf]
        %v1566 = vld [vmem:[%s1531 + $0x88] sm:$0xf]
        %v1567 = vld [vmem:[%s1531 + $0x8c] sm:$0xf]
        %v1568 = vld [vmem:[%s1531 + $0x90] sm:$0xf]
        %v1569 = vld [vmem:[%s1531 + $0x94] sm:$0xf]
        %v1570 = vld [vmem:[%s1531 + $0x98] sm:$0xf]
        %v1571 = vld [vmem:[%s1531 + $0x9c] sm:$0xf]
        %v1572 = vld [vmem:[%s1531 + $0xa0] sm:$0xf]
        %v1573 = vld [vmem:[%s1531 + $0xa4] sm:$0xf]
        %v1574 = vld [vmem:[%s1531 + $0xa8] sm:$0xf]
        %v1575 = vld [vmem:[%s1531 + $0xac] sm:$0xf]
        %v1576 = vld [vmem:[%s1531 + $0xb0] sm:$0xf]
        %v1577 = vld [vmem:[%s1531 + $0xb4] sm:$0xf]
        %v1578 = vld [vmem:[%s1531 + $0xb8] sm:$0xf]
        %v1579 = vld [vmem:[%s1531 + $0xbc] sm:$0xf]
        %v1628 = vunpack.c.l.b16 %v1532
        %v1629 = vunpack.c.l.b16 %v1533
        %v1630 = vunpack.c.l.b16 %v1534
        %v1631 = vunpack.c.l.b16 %v1535
        %v1632 = vunpack.c.l.b16 %v1536
        %v1633 = vunpack.c.l.b16 %v1537
        %v1634 = vunpack.c.l.b16 %v1538
        %v1635 = vunpack.c.l.b16 %v1539
        %v1636 = vunpack.c.l.b16 %v1540
        %v1637 = vunpack.c.l.b16 %v1541
        %v1638 = vunpack.c.l.b16 %v1542
        %v1639 = vunpack.c.l.b16 %v1543
        %v1640 = vunpack.c.l.b16 %v1544
        %v1641 = vunpack.c.l.b16 %v1545
        %v1642 = vunpack.c.l.b16 %v1546
        %v1643 = vunpack.c.l.b16 %v1547
        %v1644 = vunpack.c.l.b16 %v1548
        %v1645 = vunpack.c.l.b16 %v1549
        %v1646 = vunpack.c.l.b16 %v1550
        %v1647 = vunpack.c.l.b16 %v1551
        %v1648 = vunpack.c.l.b16 %v1552
        %v1649 = vunpack.c.l.b16 %v1553
        %v1650 = vunpack.c.l.b16 %v1554
        %v1651 = vunpack.c.l.b16 %v1555
        %v1652 = vunpack.c.l.b16 %v1556
        %v1653 = vunpack.c.l.b16 %v1557
        %v1654 = vunpack.c.l.b16 %v1558
        %v1655 = vunpack.c.l.b16 %v1559
        %v1656 = vunpack.c.l.b16 %v1560
        %v1657 = vunpack.c.l.b16 %v1561
        %v1658 = vunpack.c.l.b16 %v1562
        %v1659 = vunpack.c.l.b16 %v1563
        %v1660 = vunpack.c.l.b16 %v1564
        %v1661 = vunpack.c.l.b16 %v1565
        %v1662 = vunpack.c.l.b16 %v1566
        %v1663 = vunpack.c.l.b16 %v1567
        %v1664 = vunpack.c.l.b16 %v1568
        %v1665 = vunpack.c.l.b16 %v1569
        %v1666 = vunpack.c.l.b16 %v1570
        %v1667 = vunpack.c.l.b16 %v1571
        %v1668 = vunpack.c.l.b16 %v1572
        %v1669 = vunpack.c.l.b16 %v1573
        %v1670 = vunpack.c.l.b16 %v1574
        %v1671 = vunpack.c.l.b16 %v1575
        %v1672 = vunpack.c.l.b16 %v1576
        %v1673 = vunpack.c.l.b16 %v1577
        %v1674 = vunpack.c.l.b16 %v1578
        %v1675 = vunpack.c.l.b16 %v1579
        %v1676 = vpack.c.b16 %v1629, %v1628
        %v1677 = vpack.c.b16 %v1631, %v1630
        %v1678 = vpack.c.b16 %v1633, %v1632
        %v1679 = vpack.c.b16 %v1635, %v1634
        %v1680 = vpack.c.b16 %v1637, %v1636
        %v1681 = vpack.c.b16 %v1639, %v1638
        %v1682 = vpack.c.b16 %v1641, %v1640
        %v1683 = vpack.c.b16 %v1643, %v1642
        %v1684 = vpack.c.b16 %v1645, %v1644
        %v1685 = vpack.c.b16 %v1647, %v1646
        %v1686 = vpack.c.b16 %v1649, %v1648
        %v1687 = vpack.c.b16 %v1651, %v1650
        %v1688 = vpack.c.b16 %v1653, %v1652
        %v1689 = vpack.c.b16 %v1655, %v1654
        %v1690 = vpack.c.b16 %v1657, %v1656
        %v1691 = vpack.c.b16 %v1659, %v1658
        %v1692 = vpack.c.b16 %v1661, %v1660
        %v1693 = vpack.c.b16 %v1663, %v1662
        %v1694 = vpack.c.b16 %v1665, %v1664
        %v1695 = vpack.c.b16 %v1667, %v1666
        %v1696 = vpack.c.b16 %v1669, %v1668
        %v1697 = vpack.c.b16 %v1671, %v1670
        %v1698 = vpack.c.b16 %v1673, %v1672
        %v1699 = vpack.c.b16 %v1675, %v1674
        %1724 = vmatprep.subr.bf16.mxu0 0
        %1725 = vmatpush1.bf16.msra.mxu0 %v1676
        %1726 = vmatprep.subr.bf16.mxu0 0
        %1727 = vmatpush1.bf16.msra.mxu0 %v1677
        %1728 = vmatprep.subr.bf16.mxu0 0
        %1729 = vmatpush1.bf16.msra.mxu0 %v1678
        %1730 = vmatprep.subr.bf16.mxu0 0
        %1731 = vmatpush1.bf16.msra.mxu0 %v1679
        %1732 = vmatprep.subr.bf16.mxu0 0
        %1733 = vmatpush1.bf16.msra.mxu0 %v1680
        %1734 = vmatprep.subr.bf16.mxu0 0
        %1735 = vmatpush1.bf16.msra.mxu0 %v1681
        %1736 = vmatprep.subr.bf16.mxu0 0
        %1737 = vmatpush1.bf16.msra.mxu0 %v1682
        %1738 = vmatprep.subr.bf16.mxu0 0
        %1739 = vmatpush1.bf16.msra.mxu0 %v1683
        %1740 = vmatprep.subr.bf16.mxu0 0
        %1741 = vmatpush1.bf16.msra.mxu0 %v1684
        %1742 = vmatprep.subr.bf16.mxu0 0
        %1743 = vmatpush1.bf16.msra.mxu0 %v1685
        %1744 = vmatprep.subr.bf16.mxu0 0
        %1745 = vmatpush1.bf16.msra.mxu0 %v1686
        %1746 = vmatprep.subr.bf16.mxu0 0
        %1747 = vmatpush1.bf16.msra.mxu0 %v1687
        %1748 = vmatprep.subr.bf16.mxu0 0
        %1749 = vmatpush1.bf16.msra.mxu0 %v1688
        %1750 = vmatprep.subr.bf16.mxu0 0
        %1751 = vmatpush1.bf16.msra.mxu0 %v1689
        %1752 = vmatprep.subr.bf16.mxu0 0
        %1753 = vmatpush1.bf16.msra.mxu0 %v1690
        %1754 = vmatprep.subr.bf16.mxu0 0
        %1755 = vmatpush1.bf16.msra.mxu0 %v1691
        %1756 = vmatprep.mubr.bf16.mxu0 %v1460
        %1757 = vmatmul.mubr.bf16.gmra.mrb[0].mxu0 %v1459
        %v1758 = vpop.f32.mrb[0].mxu0
        %v1759 = vadd.f32 0.0, %v1758
        %v1760 = vpop.f32.mrb[0].mxu0
        %v1761 = vpop.f32.mrb[0].mxu0
        %v1762 = vadd.f32 0.0, %v1761
        %v1763 = vpop.f32.mrb[0].mxu0
        %1764 = vmatprep.mubr.bf16.mxu0 %v1463
        %1765 = vmatmul.mubr.bf16.gmra.mrb[0].mxu0 %v1462
        %v1766 = vpop.f32.mrb[0].mxu0
        %v1767 = vadd.f32 0.0, %v1766
        %v1768 = vpop.f32.mrb[0].mxu0
        %v1769 = vpop.f32.mrb[0].mxu0
        %v1770 = vadd.f32 0.0, %v1769
        %v1771 = vpop.f32.mrb[0].mxu0
        %1772 = vmatprep.mubr.bf16.mxu0 %v1466
        %1773 = vmatmul.mubr.bf16.gmra.mrb[0].mxu0 %v1465
        %v1774 = vpop.f32.mrb[0].mxu0
        %v1775 = vadd.f32 0.0, %v1774
        %v1776 = vpop.f32.mrb[0].mxu0
        %v1777 = vpop.f32.mrb[0].mxu0
        %v1778 = vadd.f32 0.0, %v1777
        %v1779 = vpop.f32.mrb[0].mxu0
        %1780 = vmatprep.mubr.bf16.mxu0 %v1469
        %1781 = vmatmul.mubr.bf16.gmra.mrb[0].mxu0 %v1468
        %v1782 = vpop.f32.mrb[0].mxu0
        %v1783 = vadd.f32 0.0, %v1782
        %v1784 = vpop.f32.mrb[0].mxu0
        %v1785 = vpop.f32.mrb[0].mxu0
        %v1786 = vadd.f32 0.0, %v1785
        %v1787 = vpop.f32.mrb[0].mxu0
        %1788 = vmatprep.mubr.bf16.mxu0 %v1472
        %1789 = vmatmul.mubr.bf16.gmra.mrb[0].mxu0 %v1471
        %v1790 = vpop.f32.mrb[0].mxu0
        %v1791 = vadd.f32 0.0, %v1790
        %v1792 = vpop.f32.mrb[0].mxu0
        %v1793 = vpop.f32.mrb[0].mxu0
        %v1794 = vadd.f32 0.0, %v1793
        %v1795 = vpop.f32.mrb[0].mxu0
        %1796 = vmatprep.mubr.bf16.mxu0 %v1475
        %1797 = vmatmul.mubr.bf16.gmra.mrb[0].mxu0 %v1474
        %v1798 = vpop.f32.mrb[0].mxu0
        %v1799 = vadd.f32 0.0, %v1798
        %v1800 = vpop.f32.mrb[0].mxu0
        %v1801 = vpop.f32.mrb[0].mxu0
        %v1802 = vadd.f32 0.0, %v1801
        %v1803 = vpop.f32.mrb[0].mxu0
        %1804 = vmatprep.mubr.bf16.mxu0 %v1478
        %1805 = vmatmul.mubr.bf16.gmra.mrb[0].mxu0 %v1477
        %v1806 = vpop.f32.mrb[0].mxu0
        %v1807 = vadd.f32 0.0, %v1806
        %v1808 = vpop.f32.mrb[0].mxu0
        %v1809 = vpop.f32.mrb[0].mxu0
        %v1810 = vadd.f32 0.0, %v1809
        %v1811 = vpop.f32.mrb[0].mxu0
        %1812 = vmatprep.mubr.bf16.mxu0 %v1529
        %1813 = vmatmul.mubr.bf16.gmra.mrb[0].mxu0 %v1528
        %v1814 = vpop.f32.mrb[0].mxu0
        %v1815 = vadd.f32 0.0, %v1814
        %v1816 = vpop.f32.mrb[0].mxu0
        %v1817 = vpop.f32.mrb[0].mxu0
        %v1818 = vadd.f32 0.0, %v1817
        %v1819 = vpop.f32.mrb[0].mxu0
        %1820 = vdwg.mxu0
        %1821 = vmatprep.subr.bf16.mxu0 0
        %1822 = vmatpush1.bf16.msra.mxu0 %v1692
        %1823 = vmatprep.subr.bf16.mxu0 0
        %1824 = vmatpush1.bf16.msra.mxu0 %v1693
        %1825 = vmatprep.subr.bf16.mxu0 0
        %1826 = vmatpush1.bf16.msra.mxu0 %v1694
        %1827 = vmatprep.subr.bf16.mxu0 0
        %1828 = vmatpush1.bf16.msra.mxu0 %v1695
        %1829 = vmatprep.subr.bf16.mxu0 0
        %1830 = vmatpush1.bf16.msra.mxu0 %v1696
        %1831 = vmatprep.subr.bf16.mxu0 0
        %1832 = vmatpush1.bf16.msra.mxu0 %v1697
        %1833 = vmatprep.subr.bf16.mxu0 0
        %1834 = vmatpush1.bf16.msra.mxu0 %v1698
        %1835 = vmatprep.subr.bf16.mxu0 0
        %1836 = vmatpush1.bf16.msra.mxu0 %v1699
        %1837 = vmatprep.subr.bf16.mxu0 0
        %1838 = vmatpush1.bf16.msra.mxu0 0
        %1839 = vmatprep.subr.bf16.mxu0 0
        %1840 = vmatpush1.bf16.msra.mxu0 0
        %1841 = vmatprep.subr.bf16.mxu0 0
        %1842 = vmatpush1.bf16.msra.mxu0 0
        %1843 = vmatprep.subr.bf16.mxu0 0
        %1844 = vmatpush1.bf16.msra.mxu0 0
        %1845 = vmatprep.subr.bf16.mxu0 0
        %1846 = vmatpush1.bf16.msra.mxu0 0
        %1847 = vmatprep.subr.bf16.mxu0 0
        %1848 = vmatpush1.bf16.msra.mxu0 0
        %1849 = vmatprep.subr.bf16.mxu0 0
        %1850 = vmatpush1.bf16.msra.mxu0 0
        %1851 = vmatprep.subr.bf16.mxu0 0
        %1852 = vmatpush1.bf16.msra.mxu0 0
        %1853 = vmatprep.mubr.bf16.mxu0 0
        %1854 = vmatmul.mubr.bf16.gmra.mrb[0].mxu0 %v1461
        %v1855 = vpop.f32.mrb[0].mxu0
        %v1856 = vadd.f32 %v1759, %v1855
        %v1857 = vpop.f32.mrb[0].mxu0
        %v1858 = vpop.f32.mrb[0].mxu0
        %v1859 = vadd.f32 %v1762, %v1858
        %v1860 = vpop.f32.mrb[0].mxu0
        %1861 = vmatprep.mubr.bf16.mxu0 0
        %1862 = vmatmul.mubr.bf16.gmra.mrb[0].mxu0 %v1464
        %v1863 = vpop.f32.mrb[0].mxu0
        %v1864 = vadd.f32 %v1767, %v1863
        %v1865 = vpop.f32.mrb[0].mxu0
        %v1866 = vpop.f32.mrb[0].mxu0
        %v1867 = vadd.f32 %v1770, %v1866
        %v1868 = vpop.f32.mrb[0].mxu0
        %1869 = vmatprep.mubr.bf16.mxu0 0
        %1870 = vmatmul.mubr.bf16.gmra.mrb[0].mxu0 %v1467
        %v1871 = vpop.f32.mrb[0].mxu0
        %v1872 = vadd.f32 %v1775, %v1871
        %v1873 = vpop.f32.mrb[0].mxu0
        %v1874 = vpop.f32.mrb[0].mxu0
        %v1875 = vadd.f32 %v1778, %v1874
        %v1876 = vpop.f32.mrb[0].mxu0
        %1877 = vmatprep.mubr.bf16.mxu0 0
        %1878 = vmatmul.mubr.bf16.gmra.mrb[0].mxu0 %v1470
        %v1879 = vpop.f32.mrb[0].mxu0
        %v1880 = vadd.f32 %v1783, %v1879
        %v1881 = vpop.f32.mrb[0].mxu0
        %v1882 = vpop.f32.mrb[0].mxu0
        %v1883 = vadd.f32 %v1786, %v1882
        %v1884 = vpop.f32.mrb[0].mxu0
        %1885 = vmatprep.mubr.bf16.mxu0 0
        %1886 = vmatmul.mubr.bf16.gmra.mrb[0].mxu0 %v1473
        %v1887 = vpop.f32.mrb[0].mxu0
        %v1888 = vadd.f32 %v1791, %v1887
        %v1889 = vpop.f32.mrb[0].mxu0
        %v1890 = vpop.f32.mrb[0].mxu0
        %v1891 = vadd.f32 %v1794, %v1890
        %v1892 = vpop.f32.mrb[0].mxu0
        %1893 = vmatprep.mubr.bf16.mxu0 0
        %1894 = vmatmul.mubr.bf16.gmra.mrb[0].mxu0 %v1476
        %v1895 = vpop.f32.mrb[0].mxu0
        %v1896 = vadd.f32 %v1799, %v1895
        %v1897 = vpop.f32.mrb[0].mxu0
        %v1898 = vpop.f32.mrb[0].mxu0
        %v1899 = vadd.f32 %v1802, %v1898
        %v1900 = vpop.f32.mrb[0].mxu0
        %1901 = vmatprep.mubr.bf16.mxu0 0
        %1902 = vmatmul.mubr.bf16.gmra.mrb[0].mxu0 %v1479
        %v1903 = vpop.f32.mrb[0].mxu0
        %v1904 = vadd.f32 %v1807, %v1903
        %v1905 = vpop.f32.mrb[0].mxu0
        %v1906 = vpop.f32.mrb[0].mxu0
        %v1907 = vadd.f32 %v1810, %v1906
        %v1908 = vpop.f32.mrb[0].mxu0
        %1909 = vmatprep.mubr.bf16.mxu0 0
        %1910 = vmatmul.mubr.bf16.gmra.mrb[0].mxu0 %v1530
        %v1911 = vpop.f32.mrb[0].mxu0
        %v1912 = vadd.f32 %v1815, %v1911
        %v1913 = vpop.f32.mrb[0].mxu0
        %v1914 = vpop.f32.mrb[0].mxu0
        %v1915 = vadd.f32 %v1818, %v1914
        %v1916 = vpop.f32.mrb[0].mxu0
        %1917 = vdwg.mxu0
        %v1966 = vunpack.c.l.b16 %v1480
        %v1967 = vunpack.c.l.b16 %v1481
        %v1968 = vunpack.c.l.b16 %v1482
        %v1969 = vunpack.c.l.b16 %v1483
        %v1970 = vunpack.c.l.b16 %v1484
        %v1971 = vunpack.c.l.b16 %v1485
        %v1972 = vunpack.c.l.b16 %v1486
        %v1973 = vunpack.c.l.b16 %v1487
        %v1974 = vunpack.c.l.b16 %v1488
        %v1975 = vunpack.c.l.b16 %v1489
        %v1976 = vunpack.c.l.b16 %v1490
        %v1977 = vunpack.c.l.b16 %v1491
        %v1978 = vunpack.c.l.b16 %v1492
        %v1979 = vunpack.c.l.b16 %v1493
        %v1980 = vunpack.c.l.b16 %v1494
        %v1981 = vunpack.c.l.b16 %v1495
        %v1982 = vunpack.c.l.b16 %v1496
        %v1983 = vunpack.c.l.b16 %v1497
        %v1984 = vunpack.c.l.b16 %v1498
        %v1985 = vunpack.c.l.b16 %v1499
        %v1986 = vunpack.c.l.b16 %v1500
        %v1987 = vunpack.c.l.b16 %v1501
        %v1988 = vunpack.c.l.b16 %v1502
        %v1989 = vunpack.c.l.b16 %v1503
        %v1990 = vunpack.c.l.b16 %v1504
        %v1991 = vunpack.c.l.b16 %v1505
        %v1992 = vunpack.c.l.b16 %v1506
        %v1993 = vunpack.c.l.b16 %v1507
        %v1994 = vunpack.c.l.b16 %v1508
        %v1995 = vunpack.c.l.b16 %v1509
        %v1996 = vunpack.c.l.b16 %v1510
        %v1997 = vunpack.c.l.b16 %v1511
        %v1998 = vunpack.c.l.b16 %v1512
        %v1999 = vunpack.c.l.b16 %v1513
        %v2000 = vunpack.c.l.b16 %v1514
        %v2001 = vunpack.c.l.b16 %v1515
        %v2002 = vunpack.c.l.b16 %v1516
        %v2003 = vunpack.c.l.b16 %v1517
        %v2004 = vunpack.c.l.b16 %v1518
        %v2005 = vunpack.c.l.b16 %v1519
        %v2006 = vunpack.c.l.b16 %v1520
        %v2007 = vunpack.c.l.b16 %v1521
        %v2008 = vunpack.c.l.b16 %v1522
        %v2009 = vunpack.c.l.b16 %v1523
        %v2010 = vunpack.c.l.b16 %v1524
        %v2011 = vunpack.c.l.b16 %v1525
        %v2012 = vunpack.c.l.b16 %v1526
        %v2013 = vunpack.c.l.b16 %v1527
        %v2014 = vpack.c.b16 %v1967, %v1966
        %v2015 = vpack.c.b16 %v1969, %v1968
        %v2016 = vpack.c.b16 %v1971, %v1970
        %v2017 = vpack.c.b16 %v1973, %v1972
        %v2018 = vpack.c.b16 %v1975, %v1974
        %v2019 = vpack.c.b16 %v1977, %v1976
        %v2020 = vpack.c.b16 %v1979, %v1978
        %v2021 = vpack.c.b16 %v1981, %v1980
        %v2022 = vpack.c.b16 %v1983, %v1982
        %v2023 = vpack.c.b16 %v1985, %v1984
        %v2024 = vpack.c.b16 %v1987, %v1986
        %v2025 = vpack.c.b16 %v1989, %v1988
        %v2026 = vpack.c.b16 %v1991, %v1990
        %v2027 = vpack.c.b16 %v1993, %v1992
        %v2028 = vpack.c.b16 %v1995, %v1994
        %v2029 = vpack.c.b16 %v1997, %v1996
        %v2030 = vpack.c.b16 %v1999, %v1998
        %v2031 = vpack.c.b16 %v2001, %v2000
        %v2032 = vpack.c.b16 %v2003, %v2002
        %v2033 = vpack.c.b16 %v2005, %v2004
        %v2034 = vpack.c.b16 %v2007, %v2006
        %v2035 = vpack.c.b16 %v2009, %v2008
        %v2036 = vpack.c.b16 %v2011, %v2010
        %v2037 = vpack.c.b16 %v2013, %v2012
        %2062 = vmatprep.subr.bf16.mxu0 0
        %2063 = vmatpush1.bf16.msra.mxu0 %v2014
        %2064 = vmatprep.subr.bf16.mxu0 0
        %2065 = vmatpush1.bf16.msra.mxu0 %v2015
        %2066 = vmatprep.subr.bf16.mxu0 0
        %2067 = vmatpush1.bf16.msra.mxu0 %v2016
        %2068 = vmatprep.subr.bf16.mxu0 0
        %2069 = vmatpush1.bf16.msra.mxu0 %v2017
        %2070 = vmatprep.subr.bf16.mxu0 0
        %2071 = vmatpush1.bf16.msra.mxu0 %v2018
        %2072 = vmatprep.subr.bf16.mxu0 0
        %2073 = vmatpush1.bf16.msra.mxu0 %v2019
        %2074 = vmatprep.subr.bf16.mxu0 0
        %2075 = vmatpush1.bf16.msra.mxu0 %v2020
        %2076 = vmatprep.subr.bf16.mxu0 0
        %2077 = vmatpush1.bf16.msra.mxu0 %v2021
        %2078 = vmatprep.subr.bf16.mxu0 0
        %2079 = vmatpush1.bf16.msra.mxu0 %v2022
        %2080 = vmatprep.subr.bf16.mxu0 0
        %2081 = vmatpush1.bf16.msra.mxu0 %v2023
        %2082 = vmatprep.subr.bf16.mxu0 0
        %2083 = vmatpush1.bf16.msra.mxu0 %v2024
        %2084 = vmatprep.subr.bf16.mxu0 0
        %2085 = vmatpush1.bf16.msra.mxu0 %v2025
        %2086 = vmatprep.subr.bf16.mxu0 0
        %2087 = vmatpush1.bf16.msra.mxu0 %v2026
        %2088 = vmatprep.subr.bf16.mxu0 0
        %2089 = vmatpush1.bf16.msra.mxu0 %v2027
        %2090 = vmatprep.subr.bf16.mxu0 0
        %2091 = vmatpush1.bf16.msra.mxu0 %v2028
        %2092 = vmatprep.subr.bf16.mxu0 0
        %2093 = vmatpush1.bf16.msra.mxu0 %v2029
        %2094 = vmatprep.mubr.bf16.mxu0 %v1457
        %2095 = vmatmul.mubr.bf16.gmra.mrb[0].mxu0 %v1456
        %v2096 = vpop.f32.mrb[0].mxu0
        %v2097 = vadd.f32 %v1856, %v2096
        %v2098 = vpop.f32.mrb[0].mxu0
        %v2099 = vpop.f32.mrb[0].mxu0
        %v2100 = vadd.f32 %v1859, %v2099
        %v2101 = vpop.f32.mrb[0].mxu0
        %2102 = vmatprep.mubr.bf16.mxu0 %v1460
        %2103 = vmatmul.mubr.bf16.gmra.mrb[0].mxu0 %v1459
        %v2104 = vpop.f32.mrb[0].mxu0
        %v2105 = vadd.f32 %v1864, %v2104
        %v2106 = vpop.f32.mrb[0].mxu0
        %v2107 = vpop.f32.mrb[0].mxu0
        %v2108 = vadd.f32 %v1867, %v2107
        %v2109 = vpop.f32.mrb[0].mxu0
        %2110 = vmatprep.mubr.bf16.mxu0 %v1463
        %2111 = vmatmul.mubr.bf16.gmra.mrb[0].mxu0 %v1462
        %v2112 = vpop.f32.mrb[0].mxu0
        %v2113 = vadd.f32 %v1872, %v2112
        %v2114 = vpop.f32.mrb[0].mxu0
        %v2115 = vpop.f32.mrb[0].mxu0
        %v2116 = vadd.f32 %v1875, %v2115
        %v2117 = vpop.f32.mrb[0].mxu0
        %2118 = vmatprep.mubr.bf16.mxu0 %v1466
        %2119 = vmatmul.mubr.bf16.gmra.mrb[0].mxu0 %v1465
        %v2120 = vpop.f32.mrb[0].mxu0
        %v2121 = vadd.f32 %v1880, %v2120
        %v2122 = vpop.f32.mrb[0].mxu0
        %v2123 = vpop.f32.mrb[0].mxu0
        %v2124 = vadd.f32 %v1883, %v2123
        %v2125 = vpop.f32.mrb[0].mxu0
        %2126 = vmatprep.mubr.bf16.mxu0 %v1469
        %2127 = vmatmul.mubr.bf16.gmra.mrb[0].mxu0 %v1468
        %v2128 = vpop.f32.mrb[0].mxu0
        %v2129 = vadd.f32 %v1888, %v2128
        %v2130 = vpop.f32.mrb[0].mxu0
        %v2131 = vpop.f32.mrb[0].mxu0
        %v2132 = vadd.f32 %v1891, %v2131
        %v2133 = vpop.f32.mrb[0].mxu0
        %2134 = vmatprep.mubr.bf16.mxu0 %v1472
        %2135 = vmatmul.mubr.bf16.gmra.mrb[0].mxu0 %v1471
        %v2136 = vpop.f32.mrb[0].mxu0
        %v2137 = vadd.f32 %v1896, %v2136
        %v2138 = vpop.f32.mrb[0].mxu0
        %v2139 = vpop.f32.mrb[0].mxu0
        %v2140 = vadd.f32 %v1899, %v2139
        %v2141 = vpop.f32.mrb[0].mxu0
        %2142 = vmatprep.mubr.bf16.mxu0 %v1475
        %2143 = vmatmul.mubr.bf16.gmra.mrb[0].mxu0 %v1474
        %v2144 = vpop.f32.mrb[0].mxu0
        %v2145 = vadd.f32 %v1904, %v2144
        %v2146 = vpop.f32.mrb[0].mxu0
        %v2147 = vpop.f32.mrb[0].mxu0
        %v2148 = vadd.f32 %v1907, %v2147
        %v2149 = vpop.f32.mrb[0].mxu0
        %2150 = vmatprep.mubr.bf16.mxu0 %v1478
        %2151 = vmatmul.mubr.bf16.gmra.mrb[0].mxu0 %v1477
        %v2152 = vpop.f32.mrb[0].mxu0
        %v2153 = vadd.f32 %v1912, %v2152
        %v2154 = vpop.f32.mrb[0].mxu0
        %v2155 = vpop.f32.mrb[0].mxu0
        %v2156 = vadd.f32 %v1915, %v2155
        %v2157 = vpop.f32.mrb[0].mxu0
        %2158 = vdwg.mxu0
        %2159 = vmatprep.subr.bf16.mxu0 0
        %2160 = vmatpush1.bf16.msra.mxu0 %v2030
        %2161 = vmatprep.subr.bf16.mxu0 0
        %2162 = vmatpush1.bf16.msra.mxu0 %v2031
        %2163 = vmatprep.subr.bf16.mxu0 0
        %2164 = vmatpush1.bf16.msra.mxu0 %v2032
        %2165 = vmatprep.subr.bf16.mxu0 0
        %2166 = vmatpush1.bf16.msra.mxu0 %v2033
        %2167 = vmatprep.subr.bf16.mxu0 0
        %2168 = vmatpush1.bf16.msra.mxu0 %v2034
        %2169 = vmatprep.subr.bf16.mxu0 0
        %2170 = vmatpush1.bf16.msra.mxu0 %v2035
        %2171 = vmatprep.subr.bf16.mxu0 0
        %2172 = vmatpush1.bf16.msra.mxu0 %v2036
        %2173 = vmatprep.subr.bf16.mxu0 0
        %2174 = vmatpush1.bf16.msra.mxu0 %v2037
        %2175 = vmatprep.subr.bf16.mxu0 0
        %2176 = vmatpush1.bf16.msra.mxu0 0
        %2177 = vmatprep.subr.bf16.mxu0 0
        %2178 = vmatpush1.bf16.msra.mxu0 0
        %2179 = vmatprep.subr.bf16.mxu0 0
        %2180 = vmatpush1.bf16.msra.mxu0 0
        %2181 = vmatprep.subr.bf16.mxu0 0
        %2182 = vmatpush1.bf16.msra.mxu0 0
        %2183 = vmatprep.subr.bf16.mxu0 0
        %2184 = vmatpush1.bf16.msra.mxu0 0
        %2185 = vmatprep.subr.bf16.mxu0 0
        %2186 = vmatpush1.bf16.msra.mxu0 0
        %2187 = vmatprep.subr.bf16.mxu0 0
        %2188 = vmatpush1.bf16.msra.mxu0 0
        %2189 = vmatprep.subr.bf16.mxu0 0
        %2190 = vmatpush1.bf16.msra.mxu0 0
        %2191 = vmatprep.mubr.bf16.mxu0 0
        %2192 = vmatmul.mubr.bf16.gmra.mrb[0].mxu0 %v1458
        %v2193 = vpop.f32.mrb[0].mxu0
        %v2194 = vadd.f32 %v2097, %v2193
        %v2195 = vpop.f32.mrb[0].mxu0
        %v2196 = vpop.f32.mrb[0].mxu0
        %v2197 = vadd.f32 %v2100, %v2196
        %v2198 = vpop.f32.mrb[0].mxu0
        %2199 = vmatprep.mubr.bf16.mxu0 0
        %2200 = vmatmul.mubr.bf16.gmra.mrb[0].mxu0 %v1461
        %v2201 = vpop.f32.mrb[0].mxu0
        %v2202 = vadd.f32 %v2105, %v2201
        %v2203 = vpop.f32.mrb[0].mxu0
        %v2204 = vpop.f32.mrb[0].mxu0
        %v2205 = vadd.f32 %v2108, %v2204
        %v2206 = vpop.f32.mrb[0].mxu0
        %2207 = vmatprep.mubr.bf16.mxu0 0
        %2208 = vmatmul.mubr.bf16.gmra.mrb[0].mxu0 %v1464
        %v2209 = vpop.f32.mrb[0].mxu0
        %v2210 = vadd.f32 %v2113, %v2209
        %v2211 = vpop.f32.mrb[0].mxu0
        %v2212 = vpop.f32.mrb[0].mxu0
        %v2213 = vadd.f32 %v2116, %v2212
        %v2214 = vpop.f32.mrb[0].mxu0
        %2215 = vmatprep.mubr.bf16.mxu0 0
        %2216 = vmatmul.mubr.bf16.gmra.mrb[0].mxu0 %v1467
        %v2217 = vpop.f32.mrb[0].mxu0
        %v2218 = vadd.f32 %v2121, %v2217
        %v2219 = vpop.f32.mrb[0].mxu0
        %v2220 = vpop.f32.mrb[0].mxu0
        %v2221 = vadd.f32 %v2124, %v2220
        %v2222 = vpop.f32.mrb[0].mxu0
        %2223 = vmatprep.mubr.bf16.mxu0 0
        %2224 = vmatmul.mubr.bf16.gmra.mrb[0].mxu0 %v1470
        %v2225 = vpop.f32.mrb[0].mxu0
        %v2226 = vadd.f32 %v2129, %v2225
        %v2227 = vpop.f32.mrb[0].mxu0
        %v2228 = vpop.f32.mrb[0].mxu0
        %v2229 = vadd.f32 %v2132, %v2228
        %v2230 = vpop.f32.mrb[0].mxu0
        %2231 = vmatprep.mubr.bf16.mxu0 0
        %2232 = vmatmul.mubr.bf16.gmra.mrb[0].mxu0 %v1473
        %v2233 = vpop.f32.mrb[0].mxu0
        %v2234 = vadd.f32 %v2137, %v2233
        %v2235 = vpop.f32.mrb[0].mxu0
        %v2236 = vpop.f32.mrb[0].mxu0
        %v2237 = vadd.f32 %v2140, %v2236
        %v2238 = vpop.f32.mrb[0].mxu0
        %2239 = vmatprep.mubr.bf16.mxu0 0
        %2240 = vmatmul.mubr.bf16.gmra.mrb[0].mxu0 %v1476
        %v2241 = vpop.f32.mrb[0].mxu0
        %v2242 = vadd.f32 %v2145, %v2241
        %v2243 = vpop.f32.mrb[0].mxu0
        %v2244 = vpop.f32.mrb[0].mxu0
        %v2245 = vadd.f32 %v2148, %v2244
        %v2246 = vpop.f32.mrb[0].mxu0
        %2247 = vmatprep.mubr.bf16.mxu0 0
        %2248 = vmatmul.mubr.bf16.gmra.mrb[0].mxu0 %v1479
        %v2249 = vpop.f32.mrb[0].mxu0
        %v2250 = vadd.f32 %v2153, %v2249
        %v2251 = vpop.f32.mrb[0].mxu0
        %v2252 = vpop.f32.mrb[0].mxu0
        %v2253 = vadd.f32 %v2156, %v2252
        %v2254 = vpop.f32.mrb[0].mxu0
        %2255 = vdwg.mxu0
        %v2256 = vld [vmem:[#allocation2 + $0x30] sm:$0xff]
        %v2257 = vld [vmem:[#allocation2 + $0x38] sm:$0xff]
        %v2258 = vld [vmem:[#allocation2 + $0x40] sm:$0xff]
        %v2259 = vld [vmem:[#allocation2 + $0x48] sm:$0xff]
        %v2260 = vld [vmem:[#allocation2 + $0x50] sm:$0xff]
        %v2261 = vld [vmem:[#allocation2 + $0x58] sm:$0xff]
        %v2262 = vld [vmem:[#allocation2 + $0x60] sm:$0xff]
        %v2263 = vld [vmem:[#allocation2 + $0x68] sm:$0xff]
        %v2264 = vld [vmem:[#allocation2 + $0x70] sm:$0xff]
        %v2265 = vld [vmem:[#allocation2 + $0x78] sm:$0xff]
        %v2266 = vld [vmem:[#allocation2 + $0x80] sm:$0xff]
        %v2267 = vld [vmem:[#allocation2 + $0x88] sm:$0xff]
        %v2268 = vld [vmem:[#allocation2 + $0x90] sm:$0xff]
        %v2269 = vld [vmem:[#allocation2 + $0x98] sm:$0xff]
        %v2270 = vld [vmem:[#allocation2 + $0xa0] sm:$0xff]
        %v2271 = vld [vmem:[#allocation2 + $0xa8] sm:$0xff]
        %v2272 = vld [vmem:[#allocation2 + $0xb0] sm:$0xff]
        %v2273 = vld [vmem:[#allocation2 + $0xb8] sm:$0xff]
        %v2274 = vld [vmem:[#allocation2 + $0xc0] sm:$0xff]
        %v2275 = vld [vmem:[#allocation2 + $0xc8] sm:$0xff]
        %v2276 = vld [vmem:[#allocation2 + $0xd0] sm:$0xff]
        %v2277 = vld [vmem:[#allocation2 + $0xd8] sm:$0xff]
        %v2278 = vld [vmem:[#allocation2 + $0xe0] sm:$0xff]
        %v2279 = vld [vmem:[#allocation2 + $0xe8] sm:$0xff]
        %s2280 = scalar_lea.vmem [#allocation11], 384
        %v2281 = vld [vmem:[%s2280] sm:$0xf]
        %v2282 = vld [vmem:[%s2280 + $0x4] sm:$0xf]
        %v2283 = vld [vmem:[%s2280 + $0x8] sm:$0xf]
        %v2284 = vld [vmem:[%s2280 + $0xc] sm:$0xf]
        %v2285 = vld [vmem:[%s2280 + $0x10] sm:$0xf]
        %v2286 = vld [vmem:[%s2280 + $0x14] sm:$0xf]
        %v2287 = vld [vmem:[%s2280 + $0x18] sm:$0xf]
        %v2288 = vld [vmem:[%s2280 + $0x1c] sm:$0xf]
        %v2289 = vld [vmem:[%s2280 + $0x20] sm:$0xf]
        %v2290 = vld [vmem:[%s2280 + $0x24] sm:$0xf]
        %v2291 = vld [vmem:[%s2280 + $0x28] sm:$0xf]
        %v2292 = vld [vmem:[%s2280 + $0x2c] sm:$0xf]
        %v2293 = vld [vmem:[%s2280 + $0x30] sm:$0xf]
        %v2294 = vld [vmem:[%s2280 + $0x34] sm:$0xf]
        %v2295 = vld [vmem:[%s2280 + $0x38] sm:$0xf]
        %v2296 = vld [vmem:[%s2280 + $0x3c] sm:$0xf]
        %v2297 = vld [vmem:[%s2280 + $0x40] sm:$0xf]
        %v2298 = vld [vmem:[%s2280 + $0x44] sm:$0xf]
        %v2299 = vld [vmem:[%s2280 + $0x48] sm:$0xf]
        %v2300 = vld [vmem:[%s2280 + $0x4c] sm:$0xf]
        %v2301 = vld [vmem:[%s2280 + $0x50] sm:$0xf]
        %v2302 = vld [vmem:[%s2280 + $0x54] sm:$0xf]
        %v2303 = vld [vmem:[%s2280 + $0x58] sm:$0xf]
        %v2304 = vld [vmem:[%s2280 + $0x5c] sm:$0xf]
        %v2305 = vld [vmem:[%s2280 + $0x60] sm:$0xf]
        %v2306 = vld [vmem:[%s2280 + $0x64] sm:$0xf]
        %v2307 = vld [vmem:[%s2280 + $0x68] sm:$0xf]
        %v2308 = vld [vmem:[%s2280 + $0x6c] sm:$0xf]
        %v2309 = vld [vmem:[%s2280 + $0x70] sm:$0xf]
        %v2310 = vld [vmem:[%s2280 + $0x74] sm:$0xf]
        %v2311 = vld [vmem:[%s2280 + $0x78] sm:$0xf]
        %v2312 = vld [vmem:[%s2280 + $0x7c] sm:$0xf]
        %v2313 = vld [vmem:[%s2280 + $0x80] sm:$0xf]
        %v2314 = vld [vmem:[%s2280 + $0x84] sm:$0xf]
        %v2315 = vld [vmem:[%s2280 + $0x88] sm:$0xf]
        %v2316 = vld [vmem:[%s2280 + $0x8c] sm:$0xf]
        %v2317 = vld [vmem:[%s2280 + $0x90] sm:$0xf]
        %v2318 = vld [vmem:[%s2280 + $0x94] sm:$0xf]
        %v2319 = vld [vmem:[%s2280 + $0x98] sm:$0xf]
        %v2320 = vld [vmem:[%s2280 + $0x9c] sm:$0xf]
        %v2321 = vld [vmem:[%s2280 + $0xa0] sm:$0xf]
        %v2322 = vld [vmem:[%s2280 + $0xa4] sm:$0xf]
        %v2323 = vld [vmem:[%s2280 + $0xa8] sm:$0xf]
        %v2324 = vld [vmem:[%s2280 + $0xac] sm:$0xf]
        %v2325 = vld [vmem:[%s2280 + $0xb0] sm:$0xf]
        %v2326 = vld [vmem:[%s2280 + $0xb4] sm:$0xf]
        %v2327 = vld [vmem:[%s2280 + $0xb8] sm:$0xf]
        %v2328 = vld [vmem:[%s2280 + $0xbc] sm:$0xf]
        %v2377 = vunpack.c.l.b16 %v2281
        %v2378 = vunpack.c.l.b16 %v2282
        %v2379 = vunpack.c.l.b16 %v2283
        %v2380 = vunpack.c.l.b16 %v2284
        %v2381 = vunpack.c.l.b16 %v2285
        %v2382 = vunpack.c.l.b16 %v2286
        %v2383 = vunpack.c.l.b16 %v2287
        %v2384 = vunpack.c.l.b16 %v2288
        %v2385 = vunpack.c.l.b16 %v2289
        %v2386 = vunpack.c.l.b16 %v2290
        %v2387 = vunpack.c.l.b16 %v2291
        %v2388 = vunpack.c.l.b16 %v2292
        %v2389 = vunpack.c.l.b16 %v2293
        %v2390 = vunpack.c.l.b16 %v2294
        %v2391 = vunpack.c.l.b16 %v2295
        %v2392 = vunpack.c.l.b16 %v2296
        %v2393 = vunpack.c.l.b16 %v2297
        %v2394 = vunpack.c.l.b16 %v2298
        %v2395 = vunpack.c.l.b16 %v2299
        %v2396 = vunpack.c.l.b16 %v2300
        %v2397 = vunpack.c.l.b16 %v2301
        %v2398 = vunpack.c.l.b16 %v2302
        %v2399 = vunpack.c.l.b16 %v2303
        %v2400 = vunpack.c.l.b16 %v2304
        %v2401 = vunpack.c.l.b16 %v2305
        %v2402 = vunpack.c.l.b16 %v2306
        %v2403 = vunpack.c.l.b16 %v2307
        %v2404 = vunpack.c.l.b16 %v2308
        %v2405 = vunpack.c.l.b16 %v2309
        %v2406 = vunpack.c.l.b16 %v2310
        %v2407 = vunpack.c.l.b16 %v2311
        %v2408 = vunpack.c.l.b16 %v2312
        %v2409 = vunpack.c.l.b16 %v2313
        %v2410 = vunpack.c.l.b16 %v2314
        %v2411 = vunpack.c.l.b16 %v2315
        %v2412 = vunpack.c.l.b16 %v2316
        %v2413 = vunpack.c.l.b16 %v2317
        %v2414 = vunpack.c.l.b16 %v2318
        %v2415 = vunpack.c.l.b16 %v2319
        %v2416 = vunpack.c.l.b16 %v2320
        %v2417 = vunpack.c.l.b16 %v2321
        %v2418 = vunpack.c.l.b16 %v2322
        %v2419 = vunpack.c.l.b16 %v2323
        %v2420 = vunpack.c.l.b16 %v2324
        %v2421 = vunpack.c.l.b16 %v2325
        %v2422 = vunpack.c.l.b16 %v2326
        %v2423 = vunpack.c.l.b16 %v2327
        %v2424 = vunpack.c.l.b16 %v2328
        %v2425 = vpack.c.b16 %v2378, %v2377
        %v2426 = vpack.c.b16 %v2380, %v2379
        %v2427 = vpack.c.b16 %v2382, %v2381
        %v2428 = vpack.c.b16 %v2384, %v2383
        %v2429 = vpack.c.b16 %v2386, %v2385
        %v2430 = vpack.c.b16 %v2388, %v2387
        %v2431 = vpack.c.b16 %v2390, %v2389
        %v2432 = vpack.c.b16 %v2392, %v2391
        %v2433 = vpack.c.b16 %v2394, %v2393
        %v2434 = vpack.c.b16 %v2396, %v2395
        %v2435 = vpack.c.b16 %v2398, %v2397
        %v2436 = vpack.c.b16 %v2400, %v2399
        %v2437 = vpack.c.b16 %v2402, %v2401
        %v2438 = vpack.c.b16 %v2404, %v2403
        %v2439 = vpack.c.b16 %v2406, %v2405
        %v2440 = vpack.c.b16 %v2408, %v2407
        %v2441 = vpack.c.b16 %v2410, %v2409
        %v2442 = vpack.c.b16 %v2412, %v2411
        %v2443 = vpack.c.b16 %v2414, %v2413
        %v2444 = vpack.c.b16 %v2416, %v2415
        %v2445 = vpack.c.b16 %v2418, %v2417
        %v2446 = vpack.c.b16 %v2420, %v2419
        %v2447 = vpack.c.b16 %v2422, %v2421
        %v2448 = vpack.c.b16 %v2424, %v2423
        %2473 = vmatprep.subr.bf16.mxu0 0
        %2474 = vmatpush1.bf16.msra.mxu0 %v2425
        %2475 = vmatprep.subr.bf16.mxu0 0
        %2476 = vmatpush1.bf16.msra.mxu0 %v2426
        %2477 = vmatprep.subr.bf16.mxu0 0
        %2478 = vmatpush1.bf16.msra.mxu0 %v2427
        %2479 = vmatprep.subr.bf16.mxu0 0
        %2480 = vmatpush1.bf16.msra.mxu0 %v2428
        %2481 = vmatprep.subr.bf16.mxu0 0
        %2482 = vmatpush1.bf16.msra.mxu0 %v2429
        %2483 = vmatprep.subr.bf16.mxu0 0
        %2484 = vmatpush1.bf16.msra.mxu0 %v2430
        %2485 = vmatprep.subr.bf16.mxu0 0
        %2486 = vmatpush1.bf16.msra.mxu0 %v2431
        %2487 = vmatprep.subr.bf16.mxu0 0
        %2488 = vmatpush1.bf16.msra.mxu0 %v2432
        %2489 = vmatprep.subr.bf16.mxu0 0
        %2490 = vmatpush1.bf16.msra.mxu0 %v2433
        %2491 = vmatprep.subr.bf16.mxu0 0
        %2492 = vmatpush1.bf16.msra.mxu0 %v2434
        %2493 = vmatprep.subr.bf16.mxu0 0
        %2494 = vmatpush1.bf16.msra.mxu0 %v2435
        %2495 = vmatprep.subr.bf16.mxu0 0
        %2496 = vmatpush1.bf16.msra.mxu0 %v2436
        %2497 = vmatprep.subr.bf16.mxu0 0
        %2498 = vmatpush1.bf16.msra.mxu0 %v2437
        %2499 = vmatprep.subr.bf16.mxu0 0
        %2500 = vmatpush1.bf16.msra.mxu0 %v2438
        %2501 = vmatprep.subr.bf16.mxu0 0
        %2502 = vmatpush1.bf16.msra.mxu0 %v2439
        %2503 = vmatprep.subr.bf16.mxu0 0
        %2504 = vmatpush1.bf16.msra.mxu0 %v2440
        %2505 = vmatprep.mubr.bf16.mxu0 %v2257
        %2506 = vmatmul.mubr.bf16.gmra.mrb[0].mxu0 %v2256
        %v2507 = vpop.f32.mrb[0].mxu0
        %v2508 = vadd.f32 0.0, %v2507
        %v2509 = vpop.f32.mrb[0].mxu0
        %v2510 = vpop.f32.mrb[0].mxu0
        %v2511 = vadd.f32 0.0, %v2510
        %v2512 = vpop.f32.mrb[0].mxu0
        %2513 = vmatprep.mubr.bf16.mxu0 %v2260
        %2514 = vmatmul.mubr.bf16.gmra.mrb[0].mxu0 %v2259
        %v2515 = vpop.f32.mrb[0].mxu0
        %v2516 = vadd.f32 0.0, %v2515
        %v2517 = vpop.f32.mrb[0].mxu0
        %v2518 = vpop.f32.mrb[0].mxu0
        %v2519 = vadd.f32 0.0, %v2518
        %v2520 = vpop.f32.mrb[0].mxu0
        %2521 = vmatprep.mubr.bf16.mxu0 %v2263
        %2522 = vmatmul.mubr.bf16.gmra.mrb[0].mxu0 %v2262
        %v2523 = vpop.f32.mrb[0].mxu0
        %v2524 = vadd.f32 0.0, %v2523
        %v2525 = vpop.f32.mrb[0].mxu0
        %v2526 = vpop.f32.mrb[0].mxu0
        %v2527 = vadd.f32 0.0, %v2526
        %v2528 = vpop.f32.mrb[0].mxu0
        %2529 = vmatprep.mubr.bf16.mxu0 %v2266
        %2530 = vmatmul.mubr.bf16.gmra.mrb[0].mxu0 %v2265
        %v2531 = vpop.f32.mrb[0].mxu0
        %v2532 = vadd.f32 0.0, %v2531
        %v2533 = vpop.f32.mrb[0].mxu0
        %v2534 = vpop.f32.mrb[0].mxu0
        %v2535 = vadd.f32 0.0, %v2534
        %v2536 = vpop.f32.mrb[0].mxu0
        %2537 = vmatprep.mubr.bf16.mxu0 %v2269
        %2538 = vmatmul.mubr.bf16.gmra.mrb[0].mxu0 %v2268
        %v2539 = vpop.f32.mrb[0].mxu0
        %v2540 = vadd.f32 0.0, %v2539
        %v2541 = vpop.f32.mrb[0].mxu0
        %v2542 = vpop.f32.mrb[0].mxu0
        %v2543 = vadd.f32 0.0, %v2542
        %v2544 = vpop.f32.mrb[0].mxu0
        %2545 = vmatprep.mubr.bf16.mxu0 %v2272
        %2546 = vmatmul.mubr.bf16.gmra.mrb[0].mxu0 %v2271
        %v2547 = vpop.f32.mrb[0].mxu0
        %v2548 = vadd.f32 0.0, %v2547
        %v2549 = vpop.f32.mrb[0].mxu0
        %v2550 = vpop.f32.mrb[0].mxu0
        %v2551 = vadd.f32 0.0, %v2550
        %v2552 = vpop.f32.mrb[0].mxu0
        %2553 = vmatprep.mubr.bf16.mxu0 %v2275
        %2554 = vmatmul.mubr.bf16.gmra.mrb[0].mxu0 %v2274
        %v2555 = vpop.f32.mrb[0].mxu0
        %v2556 = vadd.f32 0.0, %v2555
        %v2557 = vpop.f32.mrb[0].mxu0
        %v2558 = vpop.f32.mrb[0].mxu0
        %v2559 = vadd.f32 0.0, %v2558
        %v2560 = vpop.f32.mrb[0].mxu0
        %2561 = vmatprep.mubr.bf16.mxu0 %v2278
        %2562 = vmatmul.mubr.bf16.gmra.mrb[0].mxu0 %v2277
        %v2563 = vpop.f32.mrb[0].mxu0
        %v2564 = vadd.f32 0.0, %v2563
        %v2565 = vpop.f32.mrb[0].mxu0
        %v2566 = vpop.f32.mrb[0].mxu0
        %v2567 = vadd.f32 0.0, %v2566
        %v2568 = vpop.f32.mrb[0].mxu0
        %2569 = vdwg.mxu0
        %2570 = vmatprep.subr.bf16.mxu0 0
        %2571 = vmatpush1.bf16.msra.mxu0 %v2441
        %2572 = vmatprep.subr.bf16.mxu0 0
        %2573 = vmatpush1.bf16.msra.mxu0 %v2442
        %2574 = vmatprep.subr.bf16.mxu0 0
        %2575 = vmatpush1.bf16.msra.mxu0 %v2443
        %2576 = vmatprep.subr.bf16.mxu0 0
        %2577 = vmatpush1.bf16.msra.mxu0 %v2444
        %2578 = vmatprep.subr.bf16.mxu0 0
        %2579 = vmatpush1.bf16.msra.mxu0 %v2445
        %2580 = vmatprep.subr.bf16.mxu0 0
        %2581 = vmatpush1.bf16.msra.mxu0 %v2446
        %2582 = vmatprep.subr.bf16.mxu0 0
        %2583 = vmatpush1.bf16.msra.mxu0 %v2447
        %2584 = vmatprep.subr.bf16.mxu0 0
        %2585 = vmatpush1.bf16.msra.mxu0 %v2448
        %2586 = vmatprep.subr.bf16.mxu0 0
        %2587 = vmatpush1.bf16.msra.mxu0 0
        %2588 = vmatprep.subr.bf16.mxu0 0
        %2589 = vmatpush1.bf16.msra.mxu0 0
        %2590 = vmatprep.subr.bf16.mxu0 0
        %2591 = vmatpush1.bf16.msra.mxu0 0
        %2592 = vmatprep.subr.bf16.mxu0 0
        %2593 = vmatpush1.bf16.msra.mxu0 0
        %2594 = vmatprep.subr.bf16.mxu0 0
        %2595 = vmatpush1.bf16.msra.mxu0 0
        %2596 = vmatprep.subr.bf16.mxu0 0
        %2597 = vmatpush1.bf16.msra.mxu0 0
        %2598 = vmatprep.subr.bf16.mxu0 0
        %2599 = vmatpush1.bf16.msra.mxu0 0
        %2600 = vmatprep.subr.bf16.mxu0 0
        %2601 = vmatpush1.bf16.msra.mxu0 0
        %2602 = vmatprep.mubr.bf16.mxu0 0
        %2603 = vmatmul.mubr.bf16.gmra.mrb[0].mxu0 %v2258
        %v2604 = vpop.f32.mrb[0].mxu0
        %v2605 = vadd.f32 %v2508, %v2604
        %v2606 = vpop.f32.mrb[0].mxu0
        %v2607 = vpop.f32.mrb[0].mxu0
        %v2608 = vadd.f32 %v2511, %v2607
        %v2609 = vpop.f32.mrb[0].mxu0
        %2610 = vmatprep.mubr.bf16.mxu0 0
        %2611 = vmatmul.mubr.bf16.gmra.mrb[0].mxu0 %v2261
        %v2612 = vpop.f32.mrb[0].mxu0
        %v2613 = vadd.f32 %v2516, %v2612
        %v2614 = vpop.f32.mrb[0].mxu0
        %v2615 = vpop.f32.mrb[0].mxu0
        %v2616 = vadd.f32 %v2519, %v2615
        %v2617 = vpop.f32.mrb[0].mxu0
        %2618 = vmatprep.mubr.bf16.mxu0 0
        %2619 = vmatmul.mubr.bf16.gmra.mrb[0].mxu0 %v2264
        %v2620 = vpop.f32.mrb[0].mxu0
        %v2621 = vadd.f32 %v2524, %v2620
        %v2622 = vpop.f32.mrb[0].mxu0
        %v2623 = vpop.f32.mrb[0].mxu0
        %v2624 = vadd.f32 %v2527, %v2623
        %v2625 = vpop.f32.mrb[0].mxu0
        %2626 = vmatprep.mubr.bf16.mxu0 0
        %2627 = vmatmul.mubr.bf16.gmra.mrb[0].mxu0 %v2267
        %v2628 = vpop.f32.mrb[0].mxu0
        %v2629 = vadd.f32 %v2532, %v2628
        %v2630 = vpop.f32.mrb[0].mxu0
        %v2631 = vpop.f32.mrb[0].mxu0
        %v2632 = vadd.f32 %v2535, %v2631
        %v2633 = vpop.f32.mrb[0].mxu0
        %2634 = vmatprep.mubr.bf16.mxu0 0
        %2635 = vmatmul.mubr.bf16.gmra.mrb[0].mxu0 %v2270
        %v2636 = vpop.f32.mrb[0].mxu0
        %v2637 = vadd.f32 %v2540, %v2636
        %v2638 = vpop.f32.mrb[0].mxu0
        %v2639 = vpop.f32.mrb[0].mxu0
        %v2640 = vadd.f32 %v2543, %v2639
        %v2641 = vpop.f32.mrb[0].mxu0
        %2642 = vmatprep.mubr.bf16.mxu0 0
        %2643 = vmatmul.mubr.bf16.gmra.mrb[0].mxu0 %v2273
        %v2644 = vpop.f32.mrb[0].mxu0
        %v2645 = vadd.f32 %v2548, %v2644
        %v2646 = vpop.f32.mrb[0].mxu0
        %v2647 = vpop.f32.mrb[0].mxu0
        %v2648 = vadd.f32 %v2551, %v2647
        %v2649 = vpop.f32.mrb[0].mxu0
        %2650 = vmatprep.mubr.bf16.mxu0 0
        %2651 = vmatmul.mubr.bf16.gmra.mrb[0].mxu0 %v2276
        %v2652 = vpop.f32.mrb[0].mxu0
        %v2653 = vadd.f32 %v2556, %v2652
        %v2654 = vpop.f32.mrb[0].mxu0
        %v2655 = vpop.f32.mrb[0].mxu0
        %v2656 = vadd.f32 %v2559, %v2655
        %v2657 = vpop.f32.mrb[0].mxu0
        %2658 = vmatprep.mubr.bf16.mxu0 0
        %2659 = vmatmul.mubr.bf16.gmra.mrb[0].mxu0 %v2279
        %v2660 = vpop.f32.mrb[0].mxu0
        %v2661 = vadd.f32 %v2564, %v2660
        %v2662 = vpop.f32.mrb[0].mxu0
        %v2663 = vpop.f32.mrb[0].mxu0
        %v2664 = vadd.f32 %v2567, %v2663
        %v2665 = vpop.f32.mrb[0].mxu0
        %2666 = vdwg.mxu0
        %v2667 = vadd.f32 %v2194, %v2605
        %v2668 = vadd.f32 %v2197, %v2608
        %v2669 = vadd.f32 %v2202, %v2613
        %v2670 = vadd.f32 %v2205, %v2616
        %v2671 = vadd.f32 %v2210, %v2621
        %v2672 = vadd.f32 %v2213, %v2624
        %v2673 = vadd.f32 %v2218, %v2629
        %v2674 = vadd.f32 %v2221, %v2632
        %v2675 = vadd.f32 %v2226, %v2637
        %v2676 = vadd.f32 %v2229, %v2640
        %v2677 = vadd.f32 %v2234, %v2645
        %v2678 = vadd.f32 %v2237, %v2648
        %v2679 = vadd.f32 %v2242, %v2653
        %v2680 = vadd.f32 %v2245, %v2656
        %v2681 = vadd.f32 %v2250, %v2661
        %v2682 = vadd.f32 %v2253, %v2664
        %v2683 = vld [vmem:[%s6] sm:$0x1]
        %v2685 = vlaneseq
        %v2686 = vshrl.u32 %v2685, 7
        %v2687 = vsub.s32 0, %v2686
        %v2688 = vrot.slane %v2683, %v2687
        %v2690 = vadd.f32 %v2667, %v2688
        %v2691 = vadd.f32 %v2668, %v2688
        %v2692 = vadd.f32 %v2669, %v2688
        %v2693 = vadd.f32 %v2670, %v2688
        %v2694 = vadd.f32 %v2671, %v2688
        %v2695 = vadd.f32 %v2672, %v2688
        %v2696 = vadd.f32 %v2673, %v2688
        %v2697 = vadd.f32 %v2674, %v2688
        %v2698 = vadd.f32 %v2675, %v2688
        %v2699 = vadd.f32 %v2676, %v2688
        %v2700 = vadd.f32 %v2677, %v2688
        %v2701 = vadd.f32 %v2678, %v2688
        %v2702 = vadd.f32 %v2679, %v2688
        %v2703 = vadd.f32 %v2680, %v2688
        %v2704 = vadd.f32 %v2681, %v2688
        %v2705 = vadd.f32 %v2682, %v2688
        %v2706 = vmax.f32 %v2690, 0.0
        %v2707 = vmax.f32 %v2691, 0.0
        %v2708 = vmax.f32 %v2692, 0.0
        %v2709 = vmax.f32 %v2693, 0.0
        %v2710 = vmax.f32 %v2694, 0.0
        %v2711 = vmax.f32 %v2695, 0.0
        %v2712 = vmax.f32 %v2696, 0.0
        %v2713 = vmax.f32 %v2697, 0.0
        %v2714 = vmax.f32 %v2698, 0.0
        %v2715 = vmax.f32 %v2699, 0.0
        %v2716 = vmax.f32 %v2700, 0.0
        %v2717 = vmax.f32 %v2701, 0.0
        %v2718 = vmax.f32 %v2702, 0.0
        %v2719 = vmax.f32 %v2703, 0.0
        %v2720 = vmax.f32 %v2704, 0.0
        %v2721 = vmax.f32 %v2705, 0.0
        %v2722 = vpack.c.bf16 %v2707, %v2706
        %v2723 = vpack.c.bf16 %v2709, %v2708
        %v2724 = vpack.c.bf16 %v2711, %v2710
        %v2725 = vpack.c.bf16 %v2713, %v2712
        %v2726 = vpack.c.bf16 %v2715, %v2714
        %v2727 = vpack.c.bf16 %v2717, %v2716
        %v2728 = vpack.c.bf16 %v2719, %v2718
        %v2729 = vpack.c.bf16 %v2721, %v2720
        %v2730 = vld [vmem:[#allocation12] sm:$0xf]
        %v2731 = vld [vmem:[#allocation12 + $0x4] sm:$0xf]
        %v2732 = vld [vmem:[#allocation12 + $0x8] sm:$0xf]
        %v2733 = vld [vmem:[#allocation12 + $0xc] sm:$0xf]
        %v2734 = vld [vmem:[#allocation12 + $0x10] sm:$0xf]
        %v2735 = vld [vmem:[#allocation12 + $0x14] sm:$0xf]
        %v2736 = vld [vmem:[#allocation12 + $0x18] sm:$0xf]
        %v2737 = vld [vmem:[#allocation12 + $0x1c] sm:$0xf]
        %v2738 = vld [vmem:[#allocation12 + $0x20] sm:$0xf]
        %v2739 = vld [vmem:[#allocation12 + $0x24] sm:$0xf]
        %v2740 = vld [vmem:[#allocation12 + $0x28] sm:$0xf]
        %v2741 = vld [vmem:[#allocation12 + $0x2c] sm:$0xf]
        %v2742 = vld [vmem:[#allocation12 + $0x30] sm:$0xf]
        %v2743 = vld [vmem:[#allocation12 + $0x34] sm:$0xf]
        %v2744 = vld [vmem:[#allocation12 + $0x38] sm:$0xf]
        %v2745 = vld [vmem:[#allocation12 + $0x3c] sm:$0xf]
        %v2746 = vld [vmem:[%s8] sm:$0x1]
        %v2748 = vlaneseq
        %v2749 = vshrl.u32 %v2748, 7
        %v2750 = vsub.s32 0, %v2749
        %v2751 = vrot.slane %v2746, %v2750
        %v2769 = vunpack.c.l.b16 %v2730
        %v2770 = vunpack.c.l.b16 %v2731
        %v2771 = vunpack.c.l.b16 %v2732
        %v2772 = vunpack.c.l.b16 %v2733
        %v2773 = vunpack.c.l.b16 %v2734
        %v2774 = vunpack.c.l.b16 %v2735
        %v2775 = vunpack.c.l.b16 %v2736
        %v2776 = vunpack.c.l.b16 %v2737
        %v2777 = vunpack.c.l.b16 %v2738
        %v2778 = vunpack.c.l.b16 %v2739
        %v2779 = vunpack.c.l.b16 %v2740
        %v2780 = vunpack.c.l.b16 %v2741
        %v2781 = vunpack.c.l.b16 %v2742
        %v2782 = vunpack.c.l.b16 %v2743
        %v2783 = vunpack.c.l.b16 %v2744
        %v2784 = vunpack.c.l.b16 %v2745
        %v2785 = vpack.c.b16 %v2770, %v2769
        %v2786 = vpack.c.b16 %v2772, %v2771
        %v2787 = vpack.c.b16 %v2774, %v2773
        %v2788 = vpack.c.b16 %v2776, %v2775
        %v2789 = vpack.c.b16 %v2778, %v2777
        %v2790 = vpack.c.b16 %v2780, %v2779
        %v2791 = vpack.c.b16 %v2782, %v2781
        %v2792 = vpack.c.b16 %v2784, %v2783
        %2801 = vmatprep.subr.bf16.mxu0 0
        %2802 = vmatpush1.bf16.msra.mxu0 %v2785
        %2803 = vmatprep.subr.bf16.mxu0 0
        %2804 = vmatpush1.bf16.msra.mxu0 %v2786
        %2805 = vmatprep.subr.bf16.mxu0 0
        %2806 = vmatpush1.bf16.msra.mxu0 %v2787
        %2807 = vmatprep.subr.bf16.mxu0 0
        %2808 = vmatpush1.bf16.msra.mxu0 %v2788
        %2809 = vmatprep.subr.bf16.mxu0 0
        %2810 = vmatpush1.bf16.msra.mxu0 %v2789
        %2811 = vmatprep.subr.bf16.mxu0 0
        %2812 = vmatpush1.bf16.msra.mxu0 %v2790
        %2813 = vmatprep.subr.bf16.mxu0 0
        %2814 = vmatpush1.bf16.msra.mxu0 %v2791
        %2815 = vmatprep.subr.bf16.mxu0 0
        %2816 = vmatpush1.bf16.msra.mxu0 %v2792
        %2817 = vmatprep.subr.bf16.mxu0 0
        %2818 = vmatpush1.bf16.msra.mxu0 0
        %2819 = vmatprep.subr.bf16.mxu0 0
        %2820 = vmatpush1.bf16.msra.mxu0 0
        %2821 = vmatprep.subr.bf16.mxu0 0
        %2822 = vmatpush1.bf16.msra.mxu0 0
        %2823 = vmatprep.subr.bf16.mxu0 0
        %2824 = vmatpush1.bf16.msra.mxu0 0
        %2825 = vmatprep.subr.bf16.mxu0 0
        %2826 = vmatpush1.bf16.msra.mxu0 0
        %2827 = vmatprep.subr.bf16.mxu0 0
        %2828 = vmatpush1.bf16.msra.mxu0 0
        %2829 = vmatprep.subr.bf16.mxu0 0
        %2830 = vmatpush1.bf16.msra.mxu0 0
        %2831 = vmatprep.subr.bf16.mxu0 0
        %2832 = vmatpush1.bf16.msra.mxu0 0
        %2833 = vmatprep.mubr.bf16.mxu0 0
        %2834 = vmatmul.mubr.bf16.gmra.mrb[0].mxu0 %v2722
        %v2835 = vpop.f32.mrb[0].mxu0
        %v2836 = vadd.f32 %v2751, %v2835
        %v2837 = vpop.f32.mrb[0].mxu0
        %v2838 = vpop.f32.mrb[0].mxu0
        %v2839 = vadd.f32 %v2751, %v2838
        %v2840 = vpop.f32.mrb[0].mxu0
        %2841 = vmatprep.mubr.bf16.mxu0 0
        %2842 = vmatmul.mubr.bf16.gmra.mrb[0].mxu0 %v2723
        %v2843 = vpop.f32.mrb[0].mxu0
        %v2844 = vadd.f32 %v2751, %v2843
        %v2845 = vpop.f32.mrb[0].mxu0
        %v2846 = vpop.f32.mrb[0].mxu0
        %v2847 = vadd.f32 %v2751, %v2846
        %v2848 = vpop.f32.mrb[0].mxu0
        %2849 = vmatprep.mubr.bf16.mxu0 0
        %2850 = vmatmul.mubr.bf16.gmra.mrb[0].mxu0 %v2724
        %v2851 = vpop.f32.mrb[0].mxu0
        %v2852 = vadd.f32 %v2751, %v2851
        %v2853 = vpop.f32.mrb[0].mxu0
        %v2854 = vpop.f32.mrb[0].mxu0
        %v2855 = vadd.f32 %v2751, %v2854
        %v2856 = vpop.f32.mrb[0].mxu0
        %2857 = vmatprep.mubr.bf16.mxu0 0
        %2858 = vmatmul.mubr.bf16.gmra.mrb[0].mxu0 %v2725
        %v2859 = vpop.f32.mrb[0].mxu0
        %v2860 = vadd.f32 %v2751, %v2859
        %v2861 = vpop.f32.mrb[0].mxu0
        %v2862 = vpop.f32.mrb[0].mxu0
        %v2863 = vadd.f32 %v2751, %v2862
        %v2864 = vpop.f32.mrb[0].mxu0
        %2865 = vmatprep.mubr.bf16.mxu0 0
        %2866 = vmatmul.mubr.bf16.gmra.mrb[0].mxu0 %v2726
        %v2867 = vpop.f32.mrb[0].mxu0
        %v2868 = vadd.f32 %v2751, %v2867
        %v2869 = vpop.f32.mrb[0].mxu0
        %v2870 = vpop.f32.mrb[0].mxu0
        %v2871 = vadd.f32 %v2751, %v2870
        %v2872 = vpop.f32.mrb[0].mxu0
        %2873 = vmatprep.mubr.bf16.mxu0 0
        %2874 = vmatmul.mubr.bf16.gmra.mrb[0].mxu0 %v2727
        %v2875 = vpop.f32.mrb[0].mxu0
        %v2876 = vadd.f32 %v2751, %v2875
        %v2877 = vpop.f32.mrb[0].mxu0
        %v2878 = vpop.f32.mrb[0].mxu0
        %v2879 = vadd.f32 %v2751, %v2878
        %v2880 = vpop.f32.mrb[0].mxu0
        %2881 = vmatprep.mubr.bf16.mxu0 0
        %2882 = vmatmul.mubr.bf16.gmra.mrb[0].mxu0 %v2728
        %v2883 = vpop.f32.mrb[0].mxu0
        %v2884 = vadd.f32 %v2751, %v2883
        %v2885 = vpop.f32.mrb[0].mxu0
        %v2886 = vpop.f32.mrb[0].mxu0
        %v2887 = vadd.f32 %v2751, %v2886
        %v2888 = vpop.f32.mrb[0].mxu0
        %2889 = vmatprep.mubr.bf16.mxu0 0
        %2890 = vmatmul.mubr.bf16.gmra.mrb[0].mxu0 %v2729
        %v2891 = vpop.f32.mrb[0].mxu0
        %v2892 = vadd.f32 %v2751, %v2891
        %v2893 = vpop.f32.mrb[0].mxu0
        %v2894 = vpop.f32.mrb[0].mxu0
        %v2895 = vadd.f32 %v2751, %v2894
        %v2896 = vpop.f32.mrb[0].mxu0
        %2897 = vdwg.mxu0
        %v2898 = vld [vmem:[%s456] sm:$0xf]
        %v2899 = vld [vmem:[%s456 + $0x4] sm:$0xf]
        %v2900 = vld [vmem:[%s456 + $0x8] sm:$0xf]
        %v2901 = vld [vmem:[%s456 + $0xc] sm:$0xf]
        %v2902 = vld [vmem:[%s456 + $0x10] sm:$0xf]
        %v2903 = vld [vmem:[%s456 + $0x14] sm:$0xf]
        %v2904 = vld [vmem:[%s456 + $0x18] sm:$0xf]
        %v2905 = vld [vmem:[%s456 + $0x1c] sm:$0xf]
        %v2906 = vld [vmem:[%s456 + $0x20] sm:$0xf]
        %v2907 = vld [vmem:[%s456 + $0x24] sm:$0xf]
        %v2908 = vld [vmem:[%s456 + $0x28] sm:$0xf]
        %v2909 = vld [vmem:[%s456 + $0x2c] sm:$0xf]
        %v2910 = vld [vmem:[%s456 + $0x30] sm:$0xf]
        %v2911 = vld [vmem:[%s456 + $0x34] sm:$0xf]
        %v2912 = vld [vmem:[%s456 + $0x38] sm:$0xf]
        %v2913 = vld [vmem:[%s456 + $0x3c] sm:$0xf]
        %v2914 = vunpack.c.l.bf16 %v2898
        %v2915 = vunpack.c.l.bf16 %v2899
        %v2916 = vunpack.c.l.bf16 %v2900
        %v2917 = vunpack.c.l.bf16 %v2901
        %v2918 = vunpack.c.l.bf16 %v2902
        %v2919 = vunpack.c.l.bf16 %v2903
        %v2920 = vunpack.c.l.bf16 %v2904
        %v2921 = vunpack.c.l.bf16 %v2905
        %v2922 = vunpack.c.l.bf16 %v2906
        %v2923 = vunpack.c.l.bf16 %v2907
        %v2924 = vunpack.c.l.bf16 %v2908
        %v2925 = vunpack.c.l.bf16 %v2909
        %v2926 = vunpack.c.l.bf16 %v2910
        %v2927 = vunpack.c.l.bf16 %v2911
        %v2928 = vunpack.c.l.bf16 %v2912
        %v2929 = vunpack.c.l.bf16 %v2913
        %v2930 = vadd.f32 %v2836, %v2914
        %v2931 = vadd.f32 %v2839, %v2915
        %v2932 = vadd.f32 %v2844, %v2916
        %v2933 = vadd.f32 %v2847, %v2917
        %v2934 = vadd.f32 %v2852, %v2918
        %v2935 = vadd.f32 %v2855, %v2919
        %v2936 = vadd.f32 %v2860, %v2920
        %v2937 = vadd.f32 %v2863, %v2921
        %v2938 = vadd.f32 %v2868, %v2922
        %v2939 = vadd.f32 %v2871, %v2923
        %v2940 = vadd.f32 %v2876, %v2924
        %v2941 = vadd.f32 %v2879, %v2925
        %v2942 = vadd.f32 %v2884, %v2926
        %v2943 = vadd.f32 %v2887, %v2927
        %v2944 = vadd.f32 %v2892, %v2928
        %v2945 = vadd.f32 %v2895, %v2929
        %v2946 = vmax.f32 %v2930, 0.0
        %v2947 = vmax.f32 %v2931, 0.0
        %v2948 = vmax.f32 %v2932, 0.0
        %v2949 = vmax.f32 %v2933, 0.0
        %v2950 = vmax.f32 %v2934, 0.0
        %v2951 = vmax.f32 %v2935, 0.0
        %v2952 = vmax.f32 %v2936, 0.0
        %v2953 = vmax.f32 %v2937, 0.0
        %v2954 = vmax.f32 %v2938, 0.0
        %v2955 = vmax.f32 %v2939, 0.0
        %v2956 = vmax.f32 %v2940, 0.0
        %v2957 = vmax.f32 %v2941, 0.0
        %v2958 = vmax.f32 %v2942, 0.0
        %v2959 = vmax.f32 %v2943, 0.0
        %v2960 = vmax.f32 %v2944, 0.0
        %v2961 = vmax.f32 %v2945, 0.0
        %v2962 = vpack.c.bf16 %v2947, %v2946
        %v2963 = vpack.c.bf16 %v2949, %v2948
        %v2964 = vpack.c.bf16 %v2951, %v2950
        %v2965 = vpack.c.bf16 %v2953, %v2952
        %v2966 = vpack.c.bf16 %v2955, %v2954
        %v2967 = vpack.c.bf16 %v2957, %v2956
        %v2968 = vpack.c.bf16 %v2959, %v2958
        %v2969 = vpack.c.bf16 %v2961, %v2960
        %v2978 = vunpack.c.l.b16 %v2962
        %v2979 = vunpack.c.h.b16 %v2962
        %v2980 = vunpack.c.l.b16 %v2963
        %v2981 = vunpack.c.h.b16 %v2963
        %v2982 = vunpack.c.l.b16 %v2964
        %v2983 = vunpack.c.h.b16 %v2964
        %v2984 = vunpack.c.l.b16 %v2965
        %v2985 = vunpack.c.h.b16 %v2965
        %v2986 = vunpack.c.l.b16 %v2966
        %v2987 = vunpack.c.h.b16 %v2966
        %v2988 = vunpack.c.l.b16 %v2967
        %v2989 = vunpack.c.h.b16 %v2967
        %v2990 = vunpack.c.l.b16 %v2968
        %v2991 = vunpack.c.h.b16 %v2968
        %v2992 = vunpack.c.l.b16 %v2969
        %v2993 = vunpack.c.h.b16 %v2969
        %v2994 = vpack.c.b16 %v2978, %v2978
        %v2995 = vpack.c.b16 %v2979, %v2979
        %v2996 = vpack.c.b16 %v2980, %v2980
        %v2997 = vpack.c.b16 %v2981, %v2981
        %v2998 = vpack.c.b16 %v2982, %v2982
        %v2999 = vpack.c.b16 %v2983, %v2983
        %v3000 = vpack.c.b16 %v2984, %v2984
        %v3001 = vpack.c.b16 %v2985, %v2985
        %v3002 = vpack.c.b16 %v2986, %v2986
        %v3003 = vpack.c.b16 %v2987, %v2987
        %v3004 = vpack.c.b16 %v2988, %v2988
        %v3005 = vpack.c.b16 %v2989, %v2989
        %v3006 = vpack.c.b16 %v2990, %v2990
        %v3007 = vpack.c.b16 %v2991, %v2991
        %v3008 = vpack.c.b16 %v2992, %v2992
        %v3009 = vpack.c.b16 %v2993, %v2993
        %3026 = vst [vmem:[%s521] sm:$0xf] %v2994
        %3027 = vst [vmem:[%s521 + $0x4] sm:$0xf] %v2995
        %3028 = vst [vmem:[%s521 + $0x8] sm:$0xf] %v2996
        %3029 = vst [vmem:[%s521 + $0xc] sm:$0xf] %v2997
        %3030 = vst [vmem:[%s521 + $0x10] sm:$0xf] %v2998
        %3031 = vst [vmem:[%s521 + $0x14] sm:$0xf] %v2999
        %3032 = vst [vmem:[%s521 + $0x18] sm:$0xf] %v3000
        %3033 = vst [vmem:[%s521 + $0x1c] sm:$0xf] %v3001
        %3034 = vst [vmem:[%s521 + $0x20] sm:$0xf] %v3002
        %3035 = vst [vmem:[%s521 + $0x24] sm:$0xf] %v3003
        %3036 = vst [vmem:[%s521 + $0x28] sm:$0xf] %v3004
        %3037 = vst [vmem:[%s521 + $0x2c] sm:$0xf] %v3005
        %3038 = vst [vmem:[%s521 + $0x30] sm:$0xf] %v3006
        %3039 = vst [vmem:[%s521 + $0x34] sm:$0xf] %v3007
        %3040 = vst [vmem:[%s521 + $0x38] sm:$0xf] %v3008
        %3041 = vst [vmem:[%s521 + $0x3c] sm:$0xf] %v3009
        %s3042 = sand.u32 %s279, 1
        %s3043 = scalar_lea.sflag [#allocation5], %s3042
        %s3044 = sand.u32 %s279, 1
        %s3045 = smul.addr %s3044, 64
        %s3046 = scalar_lea.vmem [#allocation14], %s3045
        // Predicated region
        $region89: #{tpu_custom_call.1} parent=55 // pred_check
          %p3047 = pneg %p289
        $region90: #{tpu_custom_call.1} parent=55 // pred_check_branch
          %3049 = sbr.rel (%p3047) target = $region92
        $region91: #{tpu_custom_call.1} parent=55 // pred_region
          %s3050 = smul.u32 16, %s36
          %s3052 = ssub.s32 1024, 1024
          %3053 = vsyncadd %s3043, %s3052
          %s3054 = smul.addr %s35, 32
          %s3055 = sadd.s32 %s3050, %s3054
          %s3056 = smul.addr %s3055, 64
          %s3057 = scalar_lea.hbm %s9, %s3056
          %s3058 = sshll.u32 %s3046, 4
          %s3059 = int_to_ptr.vmem [resolvable:$true] %s3058
          %3064 = dma.vmem_to_hbm [thread:$0]  %s3059, 1024, %s3057, %s3043, 64, 64, 4
        $region92: #{tpu_custom_call.1} parent=55 // pred_fallthru
          _
      $region56: #{tpu_custom_call.1} parent=5 // pred_fallthru
        _
      %p3065 = scmp.le.s32.totalorder 2, %s26
      // Predicated region
      $region93: #{tpu_custom_call.1} parent=5 // pred_check
        %p3066 = pneg %p3065
      $region94: #{tpu_custom_call.1} parent=5 // pred_check_branch
        %3068 = sbr.rel (%p3066) target = $region96
      $region95: #{tpu_custom_call.1} parent=5 // pred_region
        %s3069 = ssub.s32 %s26, 2
        // Predicated region
        $region97: #{tpu_custom_call.1} parent=95 // pred_check
          %p3070 = pneg %p295
        $region98: #{tpu_custom_call.1} parent=95 // pred_check_branch
          %3072 = sbr.rel (%p3070) target = $region100
        $region99: #{tpu_custom_call.1} parent=95 // pred_region
          %s3073 = sand.u32 %s280, 1
          %s3074 = scalar_lea.sflag [#allocation5], %s3073
          %s3075 = sand.u32 %s280, 1
          %s3076 = smul.addr %s3075, 64
          %s3077 = scalar_lea.vmem [#allocation14], %s3076
          %3078 = dma.done %s3074, 1024
        $region100: #{tpu_custom_call.1} parent=95 // pred_fallthru
          _
      $region96: #{tpu_custom_call.1} parent=5 // pred_fallthru
        _
    $region6: #{tpu_custom_call.1} parent=1 // loop_footer
      %s30 = sadd.s32 1, %s26
    $region7: #{tpu_custom_call.1} parent=1 // loop_footer_branch
      %25 = sbr.rel target = $region3
    $region8: #{tpu_custom_call.1} parent=1 // loop_exit
      _
    %3079 = vsyncpa [#allocation4], 1
    %s3080 = scalar_lea.sflag [#allocation4], 1
    %3081 = vsyncpa %s3080, 1
    %3082 = vsyncpa [#allocation7], 1
    %s3083 = scalar_lea.sflag [#allocation7], 1
    %3084 = vsyncpa %s3083, 1
    %3085 = vsyncpa [#allocation10], 1
    %3086 = vsyncpa [#allocation13], 1
    %3087 = vsyncpa [#allocation5], 1
    %s3088 = scalar_lea.sflag [#allocation5], 1
    %3089 = vsyncpa %s3088, 1

</llo_original>
